<compile_context>
chip_gen: v5e
topology: v5e:2x2
jax: 0.10.0
libtpu: 0.0.40
codegen_flags: <defaults>
</compile_context>

<pallas_src>
import functools
import jax
import jax.numpy as jnp
from jax import lax
from jax.experimental import pallas as pl
from jax.experimental.pallas import tpu as pltpu


# ----------------------------- fused Pallas kernel -----------------------------

def _bert_crf_seq_kernel(
    emb_ref, bias_ref, oh_ref, mask_ref,             # per-sequence (blocked over the grid)
    eg_ref, eb_ref,                                   # embedding LayerNorm
    wqkv_ref, bqkv_ref, woh_ref, bo_ref,              # attention (per-head weights)
    ln1g_ref, ln1b_ref,
    w1_ref, b1_ref, w2_ref, b2_ref,                   # FFN
    ln2g_ref, ln2b_ref,
    wc_ref, bc_ref,                                   # token classifier
    trans_ref, start_ref, end_ref,                    # CRF
    nll_ref,                                          # output: per-sequence NLL, block (1,1,1)
    *, L, NH, Dh, S, eps):
    scale = 1.0 / (Dh ** 0.5)

    def layernorm(v, g, b):
        mu = jnp.mean(v, axis=-1, keepdims=True)
        var = jnp.mean((v - mu) * (v - mu), axis=-1, keepdims=True)
        return (v - mu) * lax.rsqrt(var + eps) * g + b

    # ---- embeddings LayerNorm (no residual, no zero-array input) ----
    x = layernorm(emb_ref[0], eg_ref[...], eb_ref[...])            # [S, H]
    bias = bias_ref[0]                                             # [1, S] additive key mask

    # ---- transformer encoder layers (fully fused, VMEM-resident) ----
    for l in range(L):
        attn = bo_ref[l]                                           # [1, H], broadcasts
        for h in range(NH):
            i3 = (l * NH + h) * 3
            q = jnp.dot(x, wqkv_ref[i3 + 0], preferred_element_type=jnp.float32) + bqkv_ref[i3 + 0]
            k = jnp.dot(x, wqkv_ref[i3 + 1], preferred_element_type=jnp.float32) + bqkv_ref[i3 + 1]
            v = jnp.dot(x, wqkv_ref[i3 + 2], preferred_element_type=jnp.float32) + bqkv_ref[i3 + 2]
            # q @ k^T via an NT dot_general (no explicit transpose materialized)
            s = lax.dot_general(q, k, (((1,), (1,)), ((), ())),
                                preferred_element_type=jnp.float32) * scale + bias     # [S, S]
            s = s - jnp.max(s, axis=-1, keepdims=True)
            p = jnp.exp(s)
            p = p * pl.reciprocal(jnp.sum(p, axis=-1, keepdims=True), approx=True)
            ctx = jnp.dot(p, v, preferred_element_type=jnp.float32)                    # [S, Dh]
            # per-head rows of the output projection: accumulate instead of concatenating heads
            attn = attn + jnp.dot(ctx, woh_ref[l * NH + h], preferred_element_type=jnp.float32)
        x = layernorm(attn + x, ln1g_ref[l], ln1b_ref[l])
        hdn = jnp.dot(x, w1_ref[l], preferred_element_type=jnp.float32) + b1_ref[l]
        # TODO(synk): tanh-approx GELU (BERT default is exact erf GELU)
        hdn = 0.5 * hdn * (1.0 + jnp.tanh(0.7978845608028654 * (hdn + 0.044715 * hdn * hdn * hdn)))
        ffn = jnp.dot(hdn, w2_ref[l], preferred_element_type=jnp.float32) + b2_ref[l]
        x = layernorm(ffn + x, ln2g_ref[l], ln2b_ref[l])

    # ---- token classifier: emissions never leave VMEM ----
    logits = jnp.dot(x, wc_ref[...], preferred_element_type=jnp.float32) + bc_ref[...]  # [S, T]

    # ---- CRF negative log-likelihood for this sequence ----
    trans = trans_ref[...]
    start = start_ref[...]
    end = end_ref[...]
    oh = oh_ref[0]                                                 # [S, T] one-hot gold tags
    m = mask_ref[0]                                                # [S, 1] 1.0 = valid label
    m_tail = m[1:, :]                                              # [S-1, 1]

    # gold-path score, hoisted out of the recursion (data-parallel over time).
    # Assumes a left-contiguous mask with the first timestep valid (torchcrf convention).
    em_tok = jnp.sum(logits * oh, axis=-1, keepdims=True)          # [S, 1] emission per step
    em = em_tok[0:1, :] + jnp.sum(m_tail * em_tok[1:, :], axis=0, keepdims=True)
    sel = jnp.dot(oh[:-1, :], trans, preferred_element_type=jnp.float32)   # one matmul / sequence
    tr_tok = jnp.sum(sel * oh[1:, :], axis=-1, keepdims=True)      # [S-1, 1]
    tr = jnp.sum(m_tail * tr_tok, axis=0, keepdims=True)
    start_sc = jnp.sum(start * oh[0:1, :], axis=-1, keepdims=True)
    # end transition at the last valid position, via a telescoping masked sum
    e_tok = jnp.sum(end * oh, axis=-1, keepdims=True)              # [S, 1]
    end_sc = e_tok[0:1, :] + jnp.sum(m_tail * (e_tok[1:, :] - e_tok[:-1, :]),
                                     axis=0, keepdims=True)
    gold = start_sc + em + tr + end_sc                             # [1, 1]

    # alpha (logsumexp) recursion — the only sequential part; unrolled (S is small and static)
    alpha = start + logits[0:1, :]                                 # [1, T]
    for t in range(1, S):
        feats_t = logits[t:t + 1, :]                               # [1, T]
        m_t = m[t:t + 1, :]                                        # [1, 1]
        scores = alpha[:, :, None] + trans[None, :, :] + feats_t[:, None, :]   # [1, T, T]
        smax = jnp.max(scores, axis=1, keepdims=True)              # [1, 1, T]
        new_alpha = jnp.log(jnp.sum(jnp.exp(scores - smax), axis=1)) + smax[:, 0, :]
        alpha = jnp.where(m_t > 0.0, new_alpha, alpha)
    final = alpha + end
    fmax = jnp.max(final, axis=-1, keepdims=True)
    logz = jnp.log(jnp.sum(jnp.exp(final - fmax), axis=-1, keepdims=True)) + fmax       # [1, 1]

    nll_ref[0] = logz - gold


# ----------------------------- parameters -----------------------------

def init_params(key, vocab=50, max_pos=16, type_vocab=2, H=32, NH=2, FF=64, L=2, T=7):
    keys = jax.random.split(key, 64)
    it = iter(range(64))

    def nrm(shape, scale=0.02):
        return (scale * jax.random.normal(keys[next(it)], shape)).astype(jnp.float32)

    params = dict(
        num_heads=NH,
        word_emb=nrm((vocab, H)),
        pos_emb=nrm((max_pos, H)),
        type_emb=nrm((type_vocab, H)),
        emb_ln_g=jnp.ones((H,), jnp.float32),
        emb_ln_b=jnp.zeros((H,), jnp.float32),
        layers=[],
        wc=nrm((H, T)), bc=jnp.zeros((T,), jnp.float32),
        trans=nrm((T, T), 0.1),
        start=nrm((1, T), 0.1),
        end=nrm((1, T), 0.1),
    )
    for _ in range(L):
        params['layers'].append(dict(
            wq=nrm((H, H)), bq=jnp.zeros((H,), jnp.float32),
            wk=nrm((H, H)), bk=jnp.zeros((H,), jnp.float32),
            wv=nrm((H, H)), bv=jnp.zeros((H,), jnp.float32),
            wo=nrm((H, H)), bo=jnp.zeros((H,), jnp.float32),
            ln1_g=jnp.ones((H,), jnp.float32), ln1_b=jnp.zeros((H,), jnp.float32),
            w1=nrm((H, FF)), b1=jnp.zeros((FF,), jnp.float32),
            w2=nrm((FF, H)), b2=jnp.zeros((H,), jnp.float32),
            ln2_g=jnp.ones((H,), jnp.float32), ln2_b=jnp.zeros((H,), jnp.float32),
        ))
    return params


def pack_params(params):
    """Repack nn-style weights into the per-head / stacked layout the fused kernel indexes."""
    H = params['word_emb'].shape[1]
    NH = params['num_heads']
    Dh = H // NH
    f32 = jnp.float32

    wqkv, bqkv, woh = [], [], []
    bo, ln1g, ln1b, w1, b1, w2, b2, ln2g, ln2b = ([] for _ in range(9))
    for layer in params['layers']:
        for h in range(NH):
            c = slice(h * Dh, (h + 1) * Dh)
            for wname, bname in (('wq', 'bq'), ('wk', 'bk'), ('wv', 'bv')):
                wqkv.append(layer[wname][:, c])            # [H, Dh]
                bqkv.append(layer[bname][c][None, :])      # [1, Dh]
            woh.append(layer['wo'][c, :])                  # [Dh, H]
        bo.append(layer['bo'][None, :])
        ln1g.append(layer['ln1_g'][None, :]); ln1b.append(layer['ln1_b'][None, :])
        w1.append(layer['w1']); b1.append(layer['b1'][None, :])
        w2.append(layer['w2']); b2.append(layer['b2'][None, :])
        ln2g.append(layer['ln2_g'][None, :]); ln2b.append(layer['ln2_b'][None, :])

    return dict(
        emb_ln_g=params['emb_ln_g'][None, :].astype(f32),
        emb_ln_b=params['emb_ln_b'][None, :].astype(f32),
        w_qkv=jnp.stack(wqkv).astype(f32),    # [L*NH*3, H, Dh]
        b_qkv=jnp.stack(bqkv).astype(f32),    # [L*NH*3, 1, Dh]
        w_oh=jnp.stack(woh).astype(f32),      # [L*NH, Dh, H]
        b_o=jnp.stack(bo).astype(f32),        # [L, 1, H]
        ln1_g=jnp.stack(ln1g).astype(f32), ln1_b=jnp.stack(ln1b).astype(f32),
        w1=jnp.stack(w1).astype(f32), b1=jnp.stack(b1).astype(f32),
        w2=jnp.stack(w2).astype(f32), b2=jnp.stack(b2).astype(f32),
        ln2_g=jnp.stack(ln2g).astype(f32), ln2_b=jnp.stack(ln2b).astype(f32),
        wc=params['wc'].astype(f32), bc=params['bc'][None, :].astype(f32),
        trans=params['trans'].astype(f32),
        start=params['start'].astype(f32),
        end=params['end'].astype(f32),
    )


# ----------------------------- forward (glue + single fused kernel) -----------------------------

def bert_crf_forward(params, input_ids, token_type_ids, attention_mask, labels):
    B, S = input_ids.shape
    H = params['word_emb'].shape[1]
    T = params['wc'].shape[1]
    NH = params['num_heads']
    L = len(params['layers'])
    Dh = H // NH

    # XLA glue: embedding gathers + label preprocessing (inputs only; no kernel intermediates
    # round-trip through HBM).
    emb = (params['word_emb'][input_ids]
           + params['pos_emb'][:S][None, :, :]
           + params['type_emb'][token_type_ids]).astype(jnp.float32)            # [B, S, H]
    bias = ((1.0 - attention_mask.astype(jnp.float32)) * -10000.0)[:, None, :]  # [B, 1, S]
    mask = labels != -100
    tags = jnp.where(mask, labels, 0)
    oh = jax.nn.one_hot(tags, T, dtype=jnp.float32)                             # [B, S, T]
    mask_f = mask.astype(jnp.float32)[:, :, None]                               # [B, S, 1]

    w = pack_params(params)
    weight_args = [w['emb_ln_g'], w['emb_ln_b'],
                   w['w_qkv'], w['b_qkv'], w['w_oh'], w['b_o'],
                   w['ln1_g'], w['ln1_b'],
                   w['w1'], w['b1'], w['w2'], w['b2'],
                   w['ln2_g'], w['ln2_b'],
                   w['wc'], w['bc'],
                   w['trans'], w['start'], w['end']]

    def shared(a):
        # full-array block, constant index -> DMA'd once, reused across grid steps
        return pl.BlockSpec(a.shape, lambda i, n=a.ndim: (0,) * n)

    in_specs = [
        pl.BlockSpec((1, S, H), lambda i: (i, 0, 0)),   # embeddings
        pl.BlockSpec((1, 1, S), lambda i: (i, 0, 0)),   # attention bias
        pl.BlockSpec((1, S, T), lambda i: (i, 0, 0)),   # one-hot gold tags
        pl.BlockSpec((1, S, 1), lambda i: (i, 0, 0)),   # label mask
    ] + [shared(a) for a in weight_args]

    kernel = functools.partial(_bert_crf_seq_kernel, L=L, NH=NH, Dh=Dh, S=S, eps=1e-12)

    nll = pl.pallas_call(
        kernel,
        out_shape=jax.ShapeDtypeStruct((B, 1, 1), jnp.float32),
        grid=(B,),
        in_specs=in_specs,
        out_specs=pl.BlockSpec((1, 1, 1), lambda i: (i, 0, 0)),
        compiler_params=pltpu.CompilerParams(dimension_semantics=("parallel",)),
    )(emb, bias, oh, mask_f, *weight_args)

    return jnp.mean(nll)


# ----------------------------- main -----------------------------

if __name__ == "__main__":
    key = jax.random.PRNGKey(0)
    pkey, ikey, lkey = jax.random.split(key, 3)

    B, S, T, VOCAB = 2, 8, 7, 50
    params = init_params(pkey, vocab=VOCAB, T=T)

    input_ids = jax.random.randint(ikey, (B, S), 0, VOCAB, dtype=jnp.int32)
    token_type_ids = jnp.zeros((B, S), jnp.int32)
    attention_mask = jnp.array([[1, 1, 1, 1, 1, 1, 1, 1],
                                [1, 1, 1, 1, 1, 1, 0, 0]], jnp.int32)
    labels = jax.random.randint(lkey, (B, S), 0, T, dtype=jnp.int32)
    # -100 on padding / special positions (first token kept valid: CRF mask[:, 0] must be True)
    labels = labels.at[0, 7].set(-100)
    labels = labels.at[1, 6:].set(-100)

    loss = bert_crf_forward(params, input_ids, token_type_ids, attention_mask, labels)
    jax.block_until_ready(loss)
    print("KERNEL_OK")
</pallas_src>

<mosaic_0001>
module attributes {stable_mosaic.version = 11 : i64} {
  func.func @_bert_crf_seq_kernel(%arg0: i32, %arg1: memref<1x8x32xf32, #tpu.memory_space<vmem>>, %arg2: memref<1x1x8xf32, #tpu.memory_space<vmem>>, %arg3: memref<1x8x7xf32, #tpu.memory_space<vmem>>, %arg4: memref<1x8x1xf32, #tpu.memory_space<vmem>>, %arg5: memref<1x32xf32, #tpu.memory_space<vmem>>, %arg6: memref<1x32xf32, #tpu.memory_space<vmem>>, %arg7: memref<12x32x16xf32, #tpu.memory_space<vmem>>, %arg8: memref<12x1x16xf32, #tpu.memory_space<vmem>>, %arg9: memref<4x16x32xf32, #tpu.memory_space<vmem>>, %arg10: memref<2x1x32xf32, #tpu.memory_space<vmem>>, %arg11: memref<2x1x32xf32, #tpu.memory_space<vmem>>, %arg12: memref<2x1x32xf32, #tpu.memory_space<vmem>>, %arg13: memref<2x32x64xf32, #tpu.memory_space<vmem>>, %arg14: memref<2x1x64xf32, #tpu.memory_space<vmem>>, %arg15: memref<2x64x32xf32, #tpu.memory_space<vmem>>, %arg16: memref<2x1x32xf32, #tpu.memory_space<vmem>>, %arg17: memref<2x1x32xf32, #tpu.memory_space<vmem>>, %arg18: memref<2x1x32xf32, #tpu.memory_space<vmem>>, %arg19: memref<32x7xf32, #tpu.memory_space<vmem>>, %arg20: memref<1x7xf32, #tpu.memory_space<vmem>>, %arg21: memref<7x7xf32, #tpu.memory_space<vmem>>, %arg22: memref<1x7xf32, #tpu.memory_space<vmem>>, %arg23: memref<1x7xf32, #tpu.memory_space<vmem>>, %arg24: memref<1x1x1xf32, #tpu.memory_space<vmem>>) attributes {dimension_semantics = [#tpu.dimension_semantics<parallel>], iteration_bounds = array<i64: 2>, scalar_prefetch = 0 : i64, scratch_operands = 0 : i64, tpu.core_type = #tpu.core_type<tc>, window_params = [{transform_indices = @transform_0, window_bounds = array<i64: 1, 8, 32>}, {transform_indices = @transform_1, window_bounds = array<i64: 1, 1, 8>}, {transform_indices = @transform_2, window_bounds = array<i64: 1, 8, 7>}, {transform_indices = @transform_3, window_bounds = array<i64: 1, 8, 1>}, {pipeline_mode = #tpu.pipeline_mode<synchronous>, transform_indices = @transform_4, window_bounds = array<i64: 1, 32>}, {pipeline_mode = #tpu.pipeline_mode<synchronous>, transform_indices = @transform_5, window_bounds = array<i64: 1, 32>}, {pipeline_mode = #tpu.pipeline_mode<synchronous>, transform_indices = @transform_6, window_bounds = array<i64: 12, 32, 16>}, {pipeline_mode = #tpu.pipeline_mode<synchronous>, transform_indices = @transform_7, window_bounds = array<i64: 12, 1, 16>}, {pipeline_mode = #tpu.pipeline_mode<synchronous>, transform_indices = @transform_8, window_bounds = array<i64: 4, 16, 32>}, {pipeline_mode = #tpu.pipeline_mode<synchronous>, transform_indices = @transform_9, window_bounds = array<i64: 2, 1, 32>}, {pipeline_mode = #tpu.pipeline_mode<synchronous>, transform_indices = @transform_10, window_bounds = array<i64: 2, 1, 32>}, {pipeline_mode = #tpu.pipeline_mode<synchronous>, transform_indices = @transform_11, window_bounds = array<i64: 2, 1, 32>}, {pipeline_mode = #tpu.pipeline_mode<synchronous>, transform_indices = @transform_12, window_bounds = array<i64: 2, 32, 64>}, {pipeline_mode = #tpu.pipeline_mode<synchronous>, transform_indices = @transform_13, window_bounds = array<i64: 2, 1, 64>}, {pipeline_mode = #tpu.pipeline_mode<synchronous>, transform_indices = @transform_14, window_bounds = array<i64: 2, 64, 32>}, {pipeline_mode = #tpu.pipeline_mode<synchronous>, transform_indices = @transform_15, window_bounds = array<i64: 2, 1, 32>}, {pipeline_mode = #tpu.pipeline_mode<synchronous>, transform_indices = @transform_16, window_bounds = array<i64: 2, 1, 32>}, {pipeline_mode = #tpu.pipeline_mode<synchronous>, transform_indices = @transform_17, window_bounds = array<i64: 2, 1, 32>}, {pipeline_mode = #tpu.pipeline_mode<synchronous>, transform_indices = @transform_18, window_bounds = array<i64: 32, 7>}, {pipeline_mode = #tpu.pipeline_mode<synchronous>, transform_indices = @transform_19, window_bounds = array<i64: 1, 7>}, {pipeline_mode = #tpu.pipeline_mode<synchronous>, transform_indices = @transform_20, window_bounds = array<i64: 7, 7>}, {pipeline_mode = #tpu.pipeline_mode<synchronous>, transform_indices = @transform_21, window_bounds = array<i64: 1, 7>}, {pipeline_mode = #tpu.pipeline_mode<synchronous>, transform_indices = @transform_22, window_bounds = array<i64: 1, 7>}, {transform_indices = @transform_23, window_bounds = array<i64: 1, 1, 1>}]} {
    %c0 = arith.constant 0 : index
    %c0_0 = arith.constant 0 : index
    %c0_1 = arith.constant 0 : index
    %0 = vector.load %arg1[%c0, %c0_0, %c0_1] : memref<1x8x32xf32, #tpu.memory_space<vmem>>, vector<1x8x32xf32>
    %1 = vector.shape_cast %0 : vector<1x8x32xf32> to vector<8x32xf32>
    %c0_2 = arith.constant 0 : index
    %c0_3 = arith.constant 0 : index
    %2 = vector.load %arg5[%c0_2, %c0_3] : memref<1x32xf32, #tpu.memory_space<vmem>>, vector<1x32xf32>
    %c0_4 = arith.constant 0 : index
    %c0_5 = arith.constant 0 : index
    %3 = vector.load %arg6[%c0_4, %c0_5] : memref<1x32xf32, #tpu.memory_space<vmem>>, vector<1x32xf32>
    %cst = arith.constant dense<0.000000e+00> : vector<8xf32>
    %4 = vector.multi_reduction <add>, %1, %cst [1] : vector<8x32xf32> to vector<8xf32>
    %5 = vector.shape_cast %4 : vector<8xf32> to vector<8x1xf32>
    %cst_6 = arith.constant 3.200000e+01 : f32
    %6 = vector.broadcast %cst_6 : f32 to vector<8x1xf32>
    %7 = arith.divf %5, %6 : vector<8x1xf32>
    %8 = vector.broadcast %7 : vector<8x1xf32> to vector<8x32xf32>
    %9 = arith.subf %1, %8 : vector<8x32xf32>
    %10 = vector.broadcast %7 : vector<8x1xf32> to vector<8x32xf32>
    %11 = arith.subf %1, %10 : vector<8x32xf32>
    %12 = arith.mulf %9, %11 : vector<8x32xf32>
    %cst_7 = arith.constant dense<0.000000e+00> : vector<8xf32>
    %13 = vector.multi_reduction <add>, %12, %cst_7 [1] : vector<8x32xf32> to vector<8xf32>
    %14 = vector.shape_cast %13 : vector<8xf32> to vector<8x1xf32>
    %cst_8 = arith.constant 3.200000e+01 : f32
    %15 = vector.broadcast %cst_8 : f32 to vector<8x1xf32>
    %16 = arith.divf %14, %15 : vector<8x1xf32>
    %17 = vector.broadcast %7 : vector<8x1xf32> to vector<8x32xf32>
    %18 = arith.subf %1, %17 : vector<8x32xf32>
    %cst_9 = arith.constant 9.99999996E-13 : f32
    %19 = vector.broadcast %cst_9 : f32 to vector<8x1xf32>
    %20 = arith.addf %16, %19 : vector<8x1xf32>
    %21 = math.rsqrt %20 : vector<8x1xf32>
    %22 = vector.broadcast %21 : vector<8x1xf32> to vector<8x32xf32>
    %23 = arith.mulf %18, %22 : vector<8x32xf32>
    %24 = vector.broadcast %2 : vector<1x32xf32> to vector<8x32xf32>
    %25 = arith.mulf %23, %24 : vector<8x32xf32>
    %26 = vector.broadcast %3 : vector<1x32xf32> to vector<8x32xf32>
    %27 = arith.addf %25, %26 : vector<8x32xf32>
    %c0_10 = arith.constant 0 : index
    %c0_11 = arith.constant 0 : index
    %c0_12 = arith.constant 0 : index
    %28 = vector.load %arg2[%c0_10, %c0_11, %c0_12] : memref<1x1x8xf32, #tpu.memory_space<vmem>>, vector<1x1x8xf32>
    %29 = vector.shape_cast %28 : vector<1x1x8xf32> to vector<1x8xf32>
    %c0_13 = arith.constant 0 : index
    %c0_14 = arith.constant 0 : index
    %c0_15 = arith.constant 0 : index
    %30 = vector.load %arg10[%c0_13, %c0_14, %c0_15] : memref<2x1x32xf32, #tpu.memory_space<vmem>>, vector<1x1x32xf32>
    %31 = vector.shape_cast %30 : vector<1x1x32xf32> to vector<1x32xf32>
    %c0_16 = arith.constant 0 : index
    %c0_17 = arith.constant 0 : index
    %c0_18 = arith.constant 0 : index
    %32 = vector.load %arg7[%c0_16, %c0_17, %c0_18] : memref<12x32x16xf32, #tpu.memory_space<vmem>>, vector<1x32x16xf32>
    %33 = vector.shape_cast %32 : vector<1x32x16xf32> to vector<32x16xf32>
    %cst_19 = arith.constant dense<0.000000e+00> : vector<8x16xf32>
    %34 = tpu.matmul %27, %33, %cst_19 {dimension_numbers = #tpu.dot_dimension_numbers<[1], [0], [0], [1], [0, 0, 1, 1], [], []>} : vector<8x32xf32>, vector<32x16xf32>, vector<8x16xf32> -> vector<8x16xf32>
    %c0_20 = arith.constant 0 : index
    %c0_21 = arith.constant 0 : index
    %c0_22 = arith.constant 0 : index
    %35 = vector.load %arg8[%c0_20, %c0_21, %c0_22] : memref<12x1x16xf32, #tpu.memory_space<vmem>>, vector<1x1x16xf32>
    %36 = vector.shape_cast %35 : vector<1x1x16xf32> to vector<1x16xf32>
    %37 = vector.broadcast %36 : vector<1x16xf32> to vector<8x16xf32>
    %38 = arith.addf %34, %37 : vector<8x16xf32>
    %c1 = arith.constant 1 : index
    %c0_23 = arith.constant 0 : index
    %c0_24 = arith.constant 0 : index
    %39 = vector.load %arg7[%c1, %c0_23, %c0_24] : memref<12x32x16xf32, #tpu.memory_space<vmem>>, vector<1x32x16xf32>
    %40 = vector.shape_cast %39 : vector<1x32x16xf32> to vector<32x16xf32>
    %cst_25 = arith.constant dense<0.000000e+00> : vector<8x16xf32>
    %41 = tpu.matmul %27, %40, %cst_25 {dimension_numbers = #tpu.dot_dimension_numbers<[1], [0], [0], [1], [0, 0, 1, 1], [], []>} : vector<8x32xf32>, vector<32x16xf32>, vector<8x16xf32> -> vector<8x16xf32>
    %c1_26 = arith.constant 1 : index
    %c0_27 = arith.constant 0 : index
    %c0_28 = arith.constant 0 : index
    %42 = vector.load %arg8[%c1_26, %c0_27, %c0_28] : memref<12x1x16xf32, #tpu.memory_space<vmem>>, vector<1x1x16xf32>
    %43 = vector.shape_cast %42 : vector<1x1x16xf32> to vector<1x16xf32>
    %44 = vector.broadcast %43 : vector<1x16xf32> to vector<8x16xf32>
    %45 = arith.addf %41, %44 : vector<8x16xf32>
    %c2 = arith.constant 2 : index
    %c0_29 = arith.constant 0 : index
    %c0_30 = arith.constant 0 : index
    %46 = vector.load %arg7[%c2, %c0_29, %c0_30] : memref<12x32x16xf32, #tpu.memory_space<vmem>>, vector<1x32x16xf32>
    %47 = vector.shape_cast %46 : vector<1x32x16xf32> to vector<32x16xf32>
    %cst_31 = arith.constant dense<0.000000e+00> : vector<8x16xf32>
    %48 = tpu.matmul %27, %47, %cst_31 {dimension_numbers = #tpu.dot_dimension_numbers<[1], [0], [0], [1], [0, 0, 1, 1], [], []>} : vector<8x32xf32>, vector<32x16xf32>, vector<8x16xf32> -> vector<8x16xf32>
    %c2_32 = arith.constant 2 : index
    %c0_33 = arith.constant 0 : index
    %c0_34 = arith.constant 0 : index
    %49 = vector.load %arg8[%c2_32, %c0_33, %c0_34] : memref<12x1x16xf32, #tpu.memory_space<vmem>>, vector<1x1x16xf32>
    %50 = vector.shape_cast %49 : vector<1x1x16xf32> to vector<1x16xf32>
    %51 = vector.broadcast %50 : vector<1x16xf32> to vector<8x16xf32>
    %52 = arith.addf %48, %51 : vector<8x16xf32>
    %cst_35 = arith.constant dense<0.000000e+00> : vector<8x8xf32>
    %53 = tpu.matmul %38, %45, %cst_35 {dimension_numbers = #tpu.dot_dimension_numbers<[1], [1], [0], [0], [0, 0, 1, 0], [], []>} : vector<8x16xf32>, vector<8x16xf32>, vector<8x8xf32> -> vector<8x8xf32>
    %cst_36 = arith.constant 2.500000e-01 : f32
    %54 = vector.broadcast %cst_36 : f32 to vector<8x8xf32>
    %55 = arith.mulf %53, %54 : vector<8x8xf32>
    %56 = vector.broadcast %29 : vector<1x8xf32> to vector<8x8xf32>
    %57 = arith.addf %55, %56 : vector<8x8xf32>
    %cst_37 = arith.constant dense<0xFF800000> : vector<8xf32>
    %58 = vector.multi_reduction <maximumf>, %57, %cst_37 [1] : vector<8x8xf32> to vector<8xf32>
    %59 = vector.shape_cast %58 : vector<8xf32> to vector<8x1xf32>
    %60 = vector.broadcast %59 : vector<8x1xf32> to vector<8x8xf32>
    %61 = arith.subf %57, %60 : vector<8x8xf32>
    %62 = math.exp %61 : vector<8x8xf32>
    %cst_38 = arith.constant dense<0.000000e+00> : vector<8xf32>
    %63 = vector.multi_reduction <add>, %62, %cst_38 [1] : vector<8x8xf32> to vector<8xf32>
    %64 = vector.shape_cast %63 : vector<8xf32> to vector<8x1xf32>
    %65 = tpu.reciprocal %64 {approx = true} : vector<8x1xf32> -> vector<8x1xf32>
    %66 = vector.broadcast %65 : vector<8x1xf32> to vector<8x8xf32>
    %67 = arith.mulf %62, %66 : vector<8x8xf32>
    %cst_39 = arith.constant dense<0.000000e+00> : vector<8x16xf32>
    %68 = tpu.matmul %67, %52, %cst_39 {dimension_numbers = #tpu.dot_dimension_numbers<[1], [0], [0], [1], [0, 0, 1, 1], [], []>} : vector<8x8xf32>, vector<8x16xf32>, vector<8x16xf32> -> vector<8x16xf32>
    %c0_40 = arith.constant 0 : index
    %c0_41 = arith.constant 0 : index
    %c0_42 = arith.constant 0 : index
    %69 = vector.load %arg9[%c0_40, %c0_41, %c0_42] : memref<4x16x32xf32, #tpu.memory_space<vmem>>, vector<1x16x32xf32>
    %70 = vector.shape_cast %69 : vector<1x16x32xf32> to vector<16x32xf32>
    %cst_43 = arith.constant dense<0.000000e+00> : vector<8x32xf32>
    %71 = tpu.matmul %68, %70, %cst_43 {dimension_numbers = #tpu.dot_dimension_numbers<[1], [0], [0], [1], [0, 0, 1, 1], [], []>} : vector<8x16xf32>, vector<16x32xf32>, vector<8x32xf32> -> vector<8x32xf32>
    %72 = vector.broadcast %31 : vector<1x32xf32> to vector<8x32xf32>
    %73 = arith.addf %72, %71 : vector<8x32xf32>
    %c3 = arith.constant 3 : index
    %c0_44 = arith.constant 0 : index
    %c0_45 = arith.constant 0 : index
    %74 = vector.load %arg7[%c3, %c0_44, %c0_45] : memref<12x32x16xf32, #tpu.memory_space<vmem>>, vector<1x32x16xf32>
    %75 = vector.shape_cast %74 : vector<1x32x16xf32> to vector<32x16xf32>
    %cst_46 = arith.constant dense<0.000000e+00> : vector<8x16xf32>
    %76 = tpu.matmul %27, %75, %cst_46 {dimension_numbers = #tpu.dot_dimension_numbers<[1], [0], [0], [1], [0, 0, 1, 1], [], []>} : vector<8x32xf32>, vector<32x16xf32>, vector<8x16xf32> -> vector<8x16xf32>
    %c3_47 = arith.constant 3 : index
    %c0_48 = arith.constant 0 : index
    %c0_49 = arith.constant 0 : index
    %77 = vector.load %arg8[%c3_47, %c0_48, %c0_49] : memref<12x1x16xf32, #tpu.memory_space<vmem>>, vector<1x1x16xf32>
    %78 = vector.shape_cast %77 : vector<1x1x16xf32> to vector<1x16xf32>
    %79 = vector.broadcast %78 : vector<1x16xf32> to vector<8x16xf32>
    %80 = arith.addf %76, %79 : vector<8x16xf32>
    %c4 = arith.constant 4 : index
    %c0_50 = arith.constant 0 : index
    %c0_51 = arith.constant 0 : index
    %81 = vector.load %arg7[%c4, %c0_50, %c0_51] : memref<12x32x16xf32, #tpu.memory_space<vmem>>, vector<1x32x16xf32>
    %82 = vector.shape_cast %81 : vector<1x32x16xf32> to vector<32x16xf32>
    %cst_52 = arith.constant dense<0.000000e+00> : vector<8x16xf32>
    %83 = tpu.matmul %27, %82, %cst_52 {dimension_numbers = #tpu.dot_dimension_numbers<[1], [0], [0], [1], [0, 0, 1, 1], [], []>} : vector<8x32xf32>, vector<32x16xf32>, vector<8x16xf32> -> vector<8x16xf32>
    %c4_53 = arith.constant 4 : index
    %c0_54 = arith.constant 0 : index
    %c0_55 = arith.constant 0 : index
    %84 = vector.load %arg8[%c4_53, %c0_54, %c0_55] : memref<12x1x16xf32, #tpu.memory_space<vmem>>, vector<1x1x16xf32>
    %85 = vector.shape_cast %84 : vector<1x1x16xf32> to vector<1x16xf32>
    %86 = vector.broadcast %85 : vector<1x16xf32> to vector<8x16xf32>
    %87 = arith.addf %83, %86 : vector<8x16xf32>
    %c5 = arith.constant 5 : index
    %c0_56 = arith.constant 0 : index
    %c0_57 = arith.constant 0 : index
    %88 = vector.load %arg7[%c5, %c0_56, %c0_57] : memref<12x32x16xf32, #tpu.memory_space<vmem>>, vector<1x32x16xf32>
    %89 = vector.shape_cast %88 : vector<1x32x16xf32> to vector<32x16xf32>
    %cst_58 = arith.constant dense<0.000000e+00> : vector<8x16xf32>
    %90 = tpu.matmul %27, %89, %cst_58 {dimension_numbers = #tpu.dot_dimension_numbers<[1], [0], [0], [1], [0, 0, 1, 1], [], []>} : vector<8x32xf32>, vector<32x16xf32>, vector<8x16xf32> -> vector<8x16xf32>
    %c5_59 = arith.constant 5 : index
    %c0_60 = arith.constant 0 : index
    %c0_61 = arith.constant 0 : index
    %91 = vector.load %arg8[%c5_59, %c0_60, %c0_61] : memref<12x1x16xf32, #tpu.memory_space<vmem>>, vector<1x1x16xf32>
    %92 = vector.shape_cast %91 : vector<1x1x16xf32> to vector<1x16xf32>
    %93 = vector.broadcast %92 : vector<1x16xf32> to vector<8x16xf32>
    %94 = arith.addf %90, %93 : vector<8x16xf32>
    %cst_62 = arith.constant dense<0.000000e+00> : vector<8x8xf32>
    %95 = tpu.matmul %80, %87, %cst_62 {dimension_numbers = #tpu.dot_dimension_numbers<[1], [1], [0], [0], [0, 0, 1, 0], [], []>} : vector<8x16xf32>, vector<8x16xf32>, vector<8x8xf32> -> vector<8x8xf32>
    %cst_63 = arith.constant 2.500000e-01 : f32
    %96 = vector.broadcast %cst_63 : f32 to vector<8x8xf32>
    %97 = arith.mulf %95, %96 : vector<8x8xf32>
    %98 = vector.broadcast %29 : vector<1x8xf32> to vector<8x8xf32>
    %99 = arith.addf %97, %98 : vector<8x8xf32>
    %cst_64 = arith.constant dense<0xFF800000> : vector<8xf32>
    %100 = vector.multi_reduction <maximumf>, %99, %cst_64 [1] : vector<8x8xf32> to vector<8xf32>
    %101 = vector.shape_cast %100 : vector<8xf32> to vector<8x1xf32>
    %102 = vector.broadcast %101 : vector<8x1xf32> to vector<8x8xf32>
    %103 = arith.subf %99, %102 : vector<8x8xf32>
    %104 = math.exp %103 : vector<8x8xf32>
    %cst_65 = arith.constant dense<0.000000e+00> : vector<8xf32>
    %105 = vector.multi_reduction <add>, %104, %cst_65 [1] : vector<8x8xf32> to vector<8xf32>
    %106 = vector.shape_cast %105 : vector<8xf32> to vector<8x1xf32>
    %107 = tpu.reciprocal %106 {approx = true} : vector<8x1xf32> -> vector<8x1xf32>
    %108 = vector.broadcast %107 : vector<8x1xf32> to vector<8x8xf32>
    %109 = arith.mulf %104, %108 : vector<8x8xf32>
    %cst_66 = arith.constant dense<0.000000e+00> : vector<8x16xf32>
    %110 = tpu.matmul %109, %94, %cst_66 {dimension_numbers = #tpu.dot_dimension_numbers<[1], [0], [0], [1], [0, 0, 1, 1], [], []>} : vector<8x8xf32>, vector<8x16xf32>, vector<8x16xf32> -> vector<8x16xf32>
    %c1_67 = arith.constant 1 : index
    %c0_68 = arith.constant 0 : index
    %c0_69 = arith.constant 0 : index
    %111 = vector.load %arg9[%c1_67, %c0_68, %c0_69] : memref<4x16x32xf32, #tpu.memory_space<vmem>>, vector<1x16x32xf32>
    %112 = vector.shape_cast %111 : vector<1x16x32xf32> to vector<16x32xf32>
    %cst_70 = arith.constant dense<0.000000e+00> : vector<8x32xf32>
    %113 = tpu.matmul %110, %112, %cst_70 {dimension_numbers = #tpu.dot_dimension_numbers<[1], [0], [0], [1], [0, 0, 1, 1], [], []>} : vector<8x16xf32>, vector<16x32xf32>, vector<8x32xf32> -> vector<8x32xf32>
    %114 = arith.addf %73, %113 : vector<8x32xf32>
    %115 = arith.addf %114, %27 : vector<8x32xf32>
    %c0_71 = arith.constant 0 : index
    %c0_72 = arith.constant 0 : index
    %c0_73 = arith.constant 0 : index
    %116 = vector.load %arg11[%c0_71, %c0_72, %c0_73] : memref<2x1x32xf32, #tpu.memory_space<vmem>>, vector<1x1x32xf32>
    %117 = vector.shape_cast %116 : vector<1x1x32xf32> to vector<1x32xf32>
    %c0_74 = arith.constant 0 : index
    %c0_75 = arith.constant 0 : index
    %c0_76 = arith.constant 0 : index
    %118 = vector.load %arg12[%c0_74, %c0_75, %c0_76] : memref<2x1x32xf32, #tpu.memory_space<vmem>>, vector<1x1x32xf32>
    %119 = vector.shape_cast %118 : vector<1x1x32xf32> to vector<1x32xf32>
    %cst_77 = arith.constant dense<0.000000e+00> : vector<8xf32>
    %120 = vector.multi_reduction <add>, %115, %cst_77 [1] : vector<8x32xf32> to vector<8xf32>
    %121 = vector.shape_cast %120 : vector<8xf32> to vector<8x1xf32>
    %cst_78 = arith.constant 3.200000e+01 : f32
    %122 = vector.broadcast %cst_78 : f32 to vector<8x1xf32>
    %123 = arith.divf %121, %122 : vector<8x1xf32>
    %124 = vector.broadcast %123 : vector<8x1xf32> to vector<8x32xf32>
    %125 = arith.subf %115, %124 : vector<8x32xf32>
    %126 = vector.broadcast %123 : vector<8x1xf32> to vector<8x32xf32>
    %127 = arith.subf %115, %126 : vector<8x32xf32>
    %128 = arith.mulf %125, %127 : vector<8x32xf32>
    %cst_79 = arith.constant dense<0.000000e+00> : vector<8xf32>
    %129 = vector.multi_reduction <add>, %128, %cst_79 [1] : vector<8x32xf32> to vector<8xf32>
    %130 = vector.shape_cast %129 : vector<8xf32> to vector<8x1xf32>
    %cst_80 = arith.constant 3.200000e+01 : f32
    %131 = vector.broadcast %cst_80 : f32 to vector<8x1xf32>
    %132 = arith.divf %130, %131 : vector<8x1xf32>
    %133 = vector.broadcast %123 : vector<8x1xf32> to vector<8x32xf32>
    %134 = arith.subf %115, %133 : vector<8x32xf32>
    %cst_81 = arith.constant 9.99999996E-13 : f32
    %135 = vector.broadcast %cst_81 : f32 to vector<8x1xf32>
    %136 = arith.addf %132, %135 : vector<8x1xf32>
    %137 = math.rsqrt %136 : vector<8x1xf32>
    %138 = vector.broadcast %137 : vector<8x1xf32> to vector<8x32xf32>
    %139 = arith.mulf %134, %138 : vector<8x32xf32>
    %140 = vector.broadcast %117 : vector<1x32xf32> to vector<8x32xf32>
    %141 = arith.mulf %139, %140 : vector<8x32xf32>
    %142 = vector.broadcast %119 : vector<1x32xf32> to vector<8x32xf32>
    %143 = arith.addf %141, %142 : vector<8x32xf32>
    %c0_82 = arith.constant 0 : index
    %c0_83 = arith.constant 0 : index
    %c0_84 = arith.constant 0 : index
    %144 = vector.load %arg13[%c0_82, %c0_83, %c0_84] : memref<2x32x64xf32, #tpu.memory_space<vmem>>, vector<1x32x64xf32>
    %145 = vector.shape_cast %144 : vector<1x32x64xf32> to vector<32x64xf32>
    %cst_85 = arith.constant dense<0.000000e+00> : vector<8x64xf32>
    %146 = tpu.matmul %143, %145, %cst_85 {dimension_numbers = #tpu.dot_dimension_numbers<[1], [0], [0], [1], [0, 0, 1, 1], [], []>} : vector<8x32xf32>, vector<32x64xf32>, vector<8x64xf32> -> vector<8x64xf32>
    %c0_86 = arith.constant 0 : index
    %c0_87 = arith.constant 0 : index
    %c0_88 = arith.constant 0 : index
    %147 = vector.load %arg14[%c0_86, %c0_87, %c0_88] : memref<2x1x64xf32, #tpu.memory_space<vmem>>, vector<1x1x64xf32>
    %148 = vector.shape_cast %147 : vector<1x1x64xf32> to vector<1x64xf32>
    %149 = vector.broadcast %148 : vector<1x64xf32> to vector<8x64xf32>
    %150 = arith.addf %146, %149 : vector<8x64xf32>
    %cst_89 = arith.constant 5.000000e-01 : f32
    %151 = vector.broadcast %cst_89 : f32 to vector<8x64xf32>
    %152 = arith.mulf %151, %150 : vector<8x64xf32>
    %cst_90 = arith.constant 4.471500e-02 : f32
    %153 = vector.broadcast %cst_90 : f32 to vector<8x64xf32>
    %154 = arith.mulf %153, %150 : vector<8x64xf32>
    %155 = arith.mulf %154, %150 : vector<8x64xf32>
    %156 = arith.mulf %155, %150 : vector<8x64xf32>
    %157 = arith.addf %150, %156 : vector<8x64xf32>
    %cst_91 = arith.constant 0.797884583 : f32
    %158 = vector.broadcast %cst_91 : f32 to vector<8x64xf32>
    %159 = arith.mulf %158, %157 : vector<8x64xf32>
    %160 = math.tanh %159 : vector<8x64xf32>
    %cst_92 = arith.constant 1.000000e+00 : f32
    %161 = vector.broadcast %cst_92 : f32 to vector<8x64xf32>
    %162 = arith.addf %161, %160 : vector<8x64xf32>
    %163 = arith.mulf %152, %162 : vector<8x64xf32>
    %c0_93 = arith.constant 0 : index
    %c0_94 = arith.constant 0 : index
    %c0_95 = arith.constant 0 : index
    %164 = vector.load %arg15[%c0_93, %c0_94, %c0_95] : memref<2x64x32xf32, #tpu.memory_space<vmem>>, vector<1x64x32xf32>
    %165 = vector.shape_cast %164 : vector<1x64x32xf32> to vector<64x32xf32>
    %cst_96 = arith.constant dense<0.000000e+00> : vector<8x32xf32>
    %166 = tpu.matmul %163, %165, %cst_96 {dimension_numbers = #tpu.dot_dimension_numbers<[1], [0], [0], [1], [0, 0, 1, 1], [], []>} : vector<8x64xf32>, vector<64x32xf32>, vector<8x32xf32> -> vector<8x32xf32>
    %c0_97 = arith.constant 0 : index
    %c0_98 = arith.constant 0 : index
    %c0_99 = arith.constant 0 : index
    %167 = vector.load %arg16[%c0_97, %c0_98, %c0_99] : memref<2x1x32xf32, #tpu.memory_space<vmem>>, vector<1x1x32xf32>
    %168 = vector.shape_cast %167 : vector<1x1x32xf32> to vector<1x32xf32>
    %169 = vector.broadcast %168 : vector<1x32xf32> to vector<8x32xf32>
    %170 = arith.addf %166, %169 : vector<8x32xf32>
    %171 = arith.addf %170, %143 : vector<8x32xf32>
    %c0_100 = arith.constant 0 : index
    %c0_101 = arith.constant 0 : index
    %c0_102 = arith.constant 0 : index
    %172 = vector.load %arg17[%c0_100, %c0_101, %c0_102] : memref<2x1x32xf32, #tpu.memory_space<vmem>>, vector<1x1x32xf32>
    %173 = vector.shape_cast %172 : vector<1x1x32xf32> to vector<1x32xf32>
    %c0_103 = arith.constant 0 : index
    %c0_104 = arith.constant 0 : index
    %c0_105 = arith.constant 0 : index
    %174 = vector.load %arg18[%c0_103, %c0_104, %c0_105] : memref<2x1x32xf32, #tpu.memory_space<vmem>>, vector<1x1x32xf32>
    %175 = vector.shape_cast %174 : vector<1x1x32xf32> to vector<1x32xf32>
    %cst_106 = arith.constant dense<0.000000e+00> : vector<8xf32>
    %176 = vector.multi_reduction <add>, %171, %cst_106 [1] : vector<8x32xf32> to vector<8xf32>
    %177 = vector.shape_cast %176 : vector<8xf32> to vector<8x1xf32>
    %cst_107 = arith.constant 3.200000e+01 : f32
    %178 = vector.broadcast %cst_107 : f32 to vector<8x1xf32>
    %179 = arith.divf %177, %178 : vector<8x1xf32>
    %180 = vector.broadcast %179 : vector<8x1xf32> to vector<8x32xf32>
    %181 = arith.subf %171, %180 : vector<8x32xf32>
    %182 = vector.broadcast %179 : vector<8x1xf32> to vector<8x32xf32>
    %183 = arith.subf %171, %182 : vector<8x32xf32>
    %184 = arith.mulf %181, %183 : vector<8x32xf32>
    %cst_108 = arith.constant dense<0.000000e+00> : vector<8xf32>
    %185 = vector.multi_reduction <add>, %184, %cst_108 [1] : vector<8x32xf32> to vector<8xf32>
    %186 = vector.shape_cast %185 : vector<8xf32> to vector<8x1xf32>
    %cst_109 = arith.constant 3.200000e+01 : f32
    %187 = vector.broadcast %cst_109 : f32 to vector<8x1xf32>
    %188 = arith.divf %186, %187 : vector<8x1xf32>
    %189 = vector.broadcast %179 : vector<8x1xf32> to vector<8x32xf32>
    %190 = arith.subf %171, %189 : vector<8x32xf32>
    %cst_110 = arith.constant 9.99999996E-13 : f32
    %191 = vector.broadcast %cst_110 : f32 to vector<8x1xf32>
    %192 = arith.addf %188, %191 : vector<8x1xf32>
    %193 = math.rsqrt %192 : vector<8x1xf32>
    %194 = vector.broadcast %193 : vector<8x1xf32> to vector<8x32xf32>
    %195 = arith.mulf %190, %194 : vector<8x32xf32>
    %196 = vector.broadcast %173 : vector<1x32xf32> to vector<8x32xf32>
    %197 = arith.mulf %195, %196 : vector<8x32xf32>
    %198 = vector.broadcast %175 : vector<1x32xf32> to vector<8x32xf32>
    %199 = arith.addf %197, %198 : vector<8x32xf32>
    %c1_111 = arith.constant 1 : index
    %c0_112 = arith.constant 0 : index
    %c0_113 = arith.constant 0 : index
    %200 = vector.load %arg10[%c1_111, %c0_112, %c0_113] : memref<2x1x32xf32, #tpu.memory_space<vmem>>, vector<1x1x32xf32>
    %201 = vector.shape_cast %200 : vector<1x1x32xf32> to vector<1x32xf32>
    %c6 = arith.constant 6 : index
    %c0_114 = arith.constant 0 : index
    %c0_115 = arith.constant 0 : index
    %202 = vector.load %arg7[%c6, %c0_114, %c0_115] : memref<12x32x16xf32, #tpu.memory_space<vmem>>, vector<1x32x16xf32>
    %203 = vector.shape_cast %202 : vector<1x32x16xf32> to vector<32x16xf32>
    %cst_116 = arith.constant dense<0.000000e+00> : vector<8x16xf32>
    %204 = tpu.matmul %199, %203, %cst_116 {dimension_numbers = #tpu.dot_dimension_numbers<[1], [0], [0], [1], [0, 0, 1, 1], [], []>} : vector<8x32xf32>, vector<32x16xf32>, vector<8x16xf32> -> vector<8x16xf32>
    %c6_117 = arith.constant 6 : index
    %c0_118 = arith.constant 0 : index
    %c0_119 = arith.constant 0 : index
    %205 = vector.load %arg8[%c6_117, %c0_118, %c0_119] : memref<12x1x16xf32, #tpu.memory_space<vmem>>, vector<1x1x16xf32>
    %206 = vector.shape_cast %205 : vector<1x1x16xf32> to vector<1x16xf32>
    %207 = vector.broadcast %206 : vector<1x16xf32> to vector<8x16xf32>
    %208 = arith.addf %204, %207 : vector<8x16xf32>
    %c7 = arith.constant 7 : index
    %c0_120 = arith.constant 0 : index
    %c0_121 = arith.constant 0 : index
    %209 = vector.load %arg7[%c7, %c0_120, %c0_121] : memref<12x32x16xf32, #tpu.memory_space<vmem>>, vector<1x32x16xf32>
    %210 = vector.shape_cast %209 : vector<1x32x16xf32> to vector<32x16xf32>
    %cst_122 = arith.constant dense<0.000000e+00> : vector<8x16xf32>
    %211 = tpu.matmul %199, %210, %cst_122 {dimension_numbers = #tpu.dot_dimension_numbers<[1], [0], [0], [1], [0, 0, 1, 1], [], []>} : vector<8x32xf32>, vector<32x16xf32>, vector<8x16xf32> -> vector<8x16xf32>
    %c7_123 = arith.constant 7 : index
    %c0_124 = arith.constant 0 : index
    %c0_125 = arith.constant 0 : index
    %212 = vector.load %arg8[%c7_123, %c0_124, %c0_125] : memref<12x1x16xf32, #tpu.memory_space<vmem>>, vector<1x1x16xf32>
    %213 = vector.shape_cast %212 : vector<1x1x16xf32> to vector<1x16xf32>
    %214 = vector.broadcast %213 : vector<1x16xf32> to vector<8x16xf32>
    %215 = arith.addf %211, %214 : vector<8x16xf32>
    %c8 = arith.constant 8 : index
    %c0_126 = arith.constant 0 : index
    %c0_127 = arith.constant 0 : index
    %216 = vector.load %arg7[%c8, %c0_126, %c0_127] : memref<12x32x16xf32, #tpu.memory_space<vmem>>, vector<1x32x16xf32>
    %217 = vector.shape_cast %216 : vector<1x32x16xf32> to vector<32x16xf32>
    %cst_128 = arith.constant dense<0.000000e+00> : vector<8x16xf32>
    %218 = tpu.matmul %199, %217, %cst_128 {dimension_numbers = #tpu.dot_dimension_numbers<[1], [0], [0], [1], [0, 0, 1, 1], [], []>} : vector<8x32xf32>, vector<32x16xf32>, vector<8x16xf32> -> vector<8x16xf32>
    %c8_129 = arith.constant 8 : index
    %c0_130 = arith.constant 0 : index
    %c0_131 = arith.constant 0 : index
    %219 = vector.load %arg8[%c8_129, %c0_130, %c0_131] : memref<12x1x16xf32, #tpu.memory_space<vmem>>, vector<1x1x16xf32>
    %220 = vector.shape_cast %219 : vector<1x1x16xf32> to vector<1x16xf32>
    %221 = vector.broadcast %220 : vector<1x16xf32> to vector<8x16xf32>
    %222 = arith.addf %218, %221 : vector<8x16xf32>
    %cst_132 = arith.constant dense<0.000000e+00> : vector<8x8xf32>
    %223 = tpu.matmul %208, %215, %cst_132 {dimension_numbers = #tpu.dot_dimension_numbers<[1], [1], [0], [0], [0, 0, 1, 0], [], []>} : vector<8x16xf32>, vector<8x16xf32>, vector<8x8xf32> -> vector<8x8xf32>
    %cst_133 = arith.constant 2.500000e-01 : f32
    %224 = vector.broadcast %cst_133 : f32 to vector<8x8xf32>
    %225 = arith.mulf %223, %224 : vector<8x8xf32>
    %226 = vector.broadcast %29 : vector<1x8xf32> to vector<8x8xf32>
    %227 = arith.addf %225, %226 : vector<8x8xf32>
    %cst_134 = arith.constant dense<0xFF800000> : vector<8xf32>
    %228 = vector.multi_reduction <maximumf>, %227, %cst_134 [1] : vector<8x8xf32> to vector<8xf32>
    %229 = vector.shape_cast %228 : vector<8xf32> to vector<8x1xf32>
    %230 = vector.broadcast %229 : vector<8x1xf32> to vector<8x8xf32>
    %231 = arith.subf %227, %230 : vector<8x8xf32>
    %232 = math.exp %231 : vector<8x8xf32>
    %cst_135 = arith.constant dense<0.000000e+00> : vector<8xf32>
    %233 = vector.multi_reduction <add>, %232, %cst_135 [1] : vector<8x8xf32> to vector<8xf32>
    %234 = vector.shape_cast %233 : vector<8xf32> to vector<8x1xf32>
    %235 = tpu.reciprocal %234 {approx = true} : vector<8x1xf32> -> vector<8x1xf32>
    %236 = vector.broadcast %235 : vector<8x1xf32> to vector<8x8xf32>
    %237 = arith.mulf %232, %236 : vector<8x8xf32>
    %cst_136 = arith.constant dense<0.000000e+00> : vector<8x16xf32>
    %238 = tpu.matmul %237, %222, %cst_136 {dimension_numbers = #tpu.dot_dimension_numbers<[1], [0], [0], [1], [0, 0, 1, 1], [], []>} : vector<8x8xf32>, vector<8x16xf32>, vector<8x16xf32> -> vector<8x16xf32>
    %c2_137 = arith.constant 2 : index
    %c0_138 = arith.constant 0 : index
    %c0_139 = arith.constant 0 : index
    %239 = vector.load %arg9[%c2_137, %c0_138, %c0_139] : memref<4x16x32xf32, #tpu.memory_space<vmem>>, vector<1x16x32xf32>
    %240 = vector.shape_cast %239 : vector<1x16x32xf32> to vector<16x32xf32>
    %cst_140 = arith.constant dense<0.000000e+00> : vector<8x32xf32>
    %241 = tpu.matmul %238, %240, %cst_140 {dimension_numbers = #tpu.dot_dimension_numbers<[1], [0], [0], [1], [0, 0, 1, 1], [], []>} : vector<8x16xf32>, vector<16x32xf32>, vector<8x32xf32> -> vector<8x32xf32>
    %242 = vector.broadcast %201 : vector<1x32xf32> to vector<8x32xf32>
    %243 = arith.addf %242, %241 : vector<8x32xf32>
    %c9 = arith.constant 9 : index
    %c0_141 = arith.constant 0 : index
    %c0_142 = arith.constant 0 : index
    %244 = vector.load %arg7[%c9, %c0_141, %c0_142] : memref<12x32x16xf32, #tpu.memory_space<vmem>>, vector<1x32x16xf32>
    %245 = vector.shape_cast %244 : vector<1x32x16xf32> to vector<32x16xf32>
    %cst_143 = arith.constant dense<0.000000e+00> : vector<8x16xf32>
    %246 = tpu.matmul %199, %245, %cst_143 {dimension_numbers = #tpu.dot_dimension_numbers<[1], [0], [0], [1], [0, 0, 1, 1], [], []>} : vector<8x32xf32>, vector<32x16xf32>, vector<8x16xf32> -> vector<8x16xf32>
    %c9_144 = arith.constant 9 : index
    %c0_145 = arith.constant 0 : index
    %c0_146 = arith.constant 0 : index
    %247 = vector.load %arg8[%c9_144, %c0_145, %c0_146] : memref<12x1x16xf32, #tpu.memory_space<vmem>>, vector<1x1x16xf32>
    %248 = vector.shape_cast %247 : vector<1x1x16xf32> to vector<1x16xf32>
    %249 = vector.broadcast %248 : vector<1x16xf32> to vector<8x16xf32>
    %250 = arith.addf %246, %249 : vector<8x16xf32>
    %c10 = arith.constant 10 : index
    %c0_147 = arith.constant 0 : index
    %c0_148 = arith.constant 0 : index
    %251 = vector.load %arg7[%c10, %c0_147, %c0_148] : memref<12x32x16xf32, #tpu.memory_space<vmem>>, vector<1x32x16xf32>
    %252 = vector.shape_cast %251 : vector<1x32x16xf32> to vector<32x16xf32>
    %cst_149 = arith.constant dense<0.000000e+00> : vector<8x16xf32>
    %253 = tpu.matmul %199, %252, %cst_149 {dimension_numbers = #tpu.dot_dimension_numbers<[1], [0], [0], [1], [0, 0, 1, 1], [], []>} : vector<8x32xf32>, vector<32x16xf32>, vector<8x16xf32> -> vector<8x16xf32>
    %c10_150 = arith.constant 10 : index
    %c0_151 = arith.constant 0 : index
    %c0_152 = arith.constant 0 : index
    %254 = vector.load %arg8[%c10_150, %c0_151, %c0_152] : memref<12x1x16xf32, #tpu.memory_space<vmem>>, vector<1x1x16xf32>
    %255 = vector.shape_cast %254 : vector<1x1x16xf32> to vector<1x16xf32>
    %256 = vector.broadcast %255 : vector<1x16xf32> to vector<8x16xf32>
    %257 = arith.addf %253, %256 : vector<8x16xf32>
    %c11 = arith.constant 11 : index
    %c0_153 = arith.constant 0 : index
    %c0_154 = arith.constant 0 : index
    %258 = vector.load %arg7[%c11, %c0_153, %c0_154] : memref<12x32x16xf32, #tpu.memory_space<vmem>>, vector<1x32x16xf32>
    %259 = vector.shape_cast %258 : vector<1x32x16xf32> to vector<32x16xf32>
    %cst_155 = arith.constant dense<0.000000e+00> : vector<8x16xf32>
    %260 = tpu.matmul %199, %259, %cst_155 {dimension_numbers = #tpu.dot_dimension_numbers<[1], [0], [0], [1], [0, 0, 1, 1], [], []>} : vector<8x32xf32>, vector<32x16xf32>, vector<8x16xf32> -> vector<8x16xf32>
    %c11_156 = arith.constant 11 : index
    %c0_157 = arith.constant 0 : index
    %c0_158 = arith.constant 0 : index
    %261 = vector.load %arg8[%c11_156, %c0_157, %c0_158] : memref<12x1x16xf32, #tpu.memory_space<vmem>>, vector<1x1x16xf32>
    %262 = vector.shape_cast %261 : vector<1x1x16xf32> to vector<1x16xf32>
    %263 = vector.broadcast %262 : vector<1x16xf32> to vector<8x16xf32>
    %264 = arith.addf %260, %263 : vector<8x16xf32>
    %cst_159 = arith.constant dense<0.000000e+00> : vector<8x8xf32>
    %265 = tpu.matmul %250, %257, %cst_159 {dimension_numbers = #tpu.dot_dimension_numbers<[1], [1], [0], [0], [0, 0, 1, 0], [], []>} : vector<8x16xf32>, vector<8x16xf32>, vector<8x8xf32> -> vector<8x8xf32>
    %cst_160 = arith.constant 2.500000e-01 : f32
    %266 = vector.broadcast %cst_160 : f32 to vector<8x8xf32>
    %267 = arith.mulf %265, %266 : vector<8x8xf32>
    %268 = vector.broadcast %29 : vector<1x8xf32> to vector<8x8xf32>
    %269 = arith.addf %267, %268 : vector<8x8xf32>
    %cst_161 = arith.constant dense<0xFF800000> : vector<8xf32>
    %270 = vector.multi_reduction <maximumf>, %269, %cst_161 [1] : vector<8x8xf32> to vector<8xf32>
    %271 = vector.shape_cast %270 : vector<8xf32> to vector<8x1xf32>
    %272 = vector.broadcast %271 : vector<8x1xf32> to vector<8x8xf32>
    %273 = arith.subf %269, %272 : vector<8x8xf32>
    %274 = math.exp %273 : vector<8x8xf32>
    %cst_162 = arith.constant dense<0.000000e+00> : vector<8xf32>
    %275 = vector.multi_reduction <add>, %274, %cst_162 [1] : vector<8x8xf32> to vector<8xf32>
    %276 = vector.shape_cast %275 : vector<8xf32> to vector<8x1xf32>
    %277 = tpu.reciprocal %276 {approx = true} : vector<8x1xf32> -> vector<8x1xf32>
    %278 = vector.broadcast %277 : vector<8x1xf32> to vector<8x8xf32>
    %279 = arith.mulf %274, %278 : vector<8x8xf32>
    %cst_163 = arith.constant dense<0.000000e+00> : vector<8x16xf32>
    %280 = tpu.matmul %279, %264, %cst_163 {dimension_numbers = #tpu.dot_dimension_numbers<[1], [0], [0], [1], [0, 0, 1, 1], [], []>} : vector<8x8xf32>, vector<8x16xf32>, vector<8x16xf32> -> vector<8x16xf32>
    %c3_164 = arith.constant 3 : index
    %c0_165 = arith.constant 0 : index
    %c0_166 = arith.constant 0 : index
    %281 = vector.load %arg9[%c3_164, %c0_165, %c0_166] : memref<4x16x32xf32, #tpu.memory_space<vmem>>, vector<1x16x32xf32>
    %282 = vector.shape_cast %281 : vector<1x16x32xf32> to vector<16x32xf32>
    %cst_167 = arith.constant dense<0.000000e+00> : vector<8x32xf32>
    %283 = tpu.matmul %280, %282, %cst_167 {dimension_numbers = #tpu.dot_dimension_numbers<[1], [0], [0], [1], [0, 0, 1, 1], [], []>} : vector<8x16xf32>, vector<16x32xf32>, vector<8x32xf32> -> vector<8x32xf32>
    %284 = arith.addf %243, %283 : vector<8x32xf32>
    %285 = arith.addf %284, %199 : vector<8x32xf32>
    %c1_168 = arith.constant 1 : index
    %c0_169 = arith.constant 0 : index
    %c0_170 = arith.constant 0 : index
    %286 = vector.load %arg11[%c1_168, %c0_169, %c0_170] : memref<2x1x32xf32, #tpu.memory_space<vmem>>, vector<1x1x32xf32>
    %287 = vector.shape_cast %286 : vector<1x1x32xf32> to vector<1x32xf32>
    %c1_171 = arith.constant 1 : index
    %c0_172 = arith.constant 0 : index
    %c0_173 = arith.constant 0 : index
    %288 = vector.load %arg12[%c1_171, %c0_172, %c0_173] : memref<2x1x32xf32, #tpu.memory_space<vmem>>, vector<1x1x32xf32>
    %289 = vector.shape_cast %288 : vector<1x1x32xf32> to vector<1x32xf32>
    %cst_174 = arith.constant dense<0.000000e+00> : vector<8xf32>
    %290 = vector.multi_reduction <add>, %285, %cst_174 [1] : vector<8x32xf32> to vector<8xf32>
    %291 = vector.shape_cast %290 : vector<8xf32> to vector<8x1xf32>
    %cst_175 = arith.constant 3.200000e+01 : f32
    %292 = vector.broadcast %cst_175 : f32 to vector<8x1xf32>
    %293 = arith.divf %291, %292 : vector<8x1xf32>
    %294 = vector.broadcast %293 : vector<8x1xf32> to vector<8x32xf32>
    %295 = arith.subf %285, %294 : vector<8x32xf32>
    %296 = vector.broadcast %293 : vector<8x1xf32> to vector<8x32xf32>
    %297 = arith.subf %285, %296 : vector<8x32xf32>
    %298 = arith.mulf %295, %297 : vector<8x32xf32>
    %cst_176 = arith.constant dense<0.000000e+00> : vector<8xf32>
    %299 = vector.multi_reduction <add>, %298, %cst_176 [1] : vector<8x32xf32> to vector<8xf32>
    %300 = vector.shape_cast %299 : vector<8xf32> to vector<8x1xf32>
    %cst_177 = arith.constant 3.200000e+01 : f32
    %301 = vector.broadcast %cst_177 : f32 to vector<8x1xf32>
    %302 = arith.divf %300, %301 : vector<8x1xf32>
    %303 = vector.broadcast %293 : vector<8x1xf32> to vector<8x32xf32>
    %304 = arith.subf %285, %303 : vector<8x32xf32>
    %cst_178 = arith.constant 9.99999996E-13 : f32
    %305 = vector.broadcast %cst_178 : f32 to vector<8x1xf32>
    %306 = arith.addf %302, %305 : vector<8x1xf32>
    %307 = math.rsqrt %306 : vector<8x1xf32>
    %308 = vector.broadcast %307 : vector<8x1xf32> to vector<8x32xf32>
    %309 = arith.mulf %304, %308 : vector<8x32xf32>
    %310 = vector.broadcast %287 : vector<1x32xf32> to vector<8x32xf32>
    %311 = arith.mulf %309, %310 : vector<8x32xf32>
    %312 = vector.broadcast %289 : vector<1x32xf32> to vector<8x32xf32>
    %313 = arith.addf %311, %312 : vector<8x32xf32>
    %c1_179 = arith.constant 1 : index
    %c0_180 = arith.constant 0 : index
    %c0_181 = arith.constant 0 : index
    %314 = vector.load %arg13[%c1_179, %c0_180, %c0_181] : memref<2x32x64xf32, #tpu.memory_space<vmem>>, vector<1x32x64xf32>
    %315 = vector.shape_cast %314 : vector<1x32x64xf32> to vector<32x64xf32>
    %cst_182 = arith.constant dense<0.000000e+00> : vector<8x64xf32>
    %316 = tpu.matmul %313, %315, %cst_182 {dimension_numbers = #tpu.dot_dimension_numbers<[1], [0], [0], [1], [0, 0, 1, 1], [], []>} : vector<8x32xf32>, vector<32x64xf32>, vector<8x64xf32> -> vector<8x64xf32>
    %c1_183 = arith.constant 1 : index
    %c0_184 = arith.constant 0 : index
    %c0_185 = arith.constant 0 : index
    %317 = vector.load %arg14[%c1_183, %c0_184, %c0_185] : memref<2x1x64xf32, #tpu.memory_space<vmem>>, vector<1x1x64xf32>
    %318 = vector.shape_cast %317 : vector<1x1x64xf32> to vector<1x64xf32>
    %319 = vector.broadcast %318 : vector<1x64xf32> to vector<8x64xf32>
    %320 = arith.addf %316, %319 : vector<8x64xf32>
    %cst_186 = arith.constant 5.000000e-01 : f32
    %321 = vector.broadcast %cst_186 : f32 to vector<8x64xf32>
    %322 = arith.mulf %321, %320 : vector<8x64xf32>
    %cst_187 = arith.constant 4.471500e-02 : f32
    %323 = vector.broadcast %cst_187 : f32 to vector<8x64xf32>
    %324 = arith.mulf %323, %320 : vector<8x64xf32>
    %325 = arith.mulf %324, %320 : vector<8x64xf32>
    %326 = arith.mulf %325, %320 : vector<8x64xf32>
    %327 = arith.addf %320, %326 : vector<8x64xf32>
    %cst_188 = arith.constant 0.797884583 : f32
    %328 = vector.broadcast %cst_188 : f32 to vector<8x64xf32>
    %329 = arith.mulf %328, %327 : vector<8x64xf32>
    %330 = math.tanh %329 : vector<8x64xf32>
    %cst_189 = arith.constant 1.000000e+00 : f32
    %331 = vector.broadcast %cst_189 : f32 to vector<8x64xf32>
    %332 = arith.addf %331, %330 : vector<8x64xf32>
    %333 = arith.mulf %322, %332 : vector<8x64xf32>
    %c1_190 = arith.constant 1 : index
    %c0_191 = arith.constant 0 : index
    %c0_192 = arith.constant 0 : index
    %334 = vector.load %arg15[%c1_190, %c0_191, %c0_192] : memref<2x64x32xf32, #tpu.memory_space<vmem>>, vector<1x64x32xf32>
    %335 = vector.shape_cast %334 : vector<1x64x32xf32> to vector<64x32xf32>
    %cst_193 = arith.constant dense<0.000000e+00> : vector<8x32xf32>
    %336 = tpu.matmul %333, %335, %cst_193 {dimension_numbers = #tpu.dot_dimension_numbers<[1], [0], [0], [1], [0, 0, 1, 1], [], []>} : vector<8x64xf32>, vector<64x32xf32>, vector<8x32xf32> -> vector<8x32xf32>
    %c1_194 = arith.constant 1 : index
    %c0_195 = arith.constant 0 : index
    %c0_196 = arith.constant 0 : index
    %337 = vector.load %arg16[%c1_194, %c0_195, %c0_196] : memref<2x1x32xf32, #tpu.memory_space<vmem>>, vector<1x1x32xf32>
    %338 = vector.shape_cast %337 : vector<1x1x32xf32> to vector<1x32xf32>
    %339 = vector.broadcast %338 : vector<1x32xf32> to vector<8x32xf32>
    %340 = arith.addf %336, %339 : vector<8x32xf32>
    %341 = arith.addf %340, %313 : vector<8x32xf32>
    %c1_197 = arith.constant 1 : index
    %c0_198 = arith.constant 0 : index
    %c0_199 = arith.constant 0 : index
    %342 = vector.load %arg17[%c1_197, %c0_198, %c0_199] : memref<2x1x32xf32, #tpu.memory_space<vmem>>, vector<1x1x32xf32>
    %343 = vector.shape_cast %342 : vector<1x1x32xf32> to vector<1x32xf32>
    %c1_200 = arith.constant 1 : index
    %c0_201 = arith.constant 0 : index
    %c0_202 = arith.constant 0 : index
    %344 = vector.load %arg18[%c1_200, %c0_201, %c0_202] : memref<2x1x32xf32, #tpu.memory_space<vmem>>, vector<1x1x32xf32>
    %345 = vector.shape_cast %344 : vector<1x1x32xf32> to vector<1x32xf32>
    %cst_203 = arith.constant dense<0.000000e+00> : vector<8xf32>
    %346 = vector.multi_reduction <add>, %341, %cst_203 [1] : vector<8x32xf32> to vector<8xf32>
    %347 = vector.shape_cast %346 : vector<8xf32> to vector<8x1xf32>
    %cst_204 = arith.constant 3.200000e+01 : f32
    %348 = vector.broadcast %cst_204 : f32 to vector<8x1xf32>
    %349 = arith.divf %347, %348 : vector<8x1xf32>
    %350 = vector.broadcast %349 : vector<8x1xf32> to vector<8x32xf32>
    %351 = arith.subf %341, %350 : vector<8x32xf32>
    %352 = vector.broadcast %349 : vector<8x1xf32> to vector<8x32xf32>
    %353 = arith.subf %341, %352 : vector<8x32xf32>
    %354 = arith.mulf %351, %353 : vector<8x32xf32>
    %cst_205 = arith.constant dense<0.000000e+00> : vector<8xf32>
    %355 = vector.multi_reduction <add>, %354, %cst_205 [1] : vector<8x32xf32> to vector<8xf32>
    %356 = vector.shape_cast %355 : vector<8xf32> to vector<8x1xf32>
    %cst_206 = arith.constant 3.200000e+01 : f32
    %357 = vector.broadcast %cst_206 : f32 to vector<8x1xf32>
    %358 = arith.divf %356, %357 : vector<8x1xf32>
    %359 = vector.broadcast %349 : vector<8x1xf32> to vector<8x32xf32>
    %360 = arith.subf %341, %359 : vector<8x32xf32>
    %cst_207 = arith.constant 9.99999996E-13 : f32
    %361 = vector.broadcast %cst_207 : f32 to vector<8x1xf32>
    %362 = arith.addf %358, %361 : vector<8x1xf32>
    %363 = math.rsqrt %362 : vector<8x1xf32>
    %364 = vector.broadcast %363 : vector<8x1xf32> to vector<8x32xf32>
    %365 = arith.mulf %360, %364 : vector<8x32xf32>
    %366 = vector.broadcast %343 : vector<1x32xf32> to vector<8x32xf32>
    %367 = arith.mulf %365, %366 : vector<8x32xf32>
    %368 = vector.broadcast %345 : vector<1x32xf32> to vector<8x32xf32>
    %369 = arith.addf %367, %368 : vector<8x32xf32>
    %c0_208 = arith.constant 0 : index
    %c0_209 = arith.constant 0 : index
    %370 = vector.load %arg19[%c0_208, %c0_209] : memref<32x7xf32, #tpu.memory_space<vmem>>, vector<32x7xf32>
    %cst_210 = arith.constant dense<0.000000e+00> : vector<8x7xf32>
    %371 = tpu.matmul %369, %370, %cst_210 {dimension_numbers = #tpu.dot_dimension_numbers<[1], [0], [0], [1], [0, 0, 1, 1], [], []>} : vector<8x32xf32>, vector<32x7xf32>, vector<8x7xf32> -> vector<8x7xf32>
    %c0_211 = arith.constant 0 : index
    %c0_212 = arith.constant 0 : index
    %372 = vector.load %arg20[%c0_211, %c0_212] : memref<1x7xf32, #tpu.memory_space<vmem>>, vector<1x7xf32>
    %373 = vector.broadcast %372 : vector<1x7xf32> to vector<8x7xf32>
    %374 = arith.addf %371, %373 : vector<8x7xf32>
    %c0_213 = arith.constant 0 : index
    %c0_214 = arith.constant 0 : index
    %375 = vector.load %arg21[%c0_213, %c0_214] : memref<7x7xf32, #tpu.memory_space<vmem>>, vector<7x7xf32>
    %c0_215 = arith.constant 0 : index
    %c0_216 = arith.constant 0 : index
    %376 = vector.load %arg22[%c0_215, %c0_216] : memref<1x7xf32, #tpu.memory_space<vmem>>, vector<1x7xf32>
    %c0_217 = arith.constant 0 : index
    %c0_218 = arith.constant 0 : index
    %377 = vector.load %arg23[%c0_217, %c0_218] : memref<1x7xf32, #tpu.memory_space<vmem>>, vector<1x7xf32>
    %c0_219 = arith.constant 0 : index
    %c0_220 = arith.constant 0 : index
    %c0_221 = arith.constant 0 : index
    %378 = vector.load %arg3[%c0_219, %c0_220, %c0_221] : memref<1x8x7xf32, #tpu.memory_space<vmem>>, vector<1x8x7xf32>
    %379 = vector.shape_cast %378 : vector<1x8x7xf32> to vector<8x7xf32>
    %c0_222 = arith.constant 0 : index
    %c0_223 = arith.constant 0 : index
    %c0_224 = arith.constant 0 : index
    %380 = vector.load %arg4[%c0_222, %c0_223, %c0_224] : memref<1x8x1xf32, #tpu.memory_space<vmem>>, vector<1x8x1xf32>
    %381 = vector.shape_cast %380 : vector<1x8x1xf32> to vector<8x1xf32>
    %382 = vector.extract_strided_slice %381 {offsets = [1, 0], sizes = [7, 1], strides = [1, 1]} : vector<8x1xf32> to vector<7x1xf32>
    %383 = arith.mulf %374, %379 : vector<8x7xf32>
    %cst_225 = arith.constant dense<0.000000e+00> : vector<8xf32>
    %384 = vector.multi_reduction <add>, %383, %cst_225 [1] : vector<8x7xf32> to vector<8xf32>
    %385 = vector.shape_cast %384 : vector<8xf32> to vector<8x1xf32>
    %386 = vector.extract_strided_slice %385 {offsets = [0, 0], sizes = [1, 1], strides = [1, 1]} : vector<8x1xf32> to vector<1x1xf32>
    %387 = vector.extract_strided_slice %385 {offsets = [1, 0], sizes = [7, 1], strides = [1, 1]} : vector<8x1xf32> to vector<7x1xf32>
    %388 = arith.mulf %382, %387 : vector<7x1xf32>
    %cst_226 = arith.constant dense<0.000000e+00> : vector<1xf32>
    %389 = vector.multi_reduction <add>, %388, %cst_226 [0] : vector<7x1xf32> to vector<1xf32>
    %390 = vector.shape_cast %389 : vector<1xf32> to vector<1x1xf32>
    %391 = arith.addf %386, %390 : vector<1x1xf32>
    %392 = vector.extract_strided_slice %379 {offsets = [0, 0], sizes = [7, 7], strides = [1, 1]} : vector<8x7xf32> to vector<7x7xf32>
    %cst_227 = arith.constant dense<0.000000e+00> : vector<7x7xf32>
    %393 = tpu.matmul %392, %375, %cst_227 {dimension_numbers = #tpu.dot_dimension_numbers<[1], [0], [0], [1], [0, 0, 1, 1], [], []>} : vector<7x7xf32>, vector<7x7xf32>, vector<7x7xf32> -> vector<7x7xf32>
    %394 = vector.extract_strided_slice %379 {offsets = [1, 0], sizes = [7, 7], strides = [1, 1]} : vector<8x7xf32> to vector<7x7xf32>
    %395 = arith.mulf %393, %394 : vector<7x7xf32>
    %cst_228 = arith.constant dense<0.000000e+00> : vector<7xf32>
    %396 = vector.multi_reduction <add>, %395, %cst_228 [1] : vector<7x7xf32> to vector<7xf32>
    %397 = vector.shape_cast %396 : vector<7xf32> to vector<7x1xf32>
    %398 = arith.mulf %382, %397 : vector<7x1xf32>
    %cst_229 = arith.constant dense<0.000000e+00> : vector<1xf32>
    %399 = vector.multi_reduction <add>, %398, %cst_229 [0] : vector<7x1xf32> to vector<1xf32>
    %400 = vector.shape_cast %399 : vector<1xf32> to vector<1x1xf32>
    %401 = vector.extract_strided_slice %379 {offsets = [0, 0], sizes = [1, 7], strides = [1, 1]} : vector<8x7xf32> to vector<1x7xf32>
    %402 = arith.mulf %376, %401 : vector<1x7xf32>
    %cst_230 = arith.constant dense<0.000000e+00> : vector<1xf32>
    %403 = vector.multi_reduction <add>, %402, %cst_230 [1] : vector<1x7xf32> to vector<1xf32>
    %404 = vector.shape_cast %403 : vector<1xf32> to vector<1x1xf32>
    %405 = vector.broadcast %377 : vector<1x7xf32> to vector<8x7xf32>
    %406 = arith.mulf %405, %379 : vector<8x7xf32>
    %cst_231 = arith.constant dense<0.000000e+00> : vector<8xf32>
    %407 = vector.multi_reduction <add>, %406, %cst_231 [1] : vector<8x7xf32> to vector<8xf32>
    %408 = vector.shape_cast %407 : vector<8xf32> to vector<8x1xf32>
    %409 = vector.extract_strided_slice %408 {offsets = [0, 0], sizes = [1, 1], strides = [1, 1]} : vector<8x1xf32> to vector<1x1xf32>
    %410 = vector.extract_strided_slice %408 {offsets = [1, 0], sizes = [7, 1], strides = [1, 1]} : vector<8x1xf32> to vector<7x1xf32>
    %411 = vector.extract_strided_slice %408 {offsets = [0, 0], sizes = [7, 1], strides = [1, 1]} : vector<8x1xf32> to vector<7x1xf32>
    %412 = arith.subf %410, %411 : vector<7x1xf32>
    %413 = arith.mulf %382, %412 : vector<7x1xf32>
    %cst_232 = arith.constant dense<0.000000e+00> : vector<1xf32>
    %414 = vector.multi_reduction <add>, %413, %cst_232 [0] : vector<7x1xf32> to vector<1xf32>
    %415 = vector.shape_cast %414 : vector<1xf32> to vector<1x1xf32>
    %416 = arith.addf %409, %415 : vector<1x1xf32>
    %417 = arith.addf %404, %391 : vector<1x1xf32>
    %418 = arith.addf %417, %400 : vector<1x1xf32>
    %419 = arith.addf %418, %416 : vector<1x1xf32>
    %420 = vector.extract_strided_slice %374 {offsets = [0, 0], sizes = [1, 7], strides = [1, 1]} : vector<8x7xf32> to vector<1x7xf32>
    %421 = arith.addf %376, %420 : vector<1x7xf32>
    %422 = vector.extract_strided_slice %374 {offsets = [1, 0], sizes = [1, 7], strides = [1, 1]} : vector<8x7xf32> to vector<1x7xf32>
    %423 = vector.extract_strided_slice %381 {offsets = [1, 0], sizes = [1, 1], strides = [1, 1]} : vector<8x1xf32> to vector<1x1xf32>
    %424 = vector.shape_cast %421 : vector<1x7xf32> to vector<1x7x1xf32>
    %425 = vector.shape_cast %375 : vector<7x7xf32> to vector<1x7x7xf32>
    %426 = vector.broadcast %424 : vector<1x7x1xf32> to vector<1x7x7xf32>
    %427 = arith.addf %426, %425 : vector<1x7x7xf32>
    %428 = vector.shape_cast %422 : vector<1x7xf32> to vector<1x1x7xf32>
    %429 = vector.broadcast %428 : vector<1x1x7xf32> to vector<1x7x7xf32>
    %430 = arith.addf %427, %429 : vector<1x7x7xf32>
    %cst_233 = arith.constant dense<0xFF800000> : vector<1x7xf32>
    %431 = vector.multi_reduction <maximumf>, %430, %cst_233 [1] : vector<1x7x7xf32> to vector<1x7xf32>
    %432 = vector.shape_cast %431 : vector<1x7xf32> to vector<1x1x7xf32>
    %433 = vector.broadcast %432 : vector<1x1x7xf32> to vector<1x7x7xf32>
    %434 = arith.subf %430, %433 : vector<1x7x7xf32>
    %435 = math.exp %434 : vector<1x7x7xf32>
    %cst_234 = arith.constant dense<0.000000e+00> : vector<1x7xf32>
    %436 = vector.multi_reduction <add>, %435, %cst_234 [1] : vector<1x7x7xf32> to vector<1x7xf32>
    %437 = math.log %436 : vector<1x7xf32>
    %438 = vector.shape_cast %432 : vector<1x1x7xf32> to vector<1x7xf32>
    %439 = arith.addf %437, %438 : vector<1x7xf32>
    %cst_235 = arith.constant 0.000000e+00 : f32
    %440 = vector.broadcast %cst_235 : f32 to vector<1x1xf32>
    %441 = arith.cmpf ogt, %423, %440 : vector<1x1xf32>
    %442 = vector.shape_cast %441 : vector<1x1xi1> to vector<1x1xi1>
    %443 = vector.broadcast %442 : vector<1x1xi1> to vector<1x7xi1>
    %444 = arith.select %443, %439, %421 : vector<1x7xi1>, vector<1x7xf32>
    %445 = vector.extract_strided_slice %374 {offsets = [2, 0], sizes = [1, 7], strides = [1, 1]} : vector<8x7xf32> to vector<1x7xf32>
    %446 = vector.extract_strided_slice %381 {offsets = [2, 0], sizes = [1, 1], strides = [1, 1]} : vector<8x1xf32> to vector<1x1xf32>
    %447 = vector.shape_cast %444 : vector<1x7xf32> to vector<1x7x1xf32>
    %448 = vector.shape_cast %375 : vector<7x7xf32> to vector<1x7x7xf32>
    %449 = vector.broadcast %447 : vector<1x7x1xf32> to vector<1x7x7xf32>
    %450 = arith.addf %449, %448 : vector<1x7x7xf32>
    %451 = vector.shape_cast %445 : vector<1x7xf32> to vector<1x1x7xf32>
    %452 = vector.broadcast %451 : vector<1x1x7xf32> to vector<1x7x7xf32>
    %453 = arith.addf %450, %452 : vector<1x7x7xf32>
    %cst_236 = arith.constant dense<0xFF800000> : vector<1x7xf32>
    %454 = vector.multi_reduction <maximumf>, %453, %cst_236 [1] : vector<1x7x7xf32> to vector<1x7xf32>
    %455 = vector.shape_cast %454 : vector<1x7xf32> to vector<1x1x7xf32>
    %456 = vector.broadcast %455 : vector<1x1x7xf32> to vector<1x7x7xf32>
    %457 = arith.subf %453, %456 : vector<1x7x7xf32>
    %458 = math.exp %457 : vector<1x7x7xf32>
    %cst_237 = arith.constant dense<0.000000e+00> : vector<1x7xf32>
    %459 = vector.multi_reduction <add>, %458, %cst_237 [1] : vector<1x7x7xf32> to vector<1x7xf32>
    %460 = math.log %459 : vector<1x7xf32>
    %461 = vector.shape_cast %455 : vector<1x1x7xf32> to vector<1x7xf32>
    %462 = arith.addf %460, %461 : vector<1x7xf32>
    %cst_238 = arith.constant 0.000000e+00 : f32
    %463 = vector.broadcast %cst_238 : f32 to vector<1x1xf32>
    %464 = arith.cmpf ogt, %446, %463 : vector<1x1xf32>
    %465 = vector.shape_cast %464 : vector<1x1xi1> to vector<1x1xi1>
    %466 = vector.broadcast %465 : vector<1x1xi1> to vector<1x7xi1>
    %467 = arith.select %466, %462, %444 : vector<1x7xi1>, vector<1x7xf32>
    %468 = vector.extract_strided_slice %374 {offsets = [3, 0], sizes = [1, 7], strides = [1, 1]} : vector<8x7xf32> to vector<1x7xf32>
    %469 = vector.extract_strided_slice %381 {offsets = [3, 0], sizes = [1, 1], strides = [1, 1]} : vector<8x1xf32> to vector<1x1xf32>
    %470 = vector.shape_cast %467 : vector<1x7xf32> to vector<1x7x1xf32>
    %471 = vector.shape_cast %375 : vector<7x7xf32> to vector<1x7x7xf32>
    %472 = vector.broadcast %470 : vector<1x7x1xf32> to vector<1x7x7xf32>
    %473 = arith.addf %472, %471 : vector<1x7x7xf32>
    %474 = vector.shape_cast %468 : vector<1x7xf32> to vector<1x1x7xf32>
    %475 = vector.broadcast %474 : vector<1x1x7xf32> to vector<1x7x7xf32>
    %476 = arith.addf %473, %475 : vector<1x7x7xf32>
    %cst_239 = arith.constant dense<0xFF800000> : vector<1x7xf32>
    %477 = vector.multi_reduction <maximumf>, %476, %cst_239 [1] : vector<1x7x7xf32> to vector<1x7xf32>
    %478 = vector.shape_cast %477 : vector<1x7xf32> to vector<1x1x7xf32>
    %479 = vector.broadcast %478 : vector<1x1x7xf32> to vector<1x7x7xf32>
    %480 = arith.subf %476, %479 : vector<1x7x7xf32>
    %481 = math.exp %480 : vector<1x7x7xf32>
    %cst_240 = arith.constant dense<0.000000e+00> : vector<1x7xf32>
    %482 = vector.multi_reduction <add>, %481, %cst_240 [1] : vector<1x7x7xf32> to vector<1x7xf32>
    %483 = math.log %482 : vector<1x7xf32>
    %484 = vector.shape_cast %478 : vector<1x1x7xf32> to vector<1x7xf32>
    %485 = arith.addf %483, %484 : vector<1x7xf32>
    %cst_241 = arith.constant 0.000000e+00 : f32
    %486 = vector.broadcast %cst_241 : f32 to vector<1x1xf32>
    %487 = arith.cmpf ogt, %469, %486 : vector<1x1xf32>
    %488 = vector.shape_cast %487 : vector<1x1xi1> to vector<1x1xi1>
    %489 = vector.broadcast %488 : vector<1x1xi1> to vector<1x7xi1>
    %490 = arith.select %489, %485, %467 : vector<1x7xi1>, vector<1x7xf32>
    %491 = vector.extract_strided_slice %374 {offsets = [4, 0], sizes = [1, 7], strides = [1, 1]} : vector<8x7xf32> to vector<1x7xf32>
    %492 = vector.extract_strided_slice %381 {offsets = [4, 0], sizes = [1, 1], strides = [1, 1]} : vector<8x1xf32> to vector<1x1xf32>
    %493 = vector.shape_cast %490 : vector<1x7xf32> to vector<1x7x1xf32>
    %494 = vector.shape_cast %375 : vector<7x7xf32> to vector<1x7x7xf32>
    %495 = vector.broadcast %493 : vector<1x7x1xf32> to vector<1x7x7xf32>
    %496 = arith.addf %495, %494 : vector<1x7x7xf32>
    %497 = vector.shape_cast %491 : vector<1x7xf32> to vector<1x1x7xf32>
    %498 = vector.broadcast %497 : vector<1x1x7xf32> to vector<1x7x7xf32>
    %499 = arith.addf %496, %498 : vector<1x7x7xf32>
    %cst_242 = arith.constant dense<0xFF800000> : vector<1x7xf32>
    %500 = vector.multi_reduction <maximumf>, %499, %cst_242 [1] : vector<1x7x7xf32> to vector<1x7xf32>
    %501 = vector.shape_cast %500 : vector<1x7xf32> to vector<1x1x7xf32>
    %502 = vector.broadcast %501 : vector<1x1x7xf32> to vector<1x7x7xf32>
    %503 = arith.subf %499, %502 : vector<1x7x7xf32>
    %504 = math.exp %503 : vector<1x7x7xf32>
    %cst_243 = arith.constant dense<0.000000e+00> : vector<1x7xf32>
    %505 = vector.multi_reduction <add>, %504, %cst_243 [1] : vector<1x7x7xf32> to vector<1x7xf32>
    %506 = math.log %505 : vector<1x7xf32>
    %507 = vector.shape_cast %501 : vector<1x1x7xf32> to vector<1x7xf32>
    %508 = arith.addf %506, %507 : vector<1x7xf32>
    %cst_244 = arith.constant 0.000000e+00 : f32
    %509 = vector.broadcast %cst_244 : f32 to vector<1x1xf32>
    %510 = arith.cmpf ogt, %492, %509 : vector<1x1xf32>
    %511 = vector.shape_cast %510 : vector<1x1xi1> to vector<1x1xi1>
    %512 = vector.broadcast %511 : vector<1x1xi1> to vector<1x7xi1>
    %513 = arith.select %512, %508, %490 : vector<1x7xi1>, vector<1x7xf32>
    %514 = vector.extract_strided_slice %374 {offsets = [5, 0], sizes = [1, 7], strides = [1, 1]} : vector<8x7xf32> to vector<1x7xf32>
    %515 = vector.extract_strided_slice %381 {offsets = [5, 0], sizes = [1, 1], strides = [1, 1]} : vector<8x1xf32> to vector<1x1xf32>
    %516 = vector.shape_cast %513 : vector<1x7xf32> to vector<1x7x1xf32>
    %517 = vector.shape_cast %375 : vector<7x7xf32> to vector<1x7x7xf32>
    %518 = vector.broadcast %516 : vector<1x7x1xf32> to vector<1x7x7xf32>
    %519 = arith.addf %518, %517 : vector<1x7x7xf32>
    %520 = vector.shape_cast %514 : vector<1x7xf32> to vector<1x1x7xf32>
    %521 = vector.broadcast %520 : vector<1x1x7xf32> to vector<1x7x7xf32>
    %522 = arith.addf %519, %521 : vector<1x7x7xf32>
    %cst_245 = arith.constant dense<0xFF800000> : vector<1x7xf32>
    %523 = vector.multi_reduction <maximumf>, %522, %cst_245 [1] : vector<1x7x7xf32> to vector<1x7xf32>
    %524 = vector.shape_cast %523 : vector<1x7xf32> to vector<1x1x7xf32>
    %525 = vector.broadcast %524 : vector<1x1x7xf32> to vector<1x7x7xf32>
    %526 = arith.subf %522, %525 : vector<1x7x7xf32>
    %527 = math.exp %526 : vector<1x7x7xf32>
    %cst_246 = arith.constant dense<0.000000e+00> : vector<1x7xf32>
    %528 = vector.multi_reduction <add>, %527, %cst_246 [1] : vector<1x7x7xf32> to vector<1x7xf32>
    %529 = math.log %528 : vector<1x7xf32>
    %530 = vector.shape_cast %524 : vector<1x1x7xf32> to vector<1x7xf32>
    %531 = arith.addf %529, %530 : vector<1x7xf32>
    %cst_247 = arith.constant 0.000000e+00 : f32
    %532 = vector.broadcast %cst_247 : f32 to vector<1x1xf32>
    %533 = arith.cmpf ogt, %515, %532 : vector<1x1xf32>
    %534 = vector.shape_cast %533 : vector<1x1xi1> to vector<1x1xi1>
    %535 = vector.broadcast %534 : vector<1x1xi1> to vector<1x7xi1>
    %536 = arith.select %535, %531, %513 : vector<1x7xi1>, vector<1x7xf32>
    %537 = vector.extract_strided_slice %374 {offsets = [6, 0], sizes = [1, 7], strides = [1, 1]} : vector<8x7xf32> to vector<1x7xf32>
    %538 = vector.extract_strided_slice %381 {offsets = [6, 0], sizes = [1, 1], strides = [1, 1]} : vector<8x1xf32> to vector<1x1xf32>
    %539 = vector.shape_cast %536 : vector<1x7xf32> to vector<1x7x1xf32>
    %540 = vector.shape_cast %375 : vector<7x7xf32> to vector<1x7x7xf32>
    %541 = vector.broadcast %539 : vector<1x7x1xf32> to vector<1x7x7xf32>
    %542 = arith.addf %541, %540 : vector<1x7x7xf32>
    %543 = vector.shape_cast %537 : vector<1x7xf32> to vector<1x1x7xf32>
    %544 = vector.broadcast %543 : vector<1x1x7xf32> to vector<1x7x7xf32>
    %545 = arith.addf %542, %544 : vector<1x7x7xf32>
    %cst_248 = arith.constant dense<0xFF800000> : vector<1x7xf32>
    %546 = vector.multi_reduction <maximumf>, %545, %cst_248 [1] : vector<1x7x7xf32> to vector<1x7xf32>
    %547 = vector.shape_cast %546 : vector<1x7xf32> to vector<1x1x7xf32>
    %548 = vector.broadcast %547 : vector<1x1x7xf32> to vector<1x7x7xf32>
    %549 = arith.subf %545, %548 : vector<1x7x7xf32>
    %550 = math.exp %549 : vector<1x7x7xf32>
    %cst_249 = arith.constant dense<0.000000e+00> : vector<1x7xf32>
    %551 = vector.multi_reduction <add>, %550, %cst_249 [1] : vector<1x7x7xf32> to vector<1x7xf32>
    %552 = math.log %551 : vector<1x7xf32>
    %553 = vector.shape_cast %547 : vector<1x1x7xf32> to vector<1x7xf32>
    %554 = arith.addf %552, %553 : vector<1x7xf32>
    %cst_250 = arith.constant 0.000000e+00 : f32
    %555 = vector.broadcast %cst_250 : f32 to vector<1x1xf32>
    %556 = arith.cmpf ogt, %538, %555 : vector<1x1xf32>
    %557 = vector.shape_cast %556 : vector<1x1xi1> to vector<1x1xi1>
    %558 = vector.broadcast %557 : vector<1x1xi1> to vector<1x7xi1>
    %559 = arith.select %558, %554, %536 : vector<1x7xi1>, vector<1x7xf32>
    %560 = vector.extract_strided_slice %374 {offsets = [7, 0], sizes = [1, 7], strides = [1, 1]} : vector<8x7xf32> to vector<1x7xf32>
    %561 = vector.extract_strided_slice %381 {offsets = [7, 0], sizes = [1, 1], strides = [1, 1]} : vector<8x1xf32> to vector<1x1xf32>
    %562 = vector.shape_cast %559 : vector<1x7xf32> to vector<1x7x1xf32>
    %563 = vector.shape_cast %375 : vector<7x7xf32> to vector<1x7x7xf32>
    %564 = vector.broadcast %562 : vector<1x7x1xf32> to vector<1x7x7xf32>
    %565 = arith.addf %564, %563 : vector<1x7x7xf32>
    %566 = vector.shape_cast %560 : vector<1x7xf32> to vector<1x1x7xf32>
    %567 = vector.broadcast %566 : vector<1x1x7xf32> to vector<1x7x7xf32>
    %568 = arith.addf %565, %567 : vector<1x7x7xf32>
    %cst_251 = arith.constant dense<0xFF800000> : vector<1x7xf32>
    %569 = vector.multi_reduction <maximumf>, %568, %cst_251 [1] : vector<1x7x7xf32> to vector<1x7xf32>
    %570 = vector.shape_cast %569 : vector<1x7xf32> to vector<1x1x7xf32>
    %571 = vector.broadcast %570 : vector<1x1x7xf32> to vector<1x7x7xf32>
    %572 = arith.subf %568, %571 : vector<1x7x7xf32>
    %573 = math.exp %572 : vector<1x7x7xf32>
    %cst_252 = arith.constant dense<0.000000e+00> : vector<1x7xf32>
    %574 = vector.multi_reduction <add>, %573, %cst_252 [1] : vector<1x7x7xf32> to vector<1x7xf32>
    %575 = math.log %574 : vector<1x7xf32>
    %576 = vector.shape_cast %570 : vector<1x1x7xf32> to vector<1x7xf32>
    %577 = arith.addf %575, %576 : vector<1x7xf32>
    %cst_253 = arith.constant 0.000000e+00 : f32
    %578 = vector.broadcast %cst_253 : f32 to vector<1x1xf32>
    %579 = arith.cmpf ogt, %561, %578 : vector<1x1xf32>
    %580 = vector.shape_cast %579 : vector<1x1xi1> to vector<1x1xi1>
    %581 = vector.broadcast %580 : vector<1x1xi1> to vector<1x7xi1>
    %582 = arith.select %581, %577, %559 : vector<1x7xi1>, vector<1x7xf32>
    %583 = arith.addf %582, %377 : vector<1x7xf32>
    %cst_254 = arith.constant dense<0xFF800000> : vector<1xf32>
    %584 = vector.multi_reduction <maximumf>, %583, %cst_254 [1] : vector<1x7xf32> to vector<1xf32>
    %585 = vector.shape_cast %584 : vector<1xf32> to vector<1x1xf32>
    %586 = vector.broadcast %585 : vector<1x1xf32> to vector<1x7xf32>
    %587 = arith.subf %583, %586 : vector<1x7xf32>
    %588 = math.exp %587 : vector<1x7xf32>
    %cst_255 = arith.constant dense<0.000000e+00> : vector<1xf32>
    %589 = vector.multi_reduction <add>, %588, %cst_255 [1] : vector<1x7xf32> to vector<1xf32>
    %590 = vector.shape_cast %589 : vector<1xf32> to vector<1x1xf32>
    %591 = math.log %590 : vector<1x1xf32>
    %592 = arith.addf %591, %585 : vector<1x1xf32>
    %593 = arith.subf %592, %419 : vector<1x1xf32>
    %c0_256 = arith.constant 0 : index
    %c0_257 = arith.constant 0 : index
    %c0_258 = arith.constant 0 : index
    %594 = vector.load %arg24[%c0_256, %c0_257, %c0_258] : memref<1x1x1xf32, #tpu.memory_space<vmem>>, vector<1x1x1xf32>
    %595 = vector.shape_cast %594 : vector<1x1x1xf32> to vector<1x1xf32>
    %596 = vector.shape_cast %593 : vector<1x1xf32> to vector<1x1x1xf32>
    tpu.vector_store %arg24[%c0_256, %c0_257, %c0_258], %596 {strides = array<i32>} : memref<1x1x1xf32, #tpu.memory_space<vmem>>, vector<1x1x1xf32>,
    return
  }
  func.func @transform_0(%arg0: i32) -> (i32, i32, i32) {
    %c0_i32 = arith.constant 0 : i32
    %c0_i32_0 = arith.constant 0 : i32
    %c0_i32_1 = arith.constant 0 : i32
    return %arg0, %c0_i32, %c0_i32_0 : i32, i32, i32
  }
  func.func @transform_1(%arg0: i32) -> (i32, i32, i32) {
    %c0_i32 = arith.constant 0 : i32
    %c0_i32_0 = arith.constant 0 : i32
    %c0_i32_1 = arith.constant 0 : i32
    return %arg0, %c0_i32, %c0_i32_0 : i32, i32, i32
  }
  func.func @transform_2(%arg0: i32) -> (i32, i32, i32) {
    %c0_i32 = arith.constant 0 : i32
    %c0_i32_0 = arith.constant 0 : i32
    %c0_i32_1 = arith.constant 0 : i32
    return %arg0, %c0_i32, %c0_i32_0 : i32, i32, i32
  }
  func.func @transform_3(%arg0: i32) -> (i32, i32, i32) {
    %c0_i32 = arith.constant 0 : i32
    %c0_i32_0 = arith.constant 0 : i32
    %c0_i32_1 = arith.constant 0 : i32
    return %arg0, %c0_i32, %c0_i32_0 : i32, i32, i32
  }
  func.func @transform_4(%arg0: i32) -> (i32, i32) {
    %c0_i32 = arith.constant 0 : i32
    %c0_i32_0 = arith.constant 0 : i32
    %c0_i32_1 = arith.constant 0 : i32
    return %c0_i32, %c0_i32_0 : i32, i32
  }
  func.func @transform_5(%arg0: i32) -> (i32, i32) {
    %c0_i32 = arith.constant 0 : i32
    %c0_i32_0 = arith.constant 0 : i32
    %c0_i32_1 = arith.constant 0 : i32
    return %c0_i32, %c0_i32_0 : i32, i32
  }
  func.func @transform_6(%arg0: i32) -> (i32, i32, i32) {
    %c0_i32 = arith.constant 0 : i32
    %c0_i32_0 = arith.constant 0 : i32
    %c0_i32_1 = arith.constant 0 : i32
    %c0_i32_2 = arith.constant 0 : i32
    return %c0_i32, %c0_i32_0, %c0_i32_1 : i32, i32, i32
  }
  func.func @transform_7(%arg0: i32) -> (i32, i32, i32) {
    %c0_i32 = arith.constant 0 : i32
    %c0_i32_0 = arith.constant 0 : i32
    %c0_i32_1 = arith.constant 0 : i32
    %c0_i32_2 = arith.constant 0 : i32
    return %c0_i32, %c0_i32_0, %c0_i32_1 : i32, i32, i32
  }
  func.func @transform_8(%arg0: i32) -> (i32, i32, i32) {
    %c0_i32 = arith.constant 0 : i32
    %c0_i32_0 = arith.constant 0 : i32
    %c0_i32_1 = arith.constant 0 : i32
    %c0_i32_2 = arith.constant 0 : i32
    return %c0_i32, %c0_i32_0, %c0_i32_1 : i32, i32, i32
  }
  func.func @transform_9(%arg0: i32) -> (i32, i32, i32) {
    %c0_i32 = arith.constant 0 : i32
    %c0_i32_0 = arith.constant 0 : i32
    %c0_i32_1 = arith.constant 0 : i32
    %c0_i32_2 = arith.constant 0 : i32
    return %c0_i32, %c0_i32_0, %c0_i32_1 : i32, i32, i32
  }
  func.func @transform_10(%arg0: i32) -> (i32, i32, i32) {
    %c0_i32 = arith.constant 0 : i32
    %c0_i32_0 = arith.constant 0 : i32
    %c0_i32_1 = arith.constant 0 : i32
    %c0_i32_2 = arith.constant 0 : i32
    return %c0_i32, %c0_i32_0, %c0_i32_1 : i32, i32, i32
  }
  func.func @transform_11(%arg0: i32) -> (i32, i32, i32) {
    %c0_i32 = arith.constant 0 : i32
    %c0_i32_0 = arith.constant 0 : i32
    %c0_i32_1 = arith.constant 0 : i32
    %c0_i32_2 = arith.constant 0 : i32
    return %c0_i32, %c0_i32_0, %c0_i32_1 : i32, i32, i32
  }
  func.func @transform_12(%arg0: i32) -> (i32, i32, i32) {
    %c0_i32 = arith.constant 0 : i32
    %c0_i32_0 = arith.constant 0 : i32
    %c0_i32_1 = arith.constant 0 : i32
    %c0_i32_2 = arith.constant 0 : i32
    return %c0_i32, %c0_i32_0, %c0_i32_1 : i32, i32, i32
  }
  func.func @transform_13(%arg0: i32) -> (i32, i32, i32) {
    %c0_i32 = arith.constant 0 : i32
    %c0_i32_0 = arith.constant 0 : i32
    %c0_i32_1 = arith.constant 0 : i32
    %c0_i32_2 = arith.constant 0 : i32
    return %c0_i32, %c0_i32_0, %c0_i32_1 : i32, i32, i32
  }
  func.func @transform_14(%arg0: i32) -> (i32, i32, i32) {
    %c0_i32 = arith.constant 0 : i32
    %c0_i32_0 = arith.constant 0 : i32
    %c0_i32_1 = arith.constant 0 : i32
    %c0_i32_2 = arith.constant 0 : i32
    return %c0_i32, %c0_i32_0, %c0_i32_1 : i32, i32, i32
  }
  func.func @transform_15(%arg0: i32) -> (i32, i32, i32) {
    %c0_i32 = arith.constant 0 : i32
    %c0_i32_0 = arith.constant 0 : i32
    %c0_i32_1 = arith.constant 0 : i32
    %c0_i32_2 = arith.constant 0 : i32
    return %c0_i32, %c0_i32_0, %c0_i32_1 : i32, i32, i32
  }
  func.func @transform_16(%arg0: i32) -> (i32, i32, i32) {
    %c0_i32 = arith.constant 0 : i32
    %c0_i32_0 = arith.constant 0 : i32
    %c0_i32_1 = arith.constant 0 : i32
    %c0_i32_2 = arith.constant 0 : i32
    return %c0_i32, %c0_i32_0, %c0_i32_1 : i32, i32, i32
  }
  func.func @transform_17(%arg0: i32) -> (i32, i32, i32) {
    %c0_i32 = arith.constant 0 : i32
    %c0_i32_0 = arith.constant 0 : i32
    %c0_i32_1 = arith.constant 0 : i32
    %c0_i32_2 = arith.constant 0 : i32
    return %c0_i32, %c0_i32_0, %c0_i32_1 : i32, i32, i32
  }
  func.func @transform_18(%arg0: i32) -> (i32, i32) {
    %c0_i32 = arith.constant 0 : i32
    %c0_i32_0 = arith.constant 0 : i32
    %c0_i32_1 = arith.constant 0 : i32
    return %c0_i32, %c0_i32_0 : i32, i32
  }
  func.func @transform_19(%arg0: i32) -> (i32, i32) {
    %c0_i32 = arith.constant 0 : i32
    %c0_i32_0 = arith.constant 0 : i32
    %c0_i32_1 = arith.constant 0 : i32
    return %c0_i32, %c0_i32_0 : i32, i32
  }
  func.func @transform_20(%arg0: i32) -> (i32, i32) {
    %c0_i32 = arith.constant 0 : i32
    %c0_i32_0 = arith.constant 0 : i32
    %c0_i32_1 = arith.constant 0 : i32
    return %c0_i32, %c0_i32_0 : i32, i32
  }
  func.func @transform_21(%arg0: i32) -> (i32, i32) {
    %c0_i32 = arith.constant 0 : i32
    %c0_i32_0 = arith.constant 0 : i32
    %c0_i32_1 = arith.constant 0 : i32
    return %c0_i32, %c0_i32_0 : i32, i32
  }
  func.func @transform_22(%arg0: i32) -> (i32, i32) {
    %c0_i32 = arith.constant 0 : i32
    %c0_i32_0 = arith.constant 0 : i32
    %c0_i32_1 = arith.constant 0 : i32
    return %c0_i32, %c0_i32_0 : i32, i32
  }
  func.func @transform_23(%arg0: i32) -> (i32, i32, i32) {
    %c0_i32 = arith.constant 0 : i32
    %c0_i32_0 = arith.constant 0 : i32
    %c0_i32_1 = arith.constant 0 : i32
    return %arg0, %c0_i32, %c0_i32_0 : i32, i32, i32
  }
}

</mosaic_0001>

<llo_original>
// kernel: tpu_custom_call.1
$region0: #{tpu_custom_call.1}
  #allocation0 [shape = 'u32[]', space=smem, size = 0x4, offset = 0x4, fixed_abs, tag = 'smem constant byte address 0x4 - core index']
  #allocation1 [shape = 'u32[72,128]{1,0:T(1,128)}', space=vmem, size = 0x9000, scoped, tag = 'internal scratch']
  %s0 = inlined_call_operand.vmem [shape: f32[2,8,32], index: 0, kind: input, shape index: {}]
  %s1 = inlined_call_operand.vmem [shape: f32[2,1,8], index: 1, kind: input, shape index: {}]
  %s2 = inlined_call_operand.vmem [shape: f32[2,8,7], index: 2, kind: input, shape index: {}]
  %s3 = inlined_call_operand.vmem [shape: f32[2,8,1], index: 3, kind: input, shape index: {}]
  %s4 = inlined_call_operand.vmem [shape: f32[1,32], index: 4, kind: input, shape index: {}]
  %s5 = inlined_call_operand.vmem [shape: f32[1,32], index: 5, kind: input, shape index: {}]
  %s6 = inlined_call_operand.vmem [shape: f32[12,32,16], index: 6, kind: input, shape index: {}]
  %s7 = inlined_call_operand.vmem [shape: f32[12,1,16], index: 7, kind: input, shape index: {}]
  %s8 = inlined_call_operand.vmem [shape: f32[4,16,32], index: 8, kind: input, shape index: {}]
  %s9 = inlined_call_operand.vmem [shape: f32[2,1,32], index: 9, kind: input, shape index: {}]
  %s10 = inlined_call_operand.vmem [shape: f32[2,1,32], index: 10, kind: input, shape index: {}]
  %s11 = inlined_call_operand.vmem [shape: f32[2,1,32], index: 11, kind: input, shape index: {}]
  %s12 = inlined_call_operand.vmem [shape: f32[2,32,64], index: 12, kind: input, shape index: {}]
  %s13 = inlined_call_operand.vmem [shape: f32[2,1,64], index: 13, kind: input, shape index: {}]
  %s14 = inlined_call_operand.vmem [shape: f32[2,64,32], index: 14, kind: input, shape index: {}]
  %s15 = inlined_call_operand.vmem [shape: f32[2,1,32], index: 15, kind: input, shape index: {}]
  %s16 = inlined_call_operand.vmem [shape: f32[2,1,32], index: 16, kind: input, shape index: {}]
  %s17 = inlined_call_operand.vmem [shape: f32[2,1,32], index: 17, kind: input, shape index: {}]
  %s18 = inlined_call_operand.vmem [shape: f32[32,7], index: 18, kind: input, shape index: {}]
  %s19 = inlined_call_operand.vmem [shape: f32[1,7], index: 19, kind: input, shape index: {}]
  %s20 = inlined_call_operand.vmem [shape: f32[7,7], index: 20, kind: input, shape index: {}]
  %s21 = inlined_call_operand.vmem [shape: f32[1,7], index: 21, kind: input, shape index: {}]
  %s22 = inlined_call_operand.vmem [shape: f32[1,7], index: 22, kind: input, shape index: {}]
  %s23 = inlined_call_operand.vmem [shape: f32[2,1,1], index: 23, kind: output, shape index: {}]
  %s24 = sld [smem:[#allocation0]]
  $region125: #{tpu_custom_call.1} parent=0
    _
  %s26 = ssub.s32 1, %s24
  %s27 = scalar_select 0, %s26, %s24
  loop: start=0, step=1, limit=4
  $region2: #{tpu_custom_call.1} parent=0 // loop_pre_header
    _
  $region3: #{tpu_custom_call.1} parent=0 // loop_header
    %s29 = sphi 0, %s33
    %p30 = scmp.ge.s32.totalorder %s29, 4
    %s39 = sphi 0, %s41
    %s42 = sphi 0, %s39
    %s43 = sphi 0, %s42
    %s59 = sphi 0, %s43
    %s65 = sphi 0, %s67
    %s68 = sphi 0, %s65
    %s69 = sphi 0, %s68
    %s85 = sphi 0, %s69
    %s91 = sphi 0, %s93
    %s94 = sphi 0, %s91
    %s95 = sphi 0, %s94
    %s111 = sphi 0, %s95
    %s117 = sphi 0, %s119
    %s120 = sphi 0, %s117
    %s121 = sphi 0, %s120
    %s137 = sphi 0, %s121
    %s141 = sphi 0, %s141
    %s143 = sphi 0, %s141
    %s144 = sphi 0, %s143
    %s158 = sphi 0, %s144
    %s162 = sphi 0, %s162
    %s164 = sphi 0, %s162
    %s165 = sphi 0, %s164
    %s179 = sphi 0, %s165
    %s183 = sphi 0, %s183
    %s185 = sphi 0, %s183
    %s186 = sphi 0, %s185
    %s200 = sphi 0, %s186
    %s204 = sphi 0, %s204
    %s206 = sphi 0, %s204
    %s207 = sphi 0, %s206
    %s221 = sphi 0, %s207
    %s225 = sphi 0, %s225
    %s227 = sphi 0, %s225
    %s228 = sphi 0, %s227
    %s242 = sphi 0, %s228
    %s246 = sphi 0, %s246
    %s248 = sphi 0, %s246
    %s249 = sphi 0, %s248
    %s263 = sphi 0, %s249
    %s267 = sphi 0, %s267
    %s269 = sphi 0, %s267
    %s270 = sphi 0, %s269
    %s284 = sphi 0, %s270
    %s288 = sphi 0, %s288
    %s290 = sphi 0, %s288
    %s291 = sphi 0, %s290
    %s305 = sphi 0, %s291
    %s309 = sphi 0, %s309
    %s311 = sphi 0, %s309
    %s312 = sphi 0, %s311
    %s326 = sphi 0, %s312
    %s330 = sphi 0, %s330
    %s332 = sphi 0, %s330
    %s333 = sphi 0, %s332
    %s347 = sphi 0, %s333
    %s351 = sphi 0, %s351
    %s353 = sphi 0, %s351
    %s354 = sphi 0, %s353
    %s368 = sphi 0, %s354
    %s372 = sphi 0, %s372
    %s374 = sphi 0, %s372
    %s375 = sphi 0, %s374
    %s389 = sphi 0, %s375
    %s393 = sphi 0, %s393
    %s395 = sphi 0, %s393
    %s396 = sphi 0, %s395
    %s410 = sphi 0, %s396
    %s414 = sphi 0, %s414
    %s416 = sphi 0, %s414
    %s417 = sphi 0, %s416
    %s431 = sphi 0, %s417
    %s435 = sphi 0, %s435
    %s437 = sphi 0, %s435
    %s438 = sphi 0, %s437
    %s452 = sphi 0, %s438
    %s456 = sphi 0, %s456
    %s458 = sphi 0, %s456
    %s459 = sphi 0, %s458
    %s473 = sphi 0, %s459
    %s477 = sphi 0, %s477
    %s479 = sphi 0, %s477
    %s480 = sphi 0, %s479
    %s494 = sphi 0, %s480
    %s498 = sphi 0, %s498
    %s500 = sphi 0, %s498
    %s501 = sphi 0, %s500
    %s515 = sphi 0, %s501
    %s519 = sphi 0, %s519
    %s521 = sphi 0, %s519
    %s522 = sphi 0, %s521
    %s536 = sphi 0, %s522
    %s542 = sphi 0, %s544
    %s545 = sphi 0, %s542
    %s546 = sphi 0, %s545
    %s562 = sphi 0, %s546
  $region4: #{tpu_custom_call.1} parent=0 // loop_header_branch
    %32 = sbr.rel (%p30) target = $region8
  $region5: #{tpu_custom_call.1} parent=0 // loop_body
    %s34 = ssub.s32 %s29, 1
    %s35 = ssub.s32 %s29, 2
    %s36 = sadd.s32 %s29, 1
    %s37 = ssub.s32 %s29, %s36
    %p38 = scmp.eq.s32.totalorder %s37, 0
    %s40 = sadd.s32 %s39, 1
    %s41 = scalar_select %p38, %s39, %s40
    %p44 = pneg %p38
    %p45 = scmp.eq.s32.totalorder %s29, 1
    %p46 = por %p44, %p45
    %p47 = scmp.ne.s32.totalorder %s39, %s42
    %p48 = scmp.eq.s32.totalorder %s29, 0
    %p49 = por %p47, %p48
    %p50 = scmp.ne.s32.totalorder %s39, %s42
    %p51 = scmp.eq.s32.totalorder %s34, 1
    %p52 = por %p50, %p51
    %p53 = scmp.ne.s32.totalorder %s42, %s43
    %p54 = scmp.eq.s32.totalorder %s34, 0
    %p55 = por %p53, %p54
    %p56 = scmp.ne.s32.totalorder %s42, %s43
    %p57 = scmp.eq.s32.totalorder %s35, 1
    %p58 = por %p56, %p57
    %p60 = scmp.ne.s32.totalorder %s43, %s59
    %p61 = scmp.eq.s32.totalorder %s35, 0
    %p62 = por %p60, %p61
    %s63 = ssub.s32 %s29, %s36
    %p64 = scmp.eq.s32.totalorder %s63, 0
    %s66 = sadd.s32 %s65, 1
    %s67 = scalar_select %p64, %s65, %s66
    %p70 = pneg %p64
    %p71 = scmp.eq.s32.totalorder %s29, 1
    %p72 = por %p70, %p71
    %p73 = scmp.ne.s32.totalorder %s65, %s68
    %p74 = scmp.eq.s32.totalorder %s29, 0
    %p75 = por %p73, %p74
    %p76 = scmp.ne.s32.totalorder %s65, %s68
    %p77 = scmp.eq.s32.totalorder %s34, 1
    %p78 = por %p76, %p77
    %p79 = scmp.ne.s32.totalorder %s68, %s69
    %p80 = scmp.eq.s32.totalorder %s34, 0
    %p81 = por %p79, %p80
    %p82 = scmp.ne.s32.totalorder %s68, %s69
    %p83 = scmp.eq.s32.totalorder %s35, 1
    %p84 = por %p82, %p83
    %p86 = scmp.ne.s32.totalorder %s69, %s85
    %p87 = scmp.eq.s32.totalorder %s35, 0
    %p88 = por %p86, %p87
    %s89 = ssub.s32 %s29, %s36
    %p90 = scmp.eq.s32.totalorder %s89, 0
    %s92 = sadd.s32 %s91, 1
    %s93 = scalar_select %p90, %s91, %s92
    %p96 = pneg %p90
    %p97 = scmp.eq.s32.totalorder %s29, 1
    %p98 = por %p96, %p97
    %p99 = scmp.ne.s32.totalorder %s91, %s94
    %p100 = scmp.eq.s32.totalorder %s29, 0
    %p101 = por %p99, %p100
    %p102 = scmp.ne.s32.totalorder %s91, %s94
    %p103 = scmp.eq.s32.totalorder %s34, 1
    %p104 = por %p102, %p103
    %p105 = scmp.ne.s32.totalorder %s94, %s95
    %p106 = scmp.eq.s32.totalorder %s34, 0
    %p107 = por %p105, %p106
    %p108 = scmp.ne.s32.totalorder %s94, %s95
    %p109 = scmp.eq.s32.totalorder %s35, 1
    %p110 = por %p108, %p109
    %p112 = scmp.ne.s32.totalorder %s95, %s111
    %p113 = scmp.eq.s32.totalorder %s35, 0
    %p114 = por %p112, %p113
    %s115 = ssub.s32 %s29, %s36
    %p116 = scmp.eq.s32.totalorder %s115, 0
    %s118 = sadd.s32 %s117, 1
    %s119 = scalar_select %p116, %s117, %s118
    %p122 = pneg %p116
    %p123 = scmp.eq.s32.totalorder %s29, 1
    %p124 = por %p122, %p123
    %p125 = scmp.ne.s32.totalorder %s117, %s120
    %p126 = scmp.eq.s32.totalorder %s29, 0
    %p127 = por %p125, %p126
    %p128 = scmp.ne.s32.totalorder %s117, %s120
    %p129 = scmp.eq.s32.totalorder %s34, 1
    %p130 = por %p128, %p129
    %p131 = scmp.ne.s32.totalorder %s120, %s121
    %p132 = scmp.eq.s32.totalorder %s34, 0
    %p133 = por %p131, %p132
    %p134 = scmp.ne.s32.totalorder %s120, %s121
    %p135 = scmp.eq.s32.totalorder %s35, 1
    %p136 = por %p134, %p135
    %p138 = scmp.ne.s32.totalorder %s121, %s137
    %p139 = scmp.eq.s32.totalorder %s35, 0
    %p140 = por %p138, %p139
    %s142 = sadd.s32 %s141, 1
    %p145 = scmp.eq.s32.totalorder %s29, 1
    %p146 = scmp.ne.s32.totalorder %s141, %s143
    %p147 = scmp.eq.s32.totalorder %s29, 0
    %p148 = por %p146, %p147
    %p149 = scmp.ne.s32.totalorder %s141, %s143
    %p150 = scmp.eq.s32.totalorder %s34, 1
    %p151 = por %p149, %p150
    %p152 = scmp.ne.s32.totalorder %s143, %s144
    %p153 = scmp.eq.s32.totalorder %s34, 0
    %p154 = por %p152, %p153
    %p155 = scmp.ne.s32.totalorder %s143, %s144
    %p156 = scmp.eq.s32.totalorder %s35, 1
    %p157 = por %p155, %p156
    %p159 = scmp.ne.s32.totalorder %s144, %s158
    %p160 = scmp.eq.s32.totalorder %s35, 0
    %p161 = por %p159, %p160
    %s163 = sadd.s32 %s162, 1
    %p166 = scmp.eq.s32.totalorder %s29, 1
    %p167 = scmp.ne.s32.totalorder %s162, %s164
    %p168 = scmp.eq.s32.totalorder %s29, 0
    %p169 = por %p167, %p168
    %p170 = scmp.ne.s32.totalorder %s162, %s164
    %p171 = scmp.eq.s32.totalorder %s34, 1
    %p172 = por %p170, %p171
    %p173 = scmp.ne.s32.totalorder %s164, %s165
    %p174 = scmp.eq.s32.totalorder %s34, 0
    %p175 = por %p173, %p174
    %p176 = scmp.ne.s32.totalorder %s164, %s165
    %p177 = scmp.eq.s32.totalorder %s35, 1
    %p178 = por %p176, %p177
    %p180 = scmp.ne.s32.totalorder %s165, %s179
    %p181 = scmp.eq.s32.totalorder %s35, 0
    %p182 = por %p180, %p181
    %s184 = sadd.s32 %s183, 1
    %p187 = scmp.eq.s32.totalorder %s29, 1
    %p188 = scmp.ne.s32.totalorder %s183, %s185
    %p189 = scmp.eq.s32.totalorder %s29, 0
    %p190 = por %p188, %p189
    %p191 = scmp.ne.s32.totalorder %s183, %s185
    %p192 = scmp.eq.s32.totalorder %s34, 1
    %p193 = por %p191, %p192
    %p194 = scmp.ne.s32.totalorder %s185, %s186
    %p195 = scmp.eq.s32.totalorder %s34, 0
    %p196 = por %p194, %p195
    %p197 = scmp.ne.s32.totalorder %s185, %s186
    %p198 = scmp.eq.s32.totalorder %s35, 1
    %p199 = por %p197, %p198
    %p201 = scmp.ne.s32.totalorder %s186, %s200
    %p202 = scmp.eq.s32.totalorder %s35, 0
    %p203 = por %p201, %p202
    %s205 = sadd.s32 %s204, 1
    %p208 = scmp.eq.s32.totalorder %s29, 1
    %p209 = scmp.ne.s32.totalorder %s204, %s206
    %p210 = scmp.eq.s32.totalorder %s29, 0
    %p211 = por %p209, %p210
    %p212 = scmp.ne.s32.totalorder %s204, %s206
    %p213 = scmp.eq.s32.totalorder %s34, 1
    %p214 = por %p212, %p213
    %p215 = scmp.ne.s32.totalorder %s206, %s207
    %p216 = scmp.eq.s32.totalorder %s34, 0
    %p217 = por %p215, %p216
    %p218 = scmp.ne.s32.totalorder %s206, %s207
    %p219 = scmp.eq.s32.totalorder %s35, 1
    %p220 = por %p218, %p219
    %p222 = scmp.ne.s32.totalorder %s207, %s221
    %p223 = scmp.eq.s32.totalorder %s35, 0
    %p224 = por %p222, %p223
    %s226 = sadd.s32 %s225, 1
    %p229 = scmp.eq.s32.totalorder %s29, 1
    %p230 = scmp.ne.s32.totalorder %s225, %s227
    %p231 = scmp.eq.s32.totalorder %s29, 0
    %p232 = por %p230, %p231
    %p233 = scmp.ne.s32.totalorder %s225, %s227
    %p234 = scmp.eq.s32.totalorder %s34, 1
    %p235 = por %p233, %p234
    %p236 = scmp.ne.s32.totalorder %s227, %s228
    %p237 = scmp.eq.s32.totalorder %s34, 0
    %p238 = por %p236, %p237
    %p239 = scmp.ne.s32.totalorder %s227, %s228
    %p240 = scmp.eq.s32.totalorder %s35, 1
    %p241 = por %p239, %p240
    %p243 = scmp.ne.s32.totalorder %s228, %s242
    %p244 = scmp.eq.s32.totalorder %s35, 0
    %p245 = por %p243, %p244
    %s247 = sadd.s32 %s246, 1
    %p250 = scmp.eq.s32.totalorder %s29, 1
    %p251 = scmp.ne.s32.totalorder %s246, %s248
    %p252 = scmp.eq.s32.totalorder %s29, 0
    %p253 = por %p251, %p252
    %p254 = scmp.ne.s32.totalorder %s246, %s248
    %p255 = scmp.eq.s32.totalorder %s34, 1
    %p256 = por %p254, %p255
    %p257 = scmp.ne.s32.totalorder %s248, %s249
    %p258 = scmp.eq.s32.totalorder %s34, 0
    %p259 = por %p257, %p258
    %p260 = scmp.ne.s32.totalorder %s248, %s249
    %p261 = scmp.eq.s32.totalorder %s35, 1
    %p262 = por %p260, %p261
    %p264 = scmp.ne.s32.totalorder %s249, %s263
    %p265 = scmp.eq.s32.totalorder %s35, 0
    %p266 = por %p264, %p265
    %s268 = sadd.s32 %s267, 1
    %p271 = scmp.eq.s32.totalorder %s29, 1
    %p272 = scmp.ne.s32.totalorder %s267, %s269
    %p273 = scmp.eq.s32.totalorder %s29, 0
    %p274 = por %p272, %p273
    %p275 = scmp.ne.s32.totalorder %s267, %s269
    %p276 = scmp.eq.s32.totalorder %s34, 1
    %p277 = por %p275, %p276
    %p278 = scmp.ne.s32.totalorder %s269, %s270
    %p279 = scmp.eq.s32.totalorder %s34, 0
    %p280 = por %p278, %p279
    %p281 = scmp.ne.s32.totalorder %s269, %s270
    %p282 = scmp.eq.s32.totalorder %s35, 1
    %p283 = por %p281, %p282
    %p285 = scmp.ne.s32.totalorder %s270, %s284
    %p286 = scmp.eq.s32.totalorder %s35, 0
    %p287 = por %p285, %p286
    %s289 = sadd.s32 %s288, 1
    %p292 = scmp.eq.s32.totalorder %s29, 1
    %p293 = scmp.ne.s32.totalorder %s288, %s290
    %p294 = scmp.eq.s32.totalorder %s29, 0
    %p295 = por %p293, %p294
    %p296 = scmp.ne.s32.totalorder %s288, %s290
    %p297 = scmp.eq.s32.totalorder %s34, 1
    %p298 = por %p296, %p297
    %p299 = scmp.ne.s32.totalorder %s290, %s291
    %p300 = scmp.eq.s32.totalorder %s34, 0
    %p301 = por %p299, %p300
    %p302 = scmp.ne.s32.totalorder %s290, %s291
    %p303 = scmp.eq.s32.totalorder %s35, 1
    %p304 = por %p302, %p303
    %p306 = scmp.ne.s32.totalorder %s291, %s305
    %p307 = scmp.eq.s32.totalorder %s35, 0
    %p308 = por %p306, %p307
    %s310 = sadd.s32 %s309, 1
    %p313 = scmp.eq.s32.totalorder %s29, 1
    %p314 = scmp.ne.s32.totalorder %s309, %s311
    %p315 = scmp.eq.s32.totalorder %s29, 0
    %p316 = por %p314, %p315
    %p317 = scmp.ne.s32.totalorder %s309, %s311
    %p318 = scmp.eq.s32.totalorder %s34, 1
    %p319 = por %p317, %p318
    %p320 = scmp.ne.s32.totalorder %s311, %s312
    %p321 = scmp.eq.s32.totalorder %s34, 0
    %p322 = por %p320, %p321
    %p323 = scmp.ne.s32.totalorder %s311, %s312
    %p324 = scmp.eq.s32.totalorder %s35, 1
    %p325 = por %p323, %p324
    %p327 = scmp.ne.s32.totalorder %s312, %s326
    %p328 = scmp.eq.s32.totalorder %s35, 0
    %p329 = por %p327, %p328
    %s331 = sadd.s32 %s330, 1
    %p334 = scmp.eq.s32.totalorder %s29, 1
    %p335 = scmp.ne.s32.totalorder %s330, %s332
    %p336 = scmp.eq.s32.totalorder %s29, 0
    %p337 = por %p335, %p336
    %p338 = scmp.ne.s32.totalorder %s330, %s332
    %p339 = scmp.eq.s32.totalorder %s34, 1
    %p340 = por %p338, %p339
    %p341 = scmp.ne.s32.totalorder %s332, %s333
    %p342 = scmp.eq.s32.totalorder %s34, 0
    %p343 = por %p341, %p342
    %p344 = scmp.ne.s32.totalorder %s332, %s333
    %p345 = scmp.eq.s32.totalorder %s35, 1
    %p346 = por %p344, %p345
    %p348 = scmp.ne.s32.totalorder %s333, %s347
    %p349 = scmp.eq.s32.totalorder %s35, 0
    %p350 = por %p348, %p349
    %s352 = sadd.s32 %s351, 1
    %p355 = scmp.eq.s32.totalorder %s29, 1
    %p356 = scmp.ne.s32.totalorder %s351, %s353
    %p357 = scmp.eq.s32.totalorder %s29, 0
    %p358 = por %p356, %p357
    %p359 = scmp.ne.s32.totalorder %s351, %s353
    %p360 = scmp.eq.s32.totalorder %s34, 1
    %p361 = por %p359, %p360
    %p362 = scmp.ne.s32.totalorder %s353, %s354
    %p363 = scmp.eq.s32.totalorder %s34, 0
    %p364 = por %p362, %p363
    %p365 = scmp.ne.s32.totalorder %s353, %s354
    %p366 = scmp.eq.s32.totalorder %s35, 1
    %p367 = por %p365, %p366
    %p369 = scmp.ne.s32.totalorder %s354, %s368
    %p370 = scmp.eq.s32.totalorder %s35, 0
    %p371 = por %p369, %p370
    %s373 = sadd.s32 %s372, 1
    %p376 = scmp.eq.s32.totalorder %s29, 1
    %p377 = scmp.ne.s32.totalorder %s372, %s374
    %p378 = scmp.eq.s32.totalorder %s29, 0
    %p379 = por %p377, %p378
    %p380 = scmp.ne.s32.totalorder %s372, %s374
    %p381 = scmp.eq.s32.totalorder %s34, 1
    %p382 = por %p380, %p381
    %p383 = scmp.ne.s32.totalorder %s374, %s375
    %p384 = scmp.eq.s32.totalorder %s34, 0
    %p385 = por %p383, %p384
    %p386 = scmp.ne.s32.totalorder %s374, %s375
    %p387 = scmp.eq.s32.totalorder %s35, 1
    %p388 = por %p386, %p387
    %p390 = scmp.ne.s32.totalorder %s375, %s389
    %p391 = scmp.eq.s32.totalorder %s35, 0
    %p392 = por %p390, %p391
    %s394 = sadd.s32 %s393, 1
    %p397 = scmp.eq.s32.totalorder %s29, 1
    %p398 = scmp.ne.s32.totalorder %s393, %s395
    %p399 = scmp.eq.s32.totalorder %s29, 0
    %p400 = por %p398, %p399
    %p401 = scmp.ne.s32.totalorder %s393, %s395
    %p402 = scmp.eq.s32.totalorder %s34, 1
    %p403 = por %p401, %p402
    %p404 = scmp.ne.s32.totalorder %s395, %s396
    %p405 = scmp.eq.s32.totalorder %s34, 0
    %p406 = por %p404, %p405
    %p407 = scmp.ne.s32.totalorder %s395, %s396
    %p408 = scmp.eq.s32.totalorder %s35, 1
    %p409 = por %p407, %p408
    %p411 = scmp.ne.s32.totalorder %s396, %s410
    %p412 = scmp.eq.s32.totalorder %s35, 0
    %p413 = por %p411, %p412
    %s415 = sadd.s32 %s414, 1
    %p418 = scmp.eq.s32.totalorder %s29, 1
    %p419 = scmp.ne.s32.totalorder %s414, %s416
    %p420 = scmp.eq.s32.totalorder %s29, 0
    %p421 = por %p419, %p420
    %p422 = scmp.ne.s32.totalorder %s414, %s416
    %p423 = scmp.eq.s32.totalorder %s34, 1
    %p424 = por %p422, %p423
    %p425 = scmp.ne.s32.totalorder %s416, %s417
    %p426 = scmp.eq.s32.totalorder %s34, 0
    %p427 = por %p425, %p426
    %p428 = scmp.ne.s32.totalorder %s416, %s417
    %p429 = scmp.eq.s32.totalorder %s35, 1
    %p430 = por %p428, %p429
    %p432 = scmp.ne.s32.totalorder %s417, %s431
    %p433 = scmp.eq.s32.totalorder %s35, 0
    %p434 = por %p432, %p433
    %s436 = sadd.s32 %s435, 1
    %p439 = scmp.eq.s32.totalorder %s29, 1
    %p440 = scmp.ne.s32.totalorder %s435, %s437
    %p441 = scmp.eq.s32.totalorder %s29, 0
    %p442 = por %p440, %p441
    %p443 = scmp.ne.s32.totalorder %s435, %s437
    %p444 = scmp.eq.s32.totalorder %s34, 1
    %p445 = por %p443, %p444
    %p446 = scmp.ne.s32.totalorder %s437, %s438
    %p447 = scmp.eq.s32.totalorder %s34, 0
    %p448 = por %p446, %p447
    %p449 = scmp.ne.s32.totalorder %s437, %s438
    %p450 = scmp.eq.s32.totalorder %s35, 1
    %p451 = por %p449, %p450
    %p453 = scmp.ne.s32.totalorder %s438, %s452
    %p454 = scmp.eq.s32.totalorder %s35, 0
    %p455 = por %p453, %p454
    %s457 = sadd.s32 %s456, 1
    %p460 = scmp.eq.s32.totalorder %s29, 1
    %p461 = scmp.ne.s32.totalorder %s456, %s458
    %p462 = scmp.eq.s32.totalorder %s29, 0
    %p463 = por %p461, %p462
    %p464 = scmp.ne.s32.totalorder %s456, %s458
    %p465 = scmp.eq.s32.totalorder %s34, 1
    %p466 = por %p464, %p465
    %p467 = scmp.ne.s32.totalorder %s458, %s459
    %p468 = scmp.eq.s32.totalorder %s34, 0
    %p469 = por %p467, %p468
    %p470 = scmp.ne.s32.totalorder %s458, %s459
    %p471 = scmp.eq.s32.totalorder %s35, 1
    %p472 = por %p470, %p471
    %p474 = scmp.ne.s32.totalorder %s459, %s473
    %p475 = scmp.eq.s32.totalorder %s35, 0
    %p476 = por %p474, %p475
    %s478 = sadd.s32 %s477, 1
    %p481 = scmp.eq.s32.totalorder %s29, 1
    %p482 = scmp.ne.s32.totalorder %s477, %s479
    %p483 = scmp.eq.s32.totalorder %s29, 0
    %p484 = por %p482, %p483
    %p485 = scmp.ne.s32.totalorder %s477, %s479
    %p486 = scmp.eq.s32.totalorder %s34, 1
    %p487 = por %p485, %p486
    %p488 = scmp.ne.s32.totalorder %s479, %s480
    %p489 = scmp.eq.s32.totalorder %s34, 0
    %p490 = por %p488, %p489
    %p491 = scmp.ne.s32.totalorder %s479, %s480
    %p492 = scmp.eq.s32.totalorder %s35, 1
    %p493 = por %p491, %p492
    %p495 = scmp.ne.s32.totalorder %s480, %s494
    %p496 = scmp.eq.s32.totalorder %s35, 0
    %p497 = por %p495, %p496
    %s499 = sadd.s32 %s498, 1
    %p502 = scmp.eq.s32.totalorder %s29, 1
    %p503 = scmp.ne.s32.totalorder %s498, %s500
    %p504 = scmp.eq.s32.totalorder %s29, 0
    %p505 = por %p503, %p504
    %p506 = scmp.ne.s32.totalorder %s498, %s500
    %p507 = scmp.eq.s32.totalorder %s34, 1
    %p508 = por %p506, %p507
    %p509 = scmp.ne.s32.totalorder %s500, %s501
    %p510 = scmp.eq.s32.totalorder %s34, 0
    %p511 = por %p509, %p510
    %p512 = scmp.ne.s32.totalorder %s500, %s501
    %p513 = scmp.eq.s32.totalorder %s35, 1
    %p514 = por %p512, %p513
    %p516 = scmp.ne.s32.totalorder %s501, %s515
    %p517 = scmp.eq.s32.totalorder %s35, 0
    %p518 = por %p516, %p517
    %s520 = sadd.s32 %s519, 1
    %p523 = scmp.eq.s32.totalorder %s29, 1
    %p524 = scmp.ne.s32.totalorder %s519, %s521
    %p525 = scmp.eq.s32.totalorder %s29, 0
    %p526 = por %p524, %p525
    %p527 = scmp.ne.s32.totalorder %s519, %s521
    %p528 = scmp.eq.s32.totalorder %s34, 1
    %p529 = por %p527, %p528
    %p530 = scmp.ne.s32.totalorder %s521, %s522
    %p531 = scmp.eq.s32.totalorder %s34, 0
    %p532 = por %p530, %p531
    %p533 = scmp.ne.s32.totalorder %s521, %s522
    %p534 = scmp.eq.s32.totalorder %s35, 1
    %p535 = por %p533, %p534
    %p537 = scmp.ne.s32.totalorder %s522, %s536
    %p538 = scmp.eq.s32.totalorder %s35, 0
    %p539 = por %p537, %p538
    %s540 = ssub.s32 %s29, %s36
    %p541 = scmp.eq.s32.totalorder %s540, 0
    %s543 = sadd.s32 %s542, 1
    %s544 = scalar_select %p541, %s542, %s543
    %p547 = pneg %p541
    %p548 = scmp.eq.s32.totalorder %s29, 1
    %p549 = por %p547, %p548
    %p550 = scmp.ne.s32.totalorder %s542, %s545
    %p551 = scmp.eq.s32.totalorder %s29, 0
    %p552 = por %p550, %p551
    %p553 = scmp.ne.s32.totalorder %s542, %s545
    %p554 = scmp.eq.s32.totalorder %s34, 1
    %p555 = por %p553, %p554
    %p556 = scmp.ne.s32.totalorder %s545, %s546
    %p557 = scmp.eq.s32.totalorder %s34, 0
    %p558 = por %p556, %p557
    %p559 = scmp.ne.s32.totalorder %s545, %s546
    %p560 = scmp.eq.s32.totalorder %s35, 1
    %p561 = por %p559, %p560
    %p563 = scmp.ne.s32.totalorder %s546, %s562
    %p564 = scmp.eq.s32.totalorder %s35, 0
    %p565 = por %p563, %p564
    %p566 = scmp.le.s32.totalorder 1, %s29
    %p567 = scmp.lt.s32.totalorder %s29, 3
    %p568 = pnand %p566, %p567
    %p569 = pneg %p568
    // Predicated region
    $region9: #{tpu_custom_call.1} parent=5 // pred_check
      _
    $region10: #{tpu_custom_call.1} parent=5 // pred_check_branch
      %571 = sbr.rel (%p568) target = $region12
    $region11: #{tpu_custom_call.1} parent=5 // pred_region
      %s572 = ssub.s32 %s29, 1
      // Predicated region
      $region13: #{tpu_custom_call.1} parent=11 // pred_check
        %p573 = pneg %p154
      $region14: #{tpu_custom_call.1} parent=11 // pred_check_branch
        %575 = sbr.rel (%p573) target = $region16
      $region15: #{tpu_custom_call.1} parent=11 // pred_region
        _
      $region16: #{tpu_custom_call.1} parent=11 // pred_fallthru
        _
      // Predicated region
      $region17: #{tpu_custom_call.1} parent=11 // pred_check
        %p576 = pneg %p175
      $region18: #{tpu_custom_call.1} parent=11 // pred_check_branch
        %578 = sbr.rel (%p576) target = $region20
      $region19: #{tpu_custom_call.1} parent=11 // pred_region
        _
      $region20: #{tpu_custom_call.1} parent=11 // pred_fallthru
        _
      // Predicated region
      $region21: #{tpu_custom_call.1} parent=11 // pred_check
        %p579 = pneg %p196
      $region22: #{tpu_custom_call.1} parent=11 // pred_check_branch
        %581 = sbr.rel (%p579) target = $region24
      $region23: #{tpu_custom_call.1} parent=11 // pred_region
        _
      $region24: #{tpu_custom_call.1} parent=11 // pred_fallthru
        _
      // Predicated region
      $region25: #{tpu_custom_call.1} parent=11 // pred_check
        %p582 = pneg %p217
      $region26: #{tpu_custom_call.1} parent=11 // pred_check_branch
        %584 = sbr.rel (%p582) target = $region28
      $region27: #{tpu_custom_call.1} parent=11 // pred_region
        _
      $region28: #{tpu_custom_call.1} parent=11 // pred_fallthru
        _
      // Predicated region
      $region29: #{tpu_custom_call.1} parent=11 // pred_check
        %p585 = pneg %p238
      $region30: #{tpu_custom_call.1} parent=11 // pred_check_branch
        %587 = sbr.rel (%p585) target = $region32
      $region31: #{tpu_custom_call.1} parent=11 // pred_region
        _
      $region32: #{tpu_custom_call.1} parent=11 // pred_fallthru
        _
      // Predicated region
      $region33: #{tpu_custom_call.1} parent=11 // pred_check
        %p588 = pneg %p259
      $region34: #{tpu_custom_call.1} parent=11 // pred_check_branch
        %590 = sbr.rel (%p588) target = $region36
      $region35: #{tpu_custom_call.1} parent=11 // pred_region
        _
      $region36: #{tpu_custom_call.1} parent=11 // pred_fallthru
        _
      // Predicated region
      $region37: #{tpu_custom_call.1} parent=11 // pred_check
        %p591 = pneg %p280
      $region38: #{tpu_custom_call.1} parent=11 // pred_check_branch
        %593 = sbr.rel (%p591) target = $region40
      $region39: #{tpu_custom_call.1} parent=11 // pred_region
        _
      $region40: #{tpu_custom_call.1} parent=11 // pred_fallthru
        _
      // Predicated region
      $region41: #{tpu_custom_call.1} parent=11 // pred_check
        %p594 = pneg %p301
      $region42: #{tpu_custom_call.1} parent=11 // pred_check_branch
        %596 = sbr.rel (%p594) target = $region44
      $region43: #{tpu_custom_call.1} parent=11 // pred_region
        _
      $region44: #{tpu_custom_call.1} parent=11 // pred_fallthru
        _
      // Predicated region
      $region45: #{tpu_custom_call.1} parent=11 // pred_check
        %p597 = pneg %p322
      $region46: #{tpu_custom_call.1} parent=11 // pred_check_branch
        %599 = sbr.rel (%p597) target = $region48
      $region47: #{tpu_custom_call.1} parent=11 // pred_region
        _
      $region48: #{tpu_custom_call.1} parent=11 // pred_fallthru
        _
      // Predicated region
      $region49: #{tpu_custom_call.1} parent=11 // pred_check
        %p600 = pneg %p343
      $region50: #{tpu_custom_call.1} parent=11 // pred_check_branch
        %602 = sbr.rel (%p600) target = $region52
      $region51: #{tpu_custom_call.1} parent=11 // pred_region
        _
      $region52: #{tpu_custom_call.1} parent=11 // pred_fallthru
        _
      // Predicated region
      $region53: #{tpu_custom_call.1} parent=11 // pred_check
        %p603 = pneg %p364
      $region54: #{tpu_custom_call.1} parent=11 // pred_check_branch
        %605 = sbr.rel (%p603) target = $region56
      $region55: #{tpu_custom_call.1} parent=11 // pred_region
        _
      $region56: #{tpu_custom_call.1} parent=11 // pred_fallthru
        _
      // Predicated region
      $region57: #{tpu_custom_call.1} parent=11 // pred_check
        %p606 = pneg %p385
      $region58: #{tpu_custom_call.1} parent=11 // pred_check_branch
        %608 = sbr.rel (%p606) target = $region60
      $region59: #{tpu_custom_call.1} parent=11 // pred_region
        _
      $region60: #{tpu_custom_call.1} parent=11 // pred_fallthru
        _
      // Predicated region
      $region61: #{tpu_custom_call.1} parent=11 // pred_check
        %p609 = pneg %p406
      $region62: #{tpu_custom_call.1} parent=11 // pred_check_branch
        %611 = sbr.rel (%p609) target = $region64
      $region63: #{tpu_custom_call.1} parent=11 // pred_region
        _
      $region64: #{tpu_custom_call.1} parent=11 // pred_fallthru
        _
      // Predicated region
      $region65: #{tpu_custom_call.1} parent=11 // pred_check
        %p612 = pneg %p427
      $region66: #{tpu_custom_call.1} parent=11 // pred_check_branch
        %614 = sbr.rel (%p612) target = $region68
      $region67: #{tpu_custom_call.1} parent=11 // pred_region
        _
      $region68: #{tpu_custom_call.1} parent=11 // pred_fallthru
        _
      // Predicated region
      $region69: #{tpu_custom_call.1} parent=11 // pred_check
        %p615 = pneg %p448
      $region70: #{tpu_custom_call.1} parent=11 // pred_check_branch
        %617 = sbr.rel (%p615) target = $region72
      $region71: #{tpu_custom_call.1} parent=11 // pred_region
        _
      $region72: #{tpu_custom_call.1} parent=11 // pred_fallthru
        _
      // Predicated region
      $region73: #{tpu_custom_call.1} parent=11 // pred_check
        %p618 = pneg %p469
      $region74: #{tpu_custom_call.1} parent=11 // pred_check_branch
        %620 = sbr.rel (%p618) target = $region76
      $region75: #{tpu_custom_call.1} parent=11 // pred_region
        _
      $region76: #{tpu_custom_call.1} parent=11 // pred_fallthru
        _
      // Predicated region
      $region77: #{tpu_custom_call.1} parent=11 // pred_check
        %p621 = pneg %p490
      $region78: #{tpu_custom_call.1} parent=11 // pred_check_branch
        %623 = sbr.rel (%p621) target = $region80
      $region79: #{tpu_custom_call.1} parent=11 // pred_region
        _
      $region80: #{tpu_custom_call.1} parent=11 // pred_fallthru
        _
      // Predicated region
      $region81: #{tpu_custom_call.1} parent=11 // pred_check
        %p624 = pneg %p511
      $region82: #{tpu_custom_call.1} parent=11 // pred_check_branch
        %626 = sbr.rel (%p624) target = $region84
      $region83: #{tpu_custom_call.1} parent=11 // pred_region
        _
      $region84: #{tpu_custom_call.1} parent=11 // pred_fallthru
        _
      // Predicated region
      $region85: #{tpu_custom_call.1} parent=11 // pred_check
        %p627 = pneg %p532
      $region86: #{tpu_custom_call.1} parent=11 // pred_check_branch
        %629 = sbr.rel (%p627) target = $region88
      $region87: #{tpu_custom_call.1} parent=11 // pred_region
        _
      $region88: #{tpu_custom_call.1} parent=11 // pred_fallthru
        _
    $region12: #{tpu_custom_call.1} parent=5 // pred_fallthru
      _
    %p630 = scmp.lt.s32.totalorder %s29, 2
    // Predicated region
    $region89: #{tpu_custom_call.1} parent=5 // pred_check
      %p631 = pneg %p630
    $region90: #{tpu_custom_call.1} parent=5 // pred_check_branch
      %633 = sbr.rel (%p631) target = $region92
    $region91: #{tpu_custom_call.1} parent=5 // pred_region
      // Predicated region
      $region93: #{tpu_custom_call.1} parent=91 // pred_check
        %p634 = pneg %p49
      $region94: #{tpu_custom_call.1} parent=91 // pred_check_branch
        %636 = sbr.rel (%p634) target = $region96
      $region95: #{tpu_custom_call.1} parent=91 // pred_region
        %p637 = scmp.lt.s32.totalorder %s29, 1
        %s638 = scalar_select %p637, %s29, 1
        %s639 = smul.addr %s638, 8
        %s640 = scalar_lea.vmem %s0, %s639
      $region96: #{tpu_custom_call.1} parent=91 // pred_fallthru
        _
      // Predicated region
      $region97: #{tpu_custom_call.1} parent=91 // pred_check
        %p641 = pneg %p75
      $region98: #{tpu_custom_call.1} parent=91 // pred_check_branch
        %643 = sbr.rel (%p641) target = $region100
      $region99: #{tpu_custom_call.1} parent=91 // pred_region
        %p644 = scmp.lt.s32.totalorder %s29, 1
        %s645 = scalar_select %p644, %s29, 1
        %s646 = scalar_lea.vmem %s1, %s645
      $region100: #{tpu_custom_call.1} parent=91 // pred_fallthru
        _
      // Predicated region
      $region101: #{tpu_custom_call.1} parent=91 // pred_check
        %p647 = pneg %p101
      $region102: #{tpu_custom_call.1} parent=91 // pred_check_branch
        %649 = sbr.rel (%p647) target = $region104
      $region103: #{tpu_custom_call.1} parent=91 // pred_region
        %p650 = scmp.lt.s32.totalorder %s29, 1
        %s651 = scalar_select %p650, %s29, 1
        %s652 = smul.addr %s651, 8
        %s653 = scalar_lea.vmem %s2, %s652
      $region104: #{tpu_custom_call.1} parent=91 // pred_fallthru
        _
      // Predicated region
      $region105: #{tpu_custom_call.1} parent=91 // pred_check
        %p654 = pneg %p127
      $region106: #{tpu_custom_call.1} parent=91 // pred_check_branch
        %656 = sbr.rel (%p654) target = $region108
      $region107: #{tpu_custom_call.1} parent=91 // pred_region
        %p657 = scmp.lt.s32.totalorder %s29, 1
        %s658 = scalar_select %p657, %s29, 1
        %s659 = smul.addr %s658, 8
        %s660 = scalar_lea.vmem %s3, %s659
      $region108: #{tpu_custom_call.1} parent=91 // pred_fallthru
        _
    $region92: #{tpu_custom_call.1} parent=5 // pred_fallthru
      _
    %p661 = scmp.le.s32.totalorder 1, %s29
    %p662 = scmp.lt.s32.totalorder %s29, 3
    %p663 = pnand %p661, %p662
    %p664 = pneg %p663
    // Predicated region
    $region109: #{tpu_custom_call.1} parent=5 // pred_check
      _
    $region110: #{tpu_custom_call.1} parent=5 // pred_check_branch
      %666 = sbr.rel (%p663) target = $region112
    $region111: #{tpu_custom_call.1} parent=5 // pred_region
      %s667 = ssub.s32 %s29, 1
      %p668 = scmp.lt.s32.totalorder %s34, 1
      %s669 = scalar_select %p668, %s34, 1
      %s670 = smul.addr %s669, 8
      %s671 = scalar_lea.vmem %s0, %s670
      %p672 = pneg %p55
      %p673 = pneg %p52
      %p674 = scmp.lt.s32.totalorder %s34, 1
      %s675 = scalar_select %p674, %s34, 1
      %s676 = scalar_lea.vmem %s1, %s675
      %p677 = pneg %p81
      %p678 = pneg %p78
      %p679 = scmp.lt.s32.totalorder %s34, 1
      %s680 = scalar_select %p679, %s34, 1
      %s681 = smul.addr %s680, 8
      %s682 = scalar_lea.vmem %s2, %s681
      %p683 = pneg %p107
      %p684 = pneg %p104
      %p685 = scmp.lt.s32.totalorder %s34, 1
      %s686 = scalar_select %p685, %s34, 1
      %s687 = smul.addr %s686, 8
      %s688 = scalar_lea.vmem %s3, %s687
      %p689 = pneg %p133
      %p690 = pneg %p130
      %p691 = pneg %p154
      %p692 = pneg %p151
      %p693 = pneg %p175
      %p694 = pneg %p172
      %p695 = pneg %p196
      %p696 = pneg %p193
      %p697 = pneg %p217
      %p698 = pneg %p214
      %p699 = pneg %p238
      %p700 = pneg %p235
      %p701 = pneg %p259
      %p702 = pneg %p256
      %p703 = pneg %p280
      %p704 = pneg %p277
      %p705 = pneg %p301
      %p706 = pneg %p298
      %p707 = pneg %p322
      %p708 = pneg %p319
      %p709 = pneg %p343
      %p710 = pneg %p340
      %p711 = pneg %p364
      %p712 = pneg %p361
      %p713 = pneg %p385
      %p714 = pneg %p382
      %p715 = pneg %p406
      %p716 = pneg %p403
      %p717 = pneg %p427
      %p718 = pneg %p424
      %p719 = pneg %p448
      %p720 = pneg %p445
      %p721 = pneg %p469
      %p722 = pneg %p466
      %p723 = pneg %p490
      %p724 = pneg %p487
      %p725 = pneg %p511
      %p726 = pneg %p508
      %p727 = pneg %p532
      %p728 = pneg %p529
      %p729 = pneg %p558
      %p730 = pneg %p555
      %p731 = scmp.lt.s32.totalorder %s34, 1
      %s732 = scalar_select %p731, %s34, 1
      %s733 = scalar_lea.vmem %s23, %s732
      %p734 = scmp.lt.s32.totalorder %s34, 1
      %s735 = scalar_select %p734, %s34, 1
      %s736 = smul.addr %s735, 8
      %s737 = scalar_lea.vmem %s0, %s736
      %p738 = scmp.lt.s32.totalorder %s34, 1
      %s739 = scalar_select %p738, %s34, 1
      %s740 = scalar_lea.vmem %s1, %s739
      %p741 = scmp.lt.s32.totalorder %s34, 1
      %s742 = scalar_select %p741, %s34, 1
      %s743 = smul.addr %s742, 8
      %s744 = scalar_lea.vmem %s2, %s743
      %p745 = scmp.lt.s32.totalorder %s34, 1
      %s746 = scalar_select %p745, %s34, 1
      %s747 = smul.addr %s746, 8
      %s748 = scalar_lea.vmem %s3, %s747
      %p749 = scmp.lt.s32.totalorder %s34, 1
      %s750 = scalar_select %p749, %s34, 1
      %s751 = scalar_lea.vmem %s23, %s750
      %v752 = vld [vmem:[%s737] sm:$0xff]
      %v753 = vld [vmem:[%s4] sm:$0x1]
      %v754 = vld [vmem:[%s5] sm:$0x1]
      %vm755 = vcmask 261120
      %v756 = vsel %vm755, %v752, 0.0
      %757 = vadd.xlane.f32.xlu0 %v756
      %v758 = vpop.xlane.xlu0 %757
      %v759 = vrcp.pop 32.0
      %v760 = vmul.f32 32.0, %v759
      %v761 = vsub.f32 1.0, %v760
      %v762 = vmul.f32 %v759, %v761
      %v763 = vadd.f32 %v759, %v762
      %vm764 = vweird.f32 %v759
      %v765 = vsel %vm764, %v759, %v763
      %v766 = vmul.f32 %v758, %v765
      %v767 = vsub.f32 %v752, %v766
      %v768 = vmul.f32 %v767, %v767
      %v769 = vsel %vm755, %v768, 0.0
      %770 = vadd.xlane.f32.xlu0 %v769
      %v771 = vpop.xlane.xlu0 %770
      %v772 = vmul.f32 %v771, %v765
      %v773 = vadd.f32 %v772, 1e-12
      %v774 = vrsqrt.pop %v773
      %v775 = vmul.f32 %v774, %v773
      %v776 = vmul.f32 %v775, %v774
      %v777 = vmul.f32 0.5, %v776
      %v778 = vsub.f32 1.5, %v777
      %v779 = vmul.f32 %v774, %v778
      %vm780 = vweird.f32 %v773
      %vm781 = vweird.f32 %v774
      %vm782 = vmor %vm780, %vm781
      %v783 = vsel %vm782, %v774, %v779
      %v784 = vmul.f32 %v767, %v783
      %v786 = vperm.slane %v753, 0
      %v788 = vmul.f32 %v784, %v786
      %v790 = vperm.slane %v754, 0
      %v792 = vadd.f32 %v788, %v790
      %v793 = vld [vmem:[%s740] sm:$0x1]
      %v794 = vld [vmem:[%s9] sm:$0x1]
      %v795 = vld [vmem:[%s6] sm:$0xff]
      %v796 = vld [vmem:[%s6 + $0x8] sm:$0xff]
      %v797 = vld [vmem:[%s6 + $0x10] sm:$0xff]
      %v798 = vld [vmem:[%s6 + $0x18] sm:$0xff]
      %v799 = vld [vmem:[%s7] sm:$0x1]
      %v801 = vperm.slane %v799, 0
      %v804 = vsel %vm755, %v792, 0
      %806 = vmatpush.msra.mxu0 0.0
      %807 = vmatpush.msra.mxu0 0.0
      %808 = vmatpush.msra.mxu0 0.0
      %809 = vmatpush.msra.mxu0 0.0
      %810 = vmatpush.msra.mxu0 0.0
      %811 = vmatpush.msra.mxu0 0.0
      %812 = vmatpush.msra.mxu0 0.0
      %813 = vmatpush.msra.mxu0 0.0
      %814 = vmatpush.msra.mxu0 0.0
      %815 = vmatpush.msra.mxu0 0.0
      %816 = vmatpush.msra.mxu0 0.0
      %817 = vmatpush.msra.mxu0 0.0
      %818 = vmatpush.msra.mxu0 %v798
      %819 = vmatpush.msra.mxu0 %v797
      %820 = vmatpush.msra.mxu0 %v796
      %821 = vmatpush.msra.mxu0 %v795
      %822 = vmatmul.f32.gmra.mxu0 %v804
      %v823 = vpop.f32.mrf.mxu0
      %v824 = vadd.f32 %v801, %v823
      %825 = vdwg.mxu0
      %s826 = scalar_lea.vmem %s6, 32
      %v827 = vld [vmem:[%s826] sm:$0xff]
      %v828 = vld [vmem:[%s826 + $0x8] sm:$0xff]
      %v829 = vld [vmem:[%s826 + $0x10] sm:$0xff]
      %v830 = vld [vmem:[%s826 + $0x18] sm:$0xff]
      %s831 = scalar_lea.vmem %s7, 1
      %v832 = vld [vmem:[%s831] sm:$0x1]
      %v834 = vperm.slane %v832, 0
      %836 = vmatpush.msra.mxu0 0.0
      %837 = vmatpush.msra.mxu0 0.0
      %838 = vmatpush.msra.mxu0 0.0
      %839 = vmatpush.msra.mxu0 0.0
      %840 = vmatpush.msra.mxu0 0.0
      %841 = vmatpush.msra.mxu0 0.0
      %842 = vmatpush.msra.mxu0 0.0
      %843 = vmatpush.msra.mxu0 0.0
      %844 = vmatpush.msra.mxu0 0.0
      %845 = vmatpush.msra.mxu0 0.0
      %846 = vmatpush.msra.mxu0 0.0
      %847 = vmatpush.msra.mxu0 0.0
      %848 = vmatpush.msra.mxu0 %v830
      %849 = vmatpush.msra.mxu0 %v829
      %850 = vmatpush.msra.mxu0 %v828
      %851 = vmatpush.msra.mxu0 %v827
      %852 = vmatmul.f32.gmra.mxu0 %v804
      %v853 = vpop.f32.mrf.mxu0
      %v854 = vadd.f32 %v834, %v853
      %855 = vdwg.mxu0
      %s856 = scalar_lea.vmem %s6, 64
      %v857 = vld [vmem:[%s856] sm:$0xff]
      %v858 = vld [vmem:[%s856 + $0x8] sm:$0xff]
      %v859 = vld [vmem:[%s856 + $0x10] sm:$0xff]
      %v860 = vld [vmem:[%s856 + $0x18] sm:$0xff]
      %s861 = scalar_lea.vmem %s7, 2
      %v862 = vld [vmem:[%s861] sm:$0x1]
      %v864 = vperm.slane %v862, 0
      %866 = vmatpush.msra.mxu0 0.0
      %867 = vmatpush.msra.mxu0 0.0
      %868 = vmatpush.msra.mxu0 0.0
      %869 = vmatpush.msra.mxu0 0.0
      %870 = vmatpush.msra.mxu0 0.0
      %871 = vmatpush.msra.mxu0 0.0
      %872 = vmatpush.msra.mxu0 0.0
      %873 = vmatpush.msra.mxu0 0.0
      %874 = vmatpush.msra.mxu0 0.0
      %875 = vmatpush.msra.mxu0 0.0
      %876 = vmatpush.msra.mxu0 0.0
      %877 = vmatpush.msra.mxu0 0.0
      %878 = vmatpush.msra.mxu0 %v860
      %879 = vmatpush.msra.mxu0 %v859
      %880 = vmatpush.msra.mxu0 %v858
      %881 = vmatpush.msra.mxu0 %v857
      %882 = vmatmul.f32.gmra.mxu0 %v804
      %v883 = vpop.f32.mrf.mxu0
      %v884 = vadd.f32 %v864, %v883
      %885 = vdwg.mxu0
      %vm886 = vcmask 130048
      %v888 = vsel %vm886, %v824, 0
      %v891 = vsel %vm886, %v854, 0
      %893 = vmatpush.xpose.msra.mxu0 0.0
      %894 = vmatpush.xpose.msra.mxu0 0.0
      %895 = vmatpush.xpose.msra.mxu0 0.0
      %896 = vmatpush.xpose.msra.mxu0 0.0
      %897 = vmatpush.xpose.msra.mxu0 0.0
      %898 = vmatpush.xpose.msra.mxu0 0.0
      %899 = vmatpush.xpose.msra.mxu0 0.0
      %900 = vmatpush.xpose.msra.mxu0 0.0
      %901 = vmatpush.xpose.msra.mxu0 0.0
      %902 = vmatpush.xpose.msra.mxu0 0.0
      %903 = vmatpush.xpose.msra.mxu0 0.0
      %904 = vmatpush.xpose.msra.mxu0 0.0
      %905 = vmatpush.xpose.msra.mxu0 0.0
      %906 = vmatpush.xpose.msra.mxu0 0.0
      %907 = vmatpush.xpose.msra.mxu0 0.0
      %908 = vmatpush.xpose.msra.mxu0 %v891
      %909 = vmatmul.f32.gmra.mxu0 %v888
      %v910 = vpop.f32.mrf.mxu0
      %v911 = vadd.f32 0.0, %v910
      %912 = vdwg.mxu0
      %v913 = vmul.f32 %v911, 0.25
      %v915 = vperm.slane %v793, 0
      %v917 = vadd.f32 %v913, %v915
      %vm918 = vcmask 64512
      %v919 = vsel %vm918, %v917, -inf
      %920 = vmax.xlane.f32.xlu0 %v919
      %v921 = vpop.xlane.xlu0 %920
      %v922 = vsub.f32 %v917, %v921
      %v923 = vmul.f32 %v922, 1.442695
      %v924 = vpow.pop %v923
      %v925 = vsel %vm918, %v924, 0.0
      %926 = vadd.xlane.f32.xlu0 %v925
      %v927 = vpop.xlane.xlu0 %926
      %v928 = vrcp.pop %v927
      %v929 = vmul.f32 %v924, %v928
      %v931 = vsel %vm918, %v929, 0
      %933 = vmatpush.msra.mxu0 0.0
      %934 = vmatpush.msra.mxu0 0.0
      %935 = vmatpush.msra.mxu0 0.0
      %936 = vmatpush.msra.mxu0 0.0
      %937 = vmatpush.msra.mxu0 0.0
      %938 = vmatpush.msra.mxu0 0.0
      %939 = vmatpush.msra.mxu0 0.0
      %940 = vmatpush.msra.mxu0 0.0
      %941 = vmatpush.msra.mxu0 0.0
      %942 = vmatpush.msra.mxu0 0.0
      %943 = vmatpush.msra.mxu0 0.0
      %944 = vmatpush.msra.mxu0 0.0
      %945 = vmatpush.msra.mxu0 0.0
      %946 = vmatpush.msra.mxu0 0.0
      %947 = vmatpush.msra.mxu0 0.0
      %948 = vmatpush.msra.mxu0 %v884
      %949 = vmatmul.f32.gmra.mxu0 %v931
      %v950 = vpop.f32.mrf.mxu0
      %v951 = vadd.f32 0.0, %v950
      %952 = vdwg.mxu0
      %v953 = vld [vmem:[%s8] sm:$0xff]
      %v954 = vld [vmem:[%s8 + $0x8] sm:$0xff]
      %v956 = vsel %vm886, %v951, 0
      %958 = vmatpush.msra.mxu0 0.0
      %959 = vmatpush.msra.mxu0 0.0
      %960 = vmatpush.msra.mxu0 0.0
      %961 = vmatpush.msra.mxu0 0.0
      %962 = vmatpush.msra.mxu0 0.0
      %963 = vmatpush.msra.mxu0 0.0
      %964 = vmatpush.msra.mxu0 0.0
      %965 = vmatpush.msra.mxu0 0.0
      %966 = vmatpush.msra.mxu0 0.0
      %967 = vmatpush.msra.mxu0 0.0
      %968 = vmatpush.msra.mxu0 0.0
      %969 = vmatpush.msra.mxu0 0.0
      %970 = vmatpush.msra.mxu0 0.0
      %971 = vmatpush.msra.mxu0 0.0
      %972 = vmatpush.msra.mxu0 %v954
      %973 = vmatpush.msra.mxu0 %v953
      %974 = vmatmul.f32.gmra.mxu0 %v956
      %v975 = vpop.f32.mrf.mxu0
      %v976 = vadd.f32 0.0, %v975
      %977 = vdwg.mxu0
      %v979 = vperm.slane %v794, 0
      %v981 = vadd.f32 %v979, %v976
      %s982 = scalar_lea.vmem %s6, 96
      %v983 = vld [vmem:[%s982] sm:$0xff]
      %v984 = vld [vmem:[%s982 + $0x8] sm:$0xff]
      %v985 = vld [vmem:[%s982 + $0x10] sm:$0xff]
      %v986 = vld [vmem:[%s982 + $0x18] sm:$0xff]
      %s987 = scalar_lea.vmem %s7, 3
      %v988 = vld [vmem:[%s987] sm:$0x1]
      %v990 = vperm.slane %v988, 0
      %992 = vmatpush.msra.mxu0 0.0
      %993 = vmatpush.msra.mxu0 0.0
      %994 = vmatpush.msra.mxu0 0.0
      %995 = vmatpush.msra.mxu0 0.0
      %996 = vmatpush.msra.mxu0 0.0
      %997 = vmatpush.msra.mxu0 0.0
      %998 = vmatpush.msra.mxu0 0.0
      %999 = vmatpush.msra.mxu0 0.0
      %1000 = vmatpush.msra.mxu0 0.0
      %1001 = vmatpush.msra.mxu0 0.0
      %1002 = vmatpush.msra.mxu0 0.0
      %1003 = vmatpush.msra.mxu0 0.0
      %1004 = vmatpush.msra.mxu0 %v986
      %1005 = vmatpush.msra.mxu0 %v985
      %1006 = vmatpush.msra.mxu0 %v984
      %1007 = vmatpush.msra.mxu0 %v983
      %1008 = vmatmul.f32.gmra.mxu0 %v804
      %v1009 = vpop.f32.mrf.mxu0
      %v1010 = vadd.f32 %v990, %v1009
      %1011 = vdwg.mxu0
      %s1012 = scalar_lea.vmem %s6, 128
      %v1013 = vld [vmem:[%s1012] sm:$0xff]
      %v1014 = vld [vmem:[%s1012 + $0x8] sm:$0xff]
      %v1015 = vld [vmem:[%s1012 + $0x10] sm:$0xff]
      %v1016 = vld [vmem:[%s1012 + $0x18] sm:$0xff]
      %s1017 = scalar_lea.vmem %s7, 4
      %v1018 = vld [vmem:[%s1017] sm:$0x1]
      %v1020 = vperm.slane %v1018, 0
      %1022 = vmatpush.msra.mxu0 0.0
      %1023 = vmatpush.msra.mxu0 0.0
      %1024 = vmatpush.msra.mxu0 0.0
      %1025 = vmatpush.msra.mxu0 0.0
      %1026 = vmatpush.msra.mxu0 0.0
      %1027 = vmatpush.msra.mxu0 0.0
      %1028 = vmatpush.msra.mxu0 0.0
      %1029 = vmatpush.msra.mxu0 0.0
      %1030 = vmatpush.msra.mxu0 0.0
      %1031 = vmatpush.msra.mxu0 0.0
      %1032 = vmatpush.msra.mxu0 0.0
      %1033 = vmatpush.msra.mxu0 0.0
      %1034 = vmatpush.msra.mxu0 %v1016
      %1035 = vmatpush.msra.mxu0 %v1015
      %1036 = vmatpush.msra.mxu0 %v1014
      %1037 = vmatpush.msra.mxu0 %v1013
      %1038 = vmatmul.f32.gmra.mxu0 %v804
      %v1039 = vpop.f32.mrf.mxu0
      %v1040 = vadd.f32 %v1020, %v1039
      %1041 = vdwg.mxu0
      %s1042 = scalar_lea.vmem %s6, 160
      %v1043 = vld [vmem:[%s1042] sm:$0xff]
      %v1044 = vld [vmem:[%s1042 + $0x8] sm:$0xff]
      %v1045 = vld [vmem:[%s1042 + $0x10] sm:$0xff]
      %v1046 = vld [vmem:[%s1042 + $0x18] sm:$0xff]
      %s1047 = scalar_lea.vmem %s7, 5
      %v1048 = vld [vmem:[%s1047] sm:$0x1]
      %v1050 = vperm.slane %v1048, 0
      %1052 = vmatpush.msra.mxu0 0.0
      %1053 = vmatpush.msra.mxu0 0.0
      %1054 = vmatpush.msra.mxu0 0.0
      %1055 = vmatpush.msra.mxu0 0.0
      %1056 = vmatpush.msra.mxu0 0.0
      %1057 = vmatpush.msra.mxu0 0.0
      %1058 = vmatpush.msra.mxu0 0.0
      %1059 = vmatpush.msra.mxu0 0.0
      %1060 = vmatpush.msra.mxu0 0.0
      %1061 = vmatpush.msra.mxu0 0.0
      %1062 = vmatpush.msra.mxu0 0.0
      %1063 = vmatpush.msra.mxu0 0.0
      %1064 = vmatpush.msra.mxu0 %v1046
      %1065 = vmatpush.msra.mxu0 %v1045
      %1066 = vmatpush.msra.mxu0 %v1044
      %1067 = vmatpush.msra.mxu0 %v1043
      %1068 = vmatmul.f32.gmra.mxu0 %v804
      %v1069 = vpop.f32.mrf.mxu0
      %v1070 = vadd.f32 %v1050, %v1069
      %1071 = vdwg.mxu0
      %v1073 = vsel %vm886, %v1010, 0
      %v1076 = vsel %vm886, %v1040, 0
      %1078 = vmatpush.xpose.msra.mxu0 0.0
      %1079 = vmatpush.xpose.msra.mxu0 0.0
      %1080 = vmatpush.xpose.msra.mxu0 0.0
      %1081 = vmatpush.xpose.msra.mxu0 0.0
      %1082 = vmatpush.xpose.msra.mxu0 0.0
      %1083 = vmatpush.xpose.msra.mxu0 0.0
      %1084 = vmatpush.xpose.msra.mxu0 0.0
      %1085 = vmatpush.xpose.msra.mxu0 0.0
      %1086 = vmatpush.xpose.msra.mxu0 0.0
      %1087 = vmatpush.xpose.msra.mxu0 0.0
      %1088 = vmatpush.xpose.msra.mxu0 0.0
      %1089 = vmatpush.xpose.msra.mxu0 0.0
      %1090 = vmatpush.xpose.msra.mxu0 0.0
      %1091 = vmatpush.xpose.msra.mxu0 0.0
      %1092 = vmatpush.xpose.msra.mxu0 0.0
      %1093 = vmatpush.xpose.msra.mxu0 %v1076
      %1094 = vmatmul.f32.gmra.mxu0 %v1073
      %v1095 = vpop.f32.mrf.mxu0
      %v1096 = vadd.f32 0.0, %v1095
      %1097 = vdwg.mxu0
      %v1098 = vmul.f32 %v1096, 0.25
      %v1099 = vadd.f32 %v1098, %v915
      %v1100 = vsel %vm918, %v1099, -inf
      %1101 = vmax.xlane.f32.xlu0 %v1100
      %v1102 = vpop.xlane.xlu0 %1101
      %v1103 = vsub.f32 %v1099, %v1102
      %v1104 = vmul.f32 %v1103, 1.442695
      %v1105 = vpow.pop %v1104
      %v1106 = vsel %vm918, %v1105, 0.0
      %1107 = vadd.xlane.f32.xlu0 %v1106
      %v1108 = vpop.xlane.xlu0 %1107
      %v1109 = vrcp.pop %v1108
      %v1110 = vmul.f32 %v1105, %v1109
      %v1112 = vsel %vm918, %v1110, 0
      %1114 = vmatpush.msra.mxu0 0.0
      %1115 = vmatpush.msra.mxu0 0.0
      %1116 = vmatpush.msra.mxu0 0.0
      %1117 = vmatpush.msra.mxu0 0.0
      %1118 = vmatpush.msra.mxu0 0.0
      %1119 = vmatpush.msra.mxu0 0.0
      %1120 = vmatpush.msra.mxu0 0.0
      %1121 = vmatpush.msra.mxu0 0.0
      %1122 = vmatpush.msra.mxu0 0.0
      %1123 = vmatpush.msra.mxu0 0.0
      %1124 = vmatpush.msra.mxu0 0.0
      %1125 = vmatpush.msra.mxu0 0.0
      %1126 = vmatpush.msra.mxu0 0.0
      %1127 = vmatpush.msra.mxu0 0.0
      %1128 = vmatpush.msra.mxu0 0.0
      %1129 = vmatpush.msra.mxu0 %v1070
      %1130 = vmatmul.f32.gmra.mxu0 %v1112
      %v1131 = vpop.f32.mrf.mxu0
      %v1132 = vadd.f32 0.0, %v1131
      %1133 = vdwg.mxu0
      %s1134 = scalar_lea.vmem %s8, 16
      %v1135 = vld [vmem:[%s1134] sm:$0xff]
      %v1136 = vld [vmem:[%s1134 + $0x8] sm:$0xff]
      %v1138 = vsel %vm886, %v1132, 0
      %1140 = vmatpush.msra.mxu0 0.0
      %1141 = vmatpush.msra.mxu0 0.0
      %1142 = vmatpush.msra.mxu0 0.0
      %1143 = vmatpush.msra.mxu0 0.0
      %1144 = vmatpush.msra.mxu0 0.0
      %1145 = vmatpush.msra.mxu0 0.0
      %1146 = vmatpush.msra.mxu0 0.0
      %1147 = vmatpush.msra.mxu0 0.0
      %1148 = vmatpush.msra.mxu0 0.0
      %1149 = vmatpush.msra.mxu0 0.0
      %1150 = vmatpush.msra.mxu0 0.0
      %1151 = vmatpush.msra.mxu0 0.0
      %1152 = vmatpush.msra.mxu0 0.0
      %1153 = vmatpush.msra.mxu0 0.0
      %1154 = vmatpush.msra.mxu0 %v1136
      %1155 = vmatpush.msra.mxu0 %v1135
      %1156 = vmatmul.f32.gmra.mxu0 %v1138
      %v1157 = vpop.f32.mrf.mxu0
      %v1158 = vadd.f32 0.0, %v1157
      %1159 = vdwg.mxu0
      %v1160 = vadd.f32 %v981, %v1158
      %v1161 = vadd.f32 %v1160, %v792
      %v1162 = vld [vmem:[%s10] sm:$0x1]
      %v1163 = vld [vmem:[%s11] sm:$0x1]
      %v1164 = vsel %vm755, %v1161, 0.0
      %1165 = vadd.xlane.f32.xlu0 %v1164
      %v1166 = vpop.xlane.xlu0 %1165
      %v1167 = vmul.f32 %v1166, %v765
      %v1168 = vsub.f32 %v1161, %v1167
      %v1169 = vmul.f32 %v1168, %v1168
      %v1170 = vsel %vm755, %v1169, 0.0
      %1171 = vadd.xlane.f32.xlu0 %v1170
      %v1172 = vpop.xlane.xlu0 %1171
      %v1173 = vmul.f32 %v1172, %v765
      %v1174 = vadd.f32 %v1173, 1e-12
      %v1175 = vrsqrt.pop %v1174
      %v1176 = vmul.f32 %v1175, %v1174
      %v1177 = vmul.f32 %v1176, %v1175
      %v1178 = vmul.f32 0.5, %v1177
      %v1179 = vsub.f32 1.5, %v1178
      %v1180 = vmul.f32 %v1175, %v1179
      %vm1181 = vweird.f32 %v1174
      %vm1182 = vweird.f32 %v1175
      %vm1183 = vmor %vm1181, %vm1182
      %v1184 = vsel %vm1183, %v1175, %v1180
      %v1185 = vmul.f32 %v1168, %v1184
      %v1187 = vperm.slane %v1162, 0
      %v1189 = vmul.f32 %v1185, %v1187
      %v1191 = vperm.slane %v1163, 0
      %v1193 = vadd.f32 %v1189, %v1191
      %v1194 = vld [vmem:[%s12] sm:$0xff]
      %v1195 = vld [vmem:[%s12 + $0x8] sm:$0xff]
      %v1196 = vld [vmem:[%s12 + $0x10] sm:$0xff]
      %v1197 = vld [vmem:[%s12 + $0x18] sm:$0xff]
      %v1198 = vld [vmem:[%s13] sm:$0x1]
      %v1200 = vperm.slane %v1198, 0
      %v1203 = vsel %vm755, %v1193, 0
      %1205 = vmatpush.msra.mxu0 0.0
      %1206 = vmatpush.msra.mxu0 0.0
      %1207 = vmatpush.msra.mxu0 0.0
      %1208 = vmatpush.msra.mxu0 0.0
      %1209 = vmatpush.msra.mxu0 0.0
      %1210 = vmatpush.msra.mxu0 0.0
      %1211 = vmatpush.msra.mxu0 0.0
      %1212 = vmatpush.msra.mxu0 0.0
      %1213 = vmatpush.msra.mxu0 0.0
      %1214 = vmatpush.msra.mxu0 0.0
      %1215 = vmatpush.msra.mxu0 0.0
      %1216 = vmatpush.msra.mxu0 0.0
      %1217 = vmatpush.msra.mxu0 %v1197
      %1218 = vmatpush.msra.mxu0 %v1196
      %1219 = vmatpush.msra.mxu0 %v1195
      %1220 = vmatpush.msra.mxu0 %v1194
      %1221 = vmatmul.f32.gmra.mxu0 %v1203
      %v1222 = vpop.f32.mrf.mxu0
      %v1223 = vadd.f32 %v1200, %v1222
      %1224 = vdwg.mxu0
      %v1225 = vmul.f32 %v1223, 0.5
      %v1226 = vmul.f32 %v1223, 0.044715
      %v1227 = vmul.f32 %v1226, %v1223
      %v1228 = vmul.f32 %v1227, %v1223
      %v1229 = vadd.f32 %v1223, %v1228
      %v1230 = vmul.f32 %v1229, 0.7978846
      %v1231 = vtanh.pop %v1230
      %v1232 = vadd.f32 %v1231, 1.0
      %v1233 = vmul.f32 %v1225, %v1232
      %v1234 = vld [vmem:[%s14] sm:$0xff]
      %v1235 = vld [vmem:[%s14 + $0x8] sm:$0xff]
      %v1236 = vld [vmem:[%s14 + $0x10] sm:$0xff]
      %v1237 = vld [vmem:[%s14 + $0x18] sm:$0xff]
      %v1238 = vld [vmem:[%s14 + $0x20] sm:$0xff]
      %v1239 = vld [vmem:[%s14 + $0x28] sm:$0xff]
      %v1240 = vld [vmem:[%s14 + $0x30] sm:$0xff]
      %v1241 = vld [vmem:[%s14 + $0x38] sm:$0xff]
      %v1242 = vld [vmem:[%s15] sm:$0x1]
      %v1244 = vperm.slane %v1242, 0
      %vm1246 = vcmask 523264
      %v1248 = vsel %vm1246, %v1233, 0
      %1250 = vmatpush.msra.mxu0 0.0
      %1251 = vmatpush.msra.mxu0 0.0
      %1252 = vmatpush.msra.mxu0 0.0
      %1253 = vmatpush.msra.mxu0 0.0
      %1254 = vmatpush.msra.mxu0 0.0
      %1255 = vmatpush.msra.mxu0 0.0
      %1256 = vmatpush.msra.mxu0 0.0
      %1257 = vmatpush.msra.mxu0 0.0
      %1258 = vmatpush.msra.mxu0 %v1241
      %1259 = vmatpush.msra.mxu0 %v1240
      %1260 = vmatpush.msra.mxu0 %v1239
      %1261 = vmatpush.msra.mxu0 %v1238
      %1262 = vmatpush.msra.mxu0 %v1237
      %1263 = vmatpush.msra.mxu0 %v1236
      %1264 = vmatpush.msra.mxu0 %v1235
      %1265 = vmatpush.msra.mxu0 %v1234
      %1266 = vmatmul.f32.gmra.mxu0 %v1248
      %v1267 = vpop.f32.mrf.mxu0
      %v1268 = vadd.f32 %v1244, %v1267
      %1269 = vdwg.mxu0
      %v1270 = vadd.f32 %v1268, %v1193
      %v1271 = vld [vmem:[%s16] sm:$0x1]
      %v1272 = vld [vmem:[%s17] sm:$0x1]
      %v1273 = vsel %vm755, %v1270, 0.0
      %1274 = vadd.xlane.f32.xlu0 %v1273
      %v1275 = vpop.xlane.xlu0 %1274
      %v1276 = vmul.f32 %v1275, %v765
      %v1277 = vsub.f32 %v1270, %v1276
      %v1278 = vmul.f32 %v1277, %v1277
      %v1279 = vsel %vm755, %v1278, 0.0
      %1280 = vadd.xlane.f32.xlu0 %v1279
      %v1281 = vpop.xlane.xlu0 %1280
      %v1282 = vmul.f32 %v1281, %v765
      %v1283 = vadd.f32 %v1282, 1e-12
      %v1284 = vrsqrt.pop %v1283
      %v1285 = vmul.f32 %v1284, %v1283
      %v1286 = vmul.f32 %v1285, %v1284
      %v1287 = vmul.f32 0.5, %v1286
      %v1288 = vsub.f32 1.5, %v1287
      %v1289 = vmul.f32 %v1284, %v1288
      %vm1290 = vweird.f32 %v1283
      %vm1291 = vweird.f32 %v1284
      %vm1292 = vmor %vm1290, %vm1291
      %v1293 = vsel %vm1292, %v1284, %v1289
      %v1294 = vmul.f32 %v1277, %v1293
      %v1296 = vperm.slane %v1271, 0
      %v1298 = vmul.f32 %v1294, %v1296
      %v1300 = vperm.slane %v1272, 0
      %v1302 = vadd.f32 %v1298, %v1300
      %s1303 = scalar_lea.vmem %s9, 1
      %v1304 = vld [vmem:[%s1303] sm:$0x1]
      %s1305 = scalar_lea.vmem %s6, 192
      %v1306 = vld [vmem:[%s1305] sm:$0xff]
      %v1307 = vld [vmem:[%s1305 + $0x8] sm:$0xff]
      %v1308 = vld [vmem:[%s1305 + $0x10] sm:$0xff]
      %v1309 = vld [vmem:[%s1305 + $0x18] sm:$0xff]
      %s1310 = scalar_lea.vmem %s7, 6
      %v1311 = vld [vmem:[%s1310] sm:$0x1]
      %v1313 = vperm.slane %v1311, 0
      %v1316 = vsel %vm755, %v1302, 0
      %1318 = vmatpush.msra.mxu0 0.0
      %1319 = vmatpush.msra.mxu0 0.0
      %1320 = vmatpush.msra.mxu0 0.0
      %1321 = vmatpush.msra.mxu0 0.0
      %1322 = vmatpush.msra.mxu0 0.0
      %1323 = vmatpush.msra.mxu0 0.0
      %1324 = vmatpush.msra.mxu0 0.0
      %1325 = vmatpush.msra.mxu0 0.0
      %1326 = vmatpush.msra.mxu0 0.0
      %1327 = vmatpush.msra.mxu0 0.0
      %1328 = vmatpush.msra.mxu0 0.0
      %1329 = vmatpush.msra.mxu0 0.0
      %1330 = vmatpush.msra.mxu0 %v1309
      %1331 = vmatpush.msra.mxu0 %v1308
      %1332 = vmatpush.msra.mxu0 %v1307
      %1333 = vmatpush.msra.mxu0 %v1306
      %1334 = vmatmul.f32.gmra.mxu0 %v1316
      %v1335 = vpop.f32.mrf.mxu0
      %v1336 = vadd.f32 %v1313, %v1335
      %1337 = vdwg.mxu0
      %s1338 = scalar_lea.vmem %s6, 224
      %v1339 = vld [vmem:[%s1338] sm:$0xff]
      %v1340 = vld [vmem:[%s1338 + $0x8] sm:$0xff]
      %v1341 = vld [vmem:[%s1338 + $0x10] sm:$0xff]
      %v1342 = vld [vmem:[%s1338 + $0x18] sm:$0xff]
      %s1343 = scalar_lea.vmem %s7, 7
      %v1344 = vld [vmem:[%s1343] sm:$0x1]
      %v1346 = vperm.slane %v1344, 0
      %1348 = vmatpush.msra.mxu0 0.0
      %1349 = vmatpush.msra.mxu0 0.0
      %1350 = vmatpush.msra.mxu0 0.0
      %1351 = vmatpush.msra.mxu0 0.0
      %1352 = vmatpush.msra.mxu0 0.0
      %1353 = vmatpush.msra.mxu0 0.0
      %1354 = vmatpush.msra.mxu0 0.0
      %1355 = vmatpush.msra.mxu0 0.0
      %1356 = vmatpush.msra.mxu0 0.0
      %1357 = vmatpush.msra.mxu0 0.0
      %1358 = vmatpush.msra.mxu0 0.0
      %1359 = vmatpush.msra.mxu0 0.0
      %1360 = vmatpush.msra.mxu0 %v1342
      %1361 = vmatpush.msra.mxu0 %v1341
      %1362 = vmatpush.msra.mxu0 %v1340
      %1363 = vmatpush.msra.mxu0 %v1339
      %1364 = vmatmul.f32.gmra.mxu0 %v1316
      %v1365 = vpop.f32.mrf.mxu0
      %v1366 = vadd.f32 %v1346, %v1365
      %1367 = vdwg.mxu0
      %s1368 = scalar_lea.vmem %s6, 256
      %v1369 = vld [vmem:[%s1368] sm:$0xff]
      %v1370 = vld [vmem:[%s1368 + $0x8] sm:$0xff]
      %v1371 = vld [vmem:[%s1368 + $0x10] sm:$0xff]
      %v1372 = vld [vmem:[%s1368 + $0x18] sm:$0xff]
      %s1373 = scalar_lea.vmem %s7, 8
      %v1374 = vld [vmem:[%s1373] sm:$0x1]
      %v1376 = vperm.slane %v1374, 0
      %1378 = vmatpush.msra.mxu0 0.0
      %1379 = vmatpush.msra.mxu0 0.0
      %1380 = vmatpush.msra.mxu0 0.0
      %1381 = vmatpush.msra.mxu0 0.0
      %1382 = vmatpush.msra.mxu0 0.0
      %1383 = vmatpush.msra.mxu0 0.0
      %1384 = vmatpush.msra.mxu0 0.0
      %1385 = vmatpush.msra.mxu0 0.0
      %1386 = vmatpush.msra.mxu0 0.0
      %1387 = vmatpush.msra.mxu0 0.0
      %1388 = vmatpush.msra.mxu0 0.0
      %1389 = vmatpush.msra.mxu0 0.0
      %1390 = vmatpush.msra.mxu0 %v1372
      %1391 = vmatpush.msra.mxu0 %v1371
      %1392 = vmatpush.msra.mxu0 %v1370
      %1393 = vmatpush.msra.mxu0 %v1369
      %1394 = vmatmul.f32.gmra.mxu0 %v1316
      %v1395 = vpop.f32.mrf.mxu0
      %v1396 = vadd.f32 %v1376, %v1395
      %1397 = vdwg.mxu0
      %v1399 = vsel %vm886, %v1336, 0
      %v1402 = vsel %vm886, %v1366, 0
      %1404 = vmatpush.xpose.msra.mxu0 0.0
      %1405 = vmatpush.xpose.msra.mxu0 0.0
      %1406 = vmatpush.xpose.msra.mxu0 0.0
      %1407 = vmatpush.xpose.msra.mxu0 0.0
      %1408 = vmatpush.xpose.msra.mxu0 0.0
      %1409 = vmatpush.xpose.msra.mxu0 0.0
      %1410 = vmatpush.xpose.msra.mxu0 0.0
      %1411 = vmatpush.xpose.msra.mxu0 0.0
      %1412 = vmatpush.xpose.msra.mxu0 0.0
      %1413 = vmatpush.xpose.msra.mxu0 0.0
      %1414 = vmatpush.xpose.msra.mxu0 0.0
      %1415 = vmatpush.xpose.msra.mxu0 0.0
      %1416 = vmatpush.xpose.msra.mxu0 0.0
      %1417 = vmatpush.xpose.msra.mxu0 0.0
      %1418 = vmatpush.xpose.msra.mxu0 0.0
      %1419 = vmatpush.xpose.msra.mxu0 %v1402
      %1420 = vmatmul.f32.gmra.mxu0 %v1399
      %v1421 = vpop.f32.mrf.mxu0
      %v1422 = vadd.f32 0.0, %v1421
      %1423 = vdwg.mxu0
      %v1424 = vmul.f32 %v1422, 0.25
      %v1425 = vadd.f32 %v1424, %v915
      %v1426 = vsel %vm918, %v1425, -inf
      %1427 = vmax.xlane.f32.xlu0 %v1426
      %v1428 = vpop.xlane.xlu0 %1427
      %v1429 = vsub.f32 %v1425, %v1428
      %v1430 = vmul.f32 %v1429, 1.442695
      %v1431 = vpow.pop %v1430
      %v1432 = vsel %vm918, %v1431, 0.0
      %1433 = vadd.xlane.f32.xlu0 %v1432
      %v1434 = vpop.xlane.xlu0 %1433
      %v1435 = vrcp.pop %v1434
      %v1436 = vmul.f32 %v1431, %v1435
      %v1438 = vsel %vm918, %v1436, 0
      %1440 = vmatpush.msra.mxu0 0.0
      %1441 = vmatpush.msra.mxu0 0.0
      %1442 = vmatpush.msra.mxu0 0.0
      %1443 = vmatpush.msra.mxu0 0.0
      %1444 = vmatpush.msra.mxu0 0.0
      %1445 = vmatpush.msra.mxu0 0.0
      %1446 = vmatpush.msra.mxu0 0.0
      %1447 = vmatpush.msra.mxu0 0.0
      %1448 = vmatpush.msra.mxu0 0.0
      %1449 = vmatpush.msra.mxu0 0.0
      %1450 = vmatpush.msra.mxu0 0.0
      %1451 = vmatpush.msra.mxu0 0.0
      %1452 = vmatpush.msra.mxu0 0.0
      %1453 = vmatpush.msra.mxu0 0.0
      %1454 = vmatpush.msra.mxu0 0.0
      %1455 = vmatpush.msra.mxu0 %v1396
      %1456 = vmatmul.f32.gmra.mxu0 %v1438
      %v1457 = vpop.f32.mrf.mxu0
      %v1458 = vadd.f32 0.0, %v1457
      %1459 = vdwg.mxu0
      %s1460 = scalar_lea.vmem %s8, 32
      %v1461 = vld [vmem:[%s1460] sm:$0xff]
      %v1462 = vld [vmem:[%s1460 + $0x8] sm:$0xff]
      %v1464 = vsel %vm886, %v1458, 0
      %1466 = vmatpush.msra.mxu0 0.0
      %1467 = vmatpush.msra.mxu0 0.0
      %1468 = vmatpush.msra.mxu0 0.0
      %1469 = vmatpush.msra.mxu0 0.0
      %1470 = vmatpush.msra.mxu0 0.0
      %1471 = vmatpush.msra.mxu0 0.0
      %1472 = vmatpush.msra.mxu0 0.0
      %1473 = vmatpush.msra.mxu0 0.0
      %1474 = vmatpush.msra.mxu0 0.0
      %1475 = vmatpush.msra.mxu0 0.0
      %1476 = vmatpush.msra.mxu0 0.0
      %1477 = vmatpush.msra.mxu0 0.0
      %1478 = vmatpush.msra.mxu0 0.0
      %1479 = vmatpush.msra.mxu0 0.0
      %1480 = vmatpush.msra.mxu0 %v1462
      %1481 = vmatpush.msra.mxu0 %v1461
      %1482 = vmatmul.f32.gmra.mxu0 %v1464
      %v1483 = vpop.f32.mrf.mxu0
      %v1484 = vadd.f32 0.0, %v1483
      %1485 = vdwg.mxu0
      %v1487 = vperm.slane %v1304, 0
      %v1489 = vadd.f32 %v1487, %v1484
      %s1490 = scalar_lea.vmem %s6, 288
      %v1491 = vld [vmem:[%s1490] sm:$0xff]
      %v1492 = vld [vmem:[%s1490 + $0x8] sm:$0xff]
      %v1493 = vld [vmem:[%s1490 + $0x10] sm:$0xff]
      %v1494 = vld [vmem:[%s1490 + $0x18] sm:$0xff]
      %s1495 = scalar_lea.vmem %s7, 9
      %v1496 = vld [vmem:[%s1495] sm:$0x1]
      %v1498 = vperm.slane %v1496, 0
      %1500 = vmatpush.msra.mxu0 0.0
      %1501 = vmatpush.msra.mxu0 0.0
      %1502 = vmatpush.msra.mxu0 0.0
      %1503 = vmatpush.msra.mxu0 0.0
      %1504 = vmatpush.msra.mxu0 0.0
      %1505 = vmatpush.msra.mxu0 0.0
      %1506 = vmatpush.msra.mxu0 0.0
      %1507 = vmatpush.msra.mxu0 0.0
      %1508 = vmatpush.msra.mxu0 0.0
      %1509 = vmatpush.msra.mxu0 0.0
      %1510 = vmatpush.msra.mxu0 0.0
      %1511 = vmatpush.msra.mxu0 0.0
      %1512 = vmatpush.msra.mxu0 %v1494
      %1513 = vmatpush.msra.mxu0 %v1493
      %1514 = vmatpush.msra.mxu0 %v1492
      %1515 = vmatpush.msra.mxu0 %v1491
      %1516 = vmatmul.f32.gmra.mxu0 %v1316
      %v1517 = vpop.f32.mrf.mxu0
      %v1518 = vadd.f32 %v1498, %v1517
      %1519 = vdwg.mxu0
      %s1520 = scalar_lea.vmem %s6, 320
      %v1521 = vld [vmem:[%s1520] sm:$0xff]
      %v1522 = vld [vmem:[%s1520 + $0x8] sm:$0xff]
      %v1523 = vld [vmem:[%s1520 + $0x10] sm:$0xff]
      %v1524 = vld [vmem:[%s1520 + $0x18] sm:$0xff]
      %s1525 = scalar_lea.vmem %s7, 10
      %v1526 = vld [vmem:[%s1525] sm:$0x1]
      %v1528 = vperm.slane %v1526, 0
      %1530 = vmatpush.msra.mxu0 0.0
      %1531 = vmatpush.msra.mxu0 0.0
      %1532 = vmatpush.msra.mxu0 0.0
      %1533 = vmatpush.msra.mxu0 0.0
      %1534 = vmatpush.msra.mxu0 0.0
      %1535 = vmatpush.msra.mxu0 0.0
      %1536 = vmatpush.msra.mxu0 0.0
      %1537 = vmatpush.msra.mxu0 0.0
      %1538 = vmatpush.msra.mxu0 0.0
      %1539 = vmatpush.msra.mxu0 0.0
      %1540 = vmatpush.msra.mxu0 0.0
      %1541 = vmatpush.msra.mxu0 0.0
      %1542 = vmatpush.msra.mxu0 %v1524
      %1543 = vmatpush.msra.mxu0 %v1523
      %1544 = vmatpush.msra.mxu0 %v1522
      %1545 = vmatpush.msra.mxu0 %v1521
      %1546 = vmatmul.f32.gmra.mxu0 %v1316
      %v1547 = vpop.f32.mrf.mxu0
      %v1548 = vadd.f32 %v1528, %v1547
      %1549 = vdwg.mxu0
      %s1550 = scalar_lea.vmem %s6, 352
      %v1551 = vld [vmem:[%s1550] sm:$0xff]
      %v1552 = vld [vmem:[%s1550 + $0x8] sm:$0xff]
      %v1553 = vld [vmem:[%s1550 + $0x10] sm:$0xff]
      %v1554 = vld [vmem:[%s1550 + $0x18] sm:$0xff]
      %s1555 = scalar_lea.vmem %s7, 11
      %v1556 = vld [vmem:[%s1555] sm:$0x1]
      %v1558 = vperm.slane %v1556, 0
      %1560 = vmatpush.msra.mxu0 0.0
      %1561 = vmatpush.msra.mxu0 0.0
      %1562 = vmatpush.msra.mxu0 0.0
      %1563 = vmatpush.msra.mxu0 0.0
      %1564 = vmatpush.msra.mxu0 0.0
      %1565 = vmatpush.msra.mxu0 0.0
      %1566 = vmatpush.msra.mxu0 0.0
      %1567 = vmatpush.msra.mxu0 0.0
      %1568 = vmatpush.msra.mxu0 0.0
      %1569 = vmatpush.msra.mxu0 0.0
      %1570 = vmatpush.msra.mxu0 0.0
      %1571 = vmatpush.msra.mxu0 0.0
      %1572 = vmatpush.msra.mxu0 %v1554
      %1573 = vmatpush.msra.mxu0 %v1553
      %1574 = vmatpush.msra.mxu0 %v1552
      %1575 = vmatpush.msra.mxu0 %v1551
      %1576 = vmatmul.f32.gmra.mxu0 %v1316
      %v1577 = vpop.f32.mrf.mxu0
      %v1578 = vadd.f32 %v1558, %v1577
      %1579 = vdwg.mxu0
      %v1581 = vsel %vm886, %v1518, 0
      %v1584 = vsel %vm886, %v1548, 0
      %1586 = vmatpush.xpose.msra.mxu0 0.0
      %1587 = vmatpush.xpose.msra.mxu0 0.0
      %1588 = vmatpush.xpose.msra.mxu0 0.0
      %1589 = vmatpush.xpose.msra.mxu0 0.0
      %1590 = vmatpush.xpose.msra.mxu0 0.0
      %1591 = vmatpush.xpose.msra.mxu0 0.0
      %1592 = vmatpush.xpose.msra.mxu0 0.0
      %1593 = vmatpush.xpose.msra.mxu0 0.0
      %1594 = vmatpush.xpose.msra.mxu0 0.0
      %1595 = vmatpush.xpose.msra.mxu0 0.0
      %1596 = vmatpush.xpose.msra.mxu0 0.0
      %1597 = vmatpush.xpose.msra.mxu0 0.0
      %1598 = vmatpush.xpose.msra.mxu0 0.0
      %1599 = vmatpush.xpose.msra.mxu0 0.0
      %1600 = vmatpush.xpose.msra.mxu0 0.0
      %1601 = vmatpush.xpose.msra.mxu0 %v1584
      %1602 = vmatmul.f32.gmra.mxu0 %v1581
      %v1603 = vpop.f32.mrf.mxu0
      %v1604 = vadd.f32 0.0, %v1603
      %1605 = vdwg.mxu0
      %v1606 = vmul.f32 %v1604, 0.25
      %v1607 = vadd.f32 %v1606, %v915
      %v1608 = vsel %vm918, %v1607, -inf
      %1609 = vmax.xlane.f32.xlu0 %v1608
      %v1610 = vpop.xlane.xlu0 %1609
      %v1611 = vsub.f32 %v1607, %v1610
      %v1612 = vmul.f32 %v1611, 1.442695
      %v1613 = vpow.pop %v1612
      %v1614 = vsel %vm918, %v1613, 0.0
      %1615 = vadd.xlane.f32.xlu0 %v1614
      %v1616 = vpop.xlane.xlu0 %1615
      %v1617 = vrcp.pop %v1616
      %v1618 = vmul.f32 %v1613, %v1617
      %v1620 = vsel %vm918, %v1618, 0
      %1622 = vmatpush.msra.mxu0 0.0
      %1623 = vmatpush.msra.mxu0 0.0
      %1624 = vmatpush.msra.mxu0 0.0
      %1625 = vmatpush.msra.mxu0 0.0
      %1626 = vmatpush.msra.mxu0 0.0
      %1627 = vmatpush.msra.mxu0 0.0
      %1628 = vmatpush.msra.mxu0 0.0
      %1629 = vmatpush.msra.mxu0 0.0
      %1630 = vmatpush.msra.mxu0 0.0
      %1631 = vmatpush.msra.mxu0 0.0
      %1632 = vmatpush.msra.mxu0 0.0
      %1633 = vmatpush.msra.mxu0 0.0
      %1634 = vmatpush.msra.mxu0 0.0
      %1635 = vmatpush.msra.mxu0 0.0
      %1636 = vmatpush.msra.mxu0 0.0
      %1637 = vmatpush.msra.mxu0 %v1578
      %1638 = vmatmul.f32.gmra.mxu0 %v1620
      %v1639 = vpop.f32.mrf.mxu0
      %v1640 = vadd.f32 0.0, %v1639
      %1641 = vdwg.mxu0
      %s1642 = scalar_lea.vmem %s8, 48
      %v1643 = vld [vmem:[%s1642] sm:$0xff]
      %v1644 = vld [vmem:[%s1642 + $0x8] sm:$0xff]
      %v1646 = vsel %vm886, %v1640, 0
      %1648 = vmatpush.msra.mxu0 0.0
      %1649 = vmatpush.msra.mxu0 0.0
      %1650 = vmatpush.msra.mxu0 0.0
      %1651 = vmatpush.msra.mxu0 0.0
      %1652 = vmatpush.msra.mxu0 0.0
      %1653 = vmatpush.msra.mxu0 0.0
      %1654 = vmatpush.msra.mxu0 0.0
      %1655 = vmatpush.msra.mxu0 0.0
      %1656 = vmatpush.msra.mxu0 0.0
      %1657 = vmatpush.msra.mxu0 0.0
      %1658 = vmatpush.msra.mxu0 0.0
      %1659 = vmatpush.msra.mxu0 0.0
      %1660 = vmatpush.msra.mxu0 0.0
      %1661 = vmatpush.msra.mxu0 0.0
      %1662 = vmatpush.msra.mxu0 %v1644
      %1663 = vmatpush.msra.mxu0 %v1643
      %1664 = vmatmul.f32.gmra.mxu0 %v1646
      %v1665 = vpop.f32.mrf.mxu0
      %v1666 = vadd.f32 0.0, %v1665
      %1667 = vdwg.mxu0
      %v1668 = vadd.f32 %v1489, %v1666
      %v1669 = vadd.f32 %v1668, %v1302
      %s1670 = scalar_lea.vmem %s10, 1
      %v1671 = vld [vmem:[%s1670] sm:$0x1]
      %s1672 = scalar_lea.vmem %s11, 1
      %v1673 = vld [vmem:[%s1672] sm:$0x1]
      %v1674 = vsel %vm755, %v1669, 0.0
      %1675 = vadd.xlane.f32.xlu0 %v1674
      %v1676 = vpop.xlane.xlu0 %1675
      %v1677 = vmul.f32 %v1676, %v765
      %v1678 = vsub.f32 %v1669, %v1677
      %v1679 = vmul.f32 %v1678, %v1678
      %v1680 = vsel %vm755, %v1679, 0.0
      %1681 = vadd.xlane.f32.xlu0 %v1680
      %v1682 = vpop.xlane.xlu0 %1681
      %v1683 = vmul.f32 %v1682, %v765
      %v1684 = vadd.f32 %v1683, 1e-12
      %v1685 = vrsqrt.pop %v1684
      %v1686 = vmul.f32 %v1685, %v1684
      %v1687 = vmul.f32 %v1686, %v1685
      %v1688 = vmul.f32 0.5, %v1687
      %v1689 = vsub.f32 1.5, %v1688
      %v1690 = vmul.f32 %v1685, %v1689
      %vm1691 = vweird.f32 %v1684
      %vm1692 = vweird.f32 %v1685
      %vm1693 = vmor %vm1691, %vm1692
      %v1694 = vsel %vm1693, %v1685, %v1690
      %v1695 = vmul.f32 %v1678, %v1694
      %v1697 = vperm.slane %v1671, 0
      %v1699 = vmul.f32 %v1695, %v1697
      %v1701 = vperm.slane %v1673, 0
      %v1703 = vadd.f32 %v1699, %v1701
      %s1704 = scalar_lea.vmem %s12, 32
      %v1705 = vld [vmem:[%s1704] sm:$0xff]
      %v1706 = vld [vmem:[%s1704 + $0x8] sm:$0xff]
      %v1707 = vld [vmem:[%s1704 + $0x10] sm:$0xff]
      %v1708 = vld [vmem:[%s1704 + $0x18] sm:$0xff]
      %s1709 = scalar_lea.vmem %s13, 1
      %v1710 = vld [vmem:[%s1709] sm:$0x1]
      %v1712 = vperm.slane %v1710, 0
      %v1715 = vsel %vm755, %v1703, 0
      %1717 = vmatpush.msra.mxu0 0.0
      %1718 = vmatpush.msra.mxu0 0.0
      %1719 = vmatpush.msra.mxu0 0.0
      %1720 = vmatpush.msra.mxu0 0.0
      %1721 = vmatpush.msra.mxu0 0.0
      %1722 = vmatpush.msra.mxu0 0.0
      %1723 = vmatpush.msra.mxu0 0.0
      %1724 = vmatpush.msra.mxu0 0.0
      %1725 = vmatpush.msra.mxu0 0.0
      %1726 = vmatpush.msra.mxu0 0.0
      %1727 = vmatpush.msra.mxu0 0.0
      %1728 = vmatpush.msra.mxu0 0.0
      %1729 = vmatpush.msra.mxu0 %v1708
      %1730 = vmatpush.msra.mxu0 %v1707
      %1731 = vmatpush.msra.mxu0 %v1706
      %1732 = vmatpush.msra.mxu0 %v1705
      %1733 = vmatmul.f32.gmra.mxu0 %v1715
      %v1734 = vpop.f32.mrf.mxu0
      %v1735 = vadd.f32 %v1712, %v1734
      %1736 = vdwg.mxu0
      %v1737 = vmul.f32 %v1735, 0.5
      %v1738 = vmul.f32 %v1735, 0.044715
      %v1739 = vmul.f32 %v1738, %v1735
      %v1740 = vmul.f32 %v1739, %v1735
      %v1741 = vadd.f32 %v1735, %v1740
      %v1742 = vmul.f32 %v1741, 0.7978846
      %v1743 = vtanh.pop %v1742
      %v1744 = vadd.f32 %v1743, 1.0
      %v1745 = vmul.f32 %v1737, %v1744
      %s1746 = scalar_lea.vmem %s14, 64
      %v1747 = vld [vmem:[%s1746] sm:$0xff]
      %v1748 = vld [vmem:[%s1746 + $0x8] sm:$0xff]
      %v1749 = vld [vmem:[%s1746 + $0x10] sm:$0xff]
      %v1750 = vld [vmem:[%s1746 + $0x18] sm:$0xff]
      %v1751 = vld [vmem:[%s1746 + $0x20] sm:$0xff]
      %v1752 = vld [vmem:[%s1746 + $0x28] sm:$0xff]
      %v1753 = vld [vmem:[%s1746 + $0x30] sm:$0xff]
      %v1754 = vld [vmem:[%s1746 + $0x38] sm:$0xff]
      %s1755 = scalar_lea.vmem %s15, 1
      %v1756 = vld [vmem:[%s1755] sm:$0x1]
      %v1758 = vperm.slane %v1756, 0
      %v1761 = vsel %vm1246, %v1745, 0
      %1763 = vmatpush.msra.mxu0 0.0
      %1764 = vmatpush.msra.mxu0 0.0
      %1765 = vmatpush.msra.mxu0 0.0
      %1766 = vmatpush.msra.mxu0 0.0
      %1767 = vmatpush.msra.mxu0 0.0
      %1768 = vmatpush.msra.mxu0 0.0
      %1769 = vmatpush.msra.mxu0 0.0
      %1770 = vmatpush.msra.mxu0 0.0
      %1771 = vmatpush.msra.mxu0 %v1754
      %1772 = vmatpush.msra.mxu0 %v1753
      %1773 = vmatpush.msra.mxu0 %v1752
      %1774 = vmatpush.msra.mxu0 %v1751
      %1775 = vmatpush.msra.mxu0 %v1750
      %1776 = vmatpush.msra.mxu0 %v1749
      %1777 = vmatpush.msra.mxu0 %v1748
      %1778 = vmatpush.msra.mxu0 %v1747
      %1779 = vmatmul.f32.gmra.mxu0 %v1761
      %v1780 = vpop.f32.mrf.mxu0
      %v1781 = vadd.f32 %v1758, %v1780
      %1782 = vdwg.mxu0
      %v1783 = vadd.f32 %v1781, %v1703
      %s1784 = scalar_lea.vmem %s16, 1
      %v1785 = vld [vmem:[%s1784] sm:$0x1]
      %s1786 = scalar_lea.vmem %s17, 1
      %v1787 = vld [vmem:[%s1786] sm:$0x1]
      %v1788 = vsel %vm755, %v1783, 0.0
      %1789 = vadd.xlane.f32.xlu0 %v1788
      %v1790 = vpop.xlane.xlu0 %1789
      %v1791 = vmul.f32 %v1790, %v765
      %v1792 = vsub.f32 %v1783, %v1791
      %v1793 = vmul.f32 %v1792, %v1792
      %v1794 = vsel %vm755, %v1793, 0.0
      %1795 = vadd.xlane.f32.xlu0 %v1794
      %v1796 = vpop.xlane.xlu0 %1795
      %v1797 = vmul.f32 %v1796, %v765
      %v1798 = vadd.f32 %v1797, 1e-12
      %v1799 = vrsqrt.pop %v1798
      %v1800 = vmul.f32 %v1799, %v1798
      %v1801 = vmul.f32 %v1800, %v1799
      %v1802 = vmul.f32 0.5, %v1801
      %v1803 = vsub.f32 1.5, %v1802
      %v1804 = vmul.f32 %v1799, %v1803
      %vm1805 = vweird.f32 %v1798
      %vm1806 = vweird.f32 %v1799
      %vm1807 = vmor %vm1805, %vm1806
      %v1808 = vsel %vm1807, %v1799, %v1804
      %v1809 = vmul.f32 %v1792, %v1808
      %v1811 = vperm.slane %v1785, 0
      %v1813 = vmul.f32 %v1809, %v1811
      %v1815 = vperm.slane %v1787, 0
      %v1817 = vadd.f32 %v1813, %v1815
      %v1818 = vld [vmem:[%s18] sm:$0xff]
      %v1819 = vld [vmem:[%s18 + $0x8] sm:$0xff]
      %v1820 = vld [vmem:[%s18 + $0x10] sm:$0xff]
      %v1821 = vld [vmem:[%s18 + $0x18] sm:$0xff]
      %v1822 = vld [vmem:[%s19] sm:$0x1]
      %v1824 = vperm.slane %v1822, 0
      %v1827 = vsel %vm755, %v1817, 0
      %1829 = vmatpush.msra.mxu0 0.0
      %1830 = vmatpush.msra.mxu0 0.0
      %1831 = vmatpush.msra.mxu0 0.0
      %1832 = vmatpush.msra.mxu0 0.0
      %1833 = vmatpush.msra.mxu0 0.0
      %1834 = vmatpush.msra.mxu0 0.0
      %1835 = vmatpush.msra.mxu0 0.0
      %1836 = vmatpush.msra.mxu0 0.0
      %1837 = vmatpush.msra.mxu0 0.0
      %1838 = vmatpush.msra.mxu0 0.0
      %1839 = vmatpush.msra.mxu0 0.0
      %1840 = vmatpush.msra.mxu0 0.0
      %1841 = vmatpush.msra.mxu0 %v1821
      %1842 = vmatpush.msra.mxu0 %v1820
      %1843 = vmatpush.msra.mxu0 %v1819
      %1844 = vmatpush.msra.mxu0 %v1818
      %1845 = vmatmul.f32.gmra.mxu0 %v1827
      %v1846 = vpop.f32.mrf.mxu0
      %v1847 = vadd.f32 %v1824, %v1846
      %1848 = vdwg.mxu0
      %v1849 = vld [vmem:[%s20] sm:$0x7f]
      %v1850 = vld [vmem:[%s21] sm:$0x1]
      %v1851 = vld [vmem:[%s22] sm:$0x1]
      %v1852 = vld [vmem:[%s744] sm:$0xff]
      %v1853 = vld [vmem:[%s748] sm:$0xff]
      %v1854 = vmul.f32 %v1847, %v1852
      %vm1855 = vcmask 56320
      %v1856 = vsel %vm1855, %v1854, 0.0
      %1857 = vadd.xlane.f32.xlu0 %v1856
      %v1858 = vpop.xlane.xlu0 %1857
      %v1859 = vmul.f32 %v1853, %v1858
      %v1861 = vrot.slane %v1859, 1
      %vm1863 = vcmask 6144
      %v1864 = vsel %vm1863, %v1861, 0.0
      %v1865 = vrot.slane %v1864, 4
      %v1866 = vadd.f32 %v1864, %v1865
      %v1867 = vrot.slane %v1866, 2
      %v1868 = vadd.f32 %v1866, %v1867
      %v1869 = vrot.slane %v1868, 1
      %v1870 = vadd.f32 %v1868, %v1869
      %v1871 = vadd.f32 %v1858, %v1870
      %v1873 = vsel %vm1855, %v1852, 0
      %vm1875 = vcmask 1046528
      %v1877 = vsel %vm1875, %v1849, 0
      %1879 = vmatpush.msra.mxu0 0.0
      %1880 = vmatpush.msra.mxu0 0.0
      %1881 = vmatpush.msra.mxu0 0.0
      %1882 = vmatpush.msra.mxu0 0.0
      %1883 = vmatpush.msra.mxu0 0.0
      %1884 = vmatpush.msra.mxu0 0.0
      %1885 = vmatpush.msra.mxu0 0.0
      %1886 = vmatpush.msra.mxu0 0.0
      %1887 = vmatpush.msra.mxu0 0.0
      %1888 = vmatpush.msra.mxu0 0.0
      %1889 = vmatpush.msra.mxu0 0.0
      %1890 = vmatpush.msra.mxu0 0.0
      %1891 = vmatpush.msra.mxu0 0.0
      %1892 = vmatpush.msra.mxu0 0.0
      %1893 = vmatpush.msra.mxu0 0.0
      %1894 = vmatpush.msra.mxu0 %v1877
      %1895 = vmatmul.f32.gmra.mxu0 %v1873
      %v1896 = vpop.f32.mrf.mxu0
      %v1897 = vadd.f32 0.0, %v1896
      %1898 = vdwg.mxu0
      %v1899 = vrot.slane %v1852, 1
      %v1901 = vmul.f32 %v1897, %v1899
      %vm1902 = vcmask 55296
      %v1903 = vsel %vm1902, %v1901, 0.0
      %1904 = vadd.xlane.f32.xlu0 %v1903
      %v1905 = vpop.xlane.xlu0 %1904
      %v1907 = vrot.slane %v1905, 7
      %v1909 = vmul.f32 %v1853, %v1907
      %v1911 = vrot.slane %v1909, 1
      %v1913 = vsel %vm1863, %v1911, 0.0
      %v1914 = vrot.slane %v1913, 4
      %v1915 = vadd.f32 %v1913, %v1914
      %v1916 = vrot.slane %v1915, 2
      %v1917 = vadd.f32 %v1915, %v1916
      %v1918 = vrot.slane %v1917, 1
      %v1919 = vadd.f32 %v1917, %v1918
      %v1920 = vmul.f32 %v1850, %v1852
      %vm1921 = vcmask 49152
      %v1922 = vsel %vm1921, %v1920, 0.0
      %1923 = vadd.xlane.f32.xlu0 %v1922
      %v1924 = vpop.xlane.xlu0 %1923
      %v1926 = vperm.slane %v1851, 0
      %v1928 = vmul.f32 %v1926, %v1852
      %v1929 = vsel %vm1855, %v1928, 0.0
      %1930 = vadd.xlane.f32.xlu0 %v1929
      %v1931 = vpop.xlane.xlu0 %1930
      %v1933 = vrot.slane %v1931, 7
      %v1935 = vsub.f32 %v1931, %v1933
      %v1936 = vmul.f32 %v1853, %v1935
      %v1938 = vrot.slane %v1936, 1
      %v1940 = vsel %vm1863, %v1938, 0.0
      %v1941 = vrot.slane %v1940, 4
      %v1942 = vadd.f32 %v1940, %v1941
      %v1943 = vrot.slane %v1942, 2
      %v1944 = vadd.f32 %v1942, %v1943
      %v1945 = vrot.slane %v1944, 1
      %v1946 = vadd.f32 %v1944, %v1945
      %v1947 = vadd.f32 %v1931, %v1946
      %v1948 = vadd.f32 %v1924, %v1871
      %v1949 = vadd.f32 %v1948, %v1919
      %v1950 = vadd.f32 %v1949, %v1947
      %v1951 = vadd.f32 %v1850, %v1847
      %v1952 = vperm.slane %v1951, 0
      %v1953 = vlaneseq
      %v1954 = vshrl.u32 %v1953, 7
      %1956 = vset.pattern.permute.xlu0 %v1954
      %1957 = vperm.xlu0 %1956, %v1952
      %v1958 = vpop.permute.xlu0 %1957
      %v1959 = vadd.f32 %v1958, %v1849
      %v1960 = vperm.slane %v1847, 1
      %v1961 = vadd.f32 %v1959, %v1960
      %v1962 = vsel %vm1902, %v1961, -inf
      %v1963 = vrot.slane %v1962, 4
      %v1964 = vmax.f32 %v1962, %v1963
      %v1965 = vrot.slane %v1964, 2
      %v1966 = vmax.f32 %v1964, %v1965
      %v1967 = vrot.slane %v1966, 1
      %v1968 = vmax.f32 %v1966, %v1967
      %v1969 = vsub.f32 %v1961, %v1968
      %v1970 = vmul.f32 %v1969, 1.442695
      %v1971 = vpow.pop %v1970
      %v1972 = vsel %vm1902, %v1971, 0.0
      %v1973 = vrot.slane %v1972, 4
      %v1974 = vadd.f32 %v1972, %v1973
      %v1975 = vrot.slane %v1974, 2
      %v1976 = vadd.f32 %v1974, %v1975
      %v1977 = vrot.slane %v1976, 1
      %v1978 = vadd.f32 %v1976, %v1977
      %v1979 = vlog2.pop %v1978
      %v1980 = vmul.f32 %v1979, 0.6931472
      %v1981 = vadd.f32 %v1980, %v1968
      %vm1982 = vcmp.gt.f32.partialorder %v1853, 0.0
      %v1983 = vsel %vm1982, 1, 0
      %1984 = vset.pattern.permute.xlu0 0
      %1985 = vperm.xlu0 %1984, %v1983
      %v1986 = vpop.permute.xlu0 %1985
      %vm1987 = vcmp.eq.s32.totalorder %v1986, 1
      %v1989 = vperm.slane %v1951, 0
      %v1991 = vsel %vm1987, %v1981, %v1989
      %v1992 = vperm.slane %v1991, 1
      %v1993 = vlaneseq
      %v1994 = vshrl.u32 %v1993, 7
      %1996 = vset.pattern.permute.xlu0 %v1994
      %1997 = vperm.xlu0 %1996, %v1992
      %v1998 = vpop.permute.xlu0 %1997
      %v1999 = vadd.f32 %v1998, %v1849
      %v2000 = vperm.slane %v1847, 2
      %v2001 = vadd.f32 %v1999, %v2000
      %v2002 = vsel %vm1902, %v2001, -inf
      %v2003 = vrot.slane %v2002, 4
      %v2004 = vmax.f32 %v2002, %v2003
      %v2005 = vrot.slane %v2004, 2
      %v2006 = vmax.f32 %v2004, %v2005
      %v2007 = vrot.slane %v2006, 1
      %v2008 = vmax.f32 %v2006, %v2007
      %v2009 = vsub.f32 %v2001, %v2008
      %v2010 = vmul.f32 %v2009, 1.442695
      %v2011 = vpow.pop %v2010
      %v2012 = vsel %vm1902, %v2011, 0.0
      %v2013 = vrot.slane %v2012, 4
      %v2014 = vadd.f32 %v2012, %v2013
      %v2015 = vrot.slane %v2014, 2
      %v2016 = vadd.f32 %v2014, %v2015
      %v2017 = vrot.slane %v2016, 1
      %v2018 = vadd.f32 %v2016, %v2017
      %v2019 = vlog2.pop %v2018
      %v2020 = vmul.f32 %v2019, 0.6931472
      %v2021 = vadd.f32 %v2020, %v2008
      %v2023 = vrot.slane %v1991, 7
      %v2025 = vsel %vm1987, %v2021, %v2023
      %v2026 = vperm.slane %v2025, 2
      %v2027 = vlaneseq
      %v2028 = vshrl.u32 %v2027, 7
      %2030 = vset.pattern.permute.xlu0 %v2028
      %2031 = vperm.xlu0 %2030, %v2026
      %v2032 = vpop.permute.xlu0 %2031
      %v2033 = vadd.f32 %v2032, %v1849
      %v2034 = vperm.slane %v1847, 3
      %v2035 = vadd.f32 %v2033, %v2034
      %v2036 = vsel %vm1902, %v2035, -inf
      %v2037 = vrot.slane %v2036, 4
      %v2038 = vmax.f32 %v2036, %v2037
      %v2039 = vrot.slane %v2038, 2
      %v2040 = vmax.f32 %v2038, %v2039
      %v2041 = vrot.slane %v2040, 1
      %v2042 = vmax.f32 %v2040, %v2041
      %v2043 = vsub.f32 %v2035, %v2042
      %v2044 = vmul.f32 %v2043, 1.442695
      %v2045 = vpow.pop %v2044
      %v2046 = vsel %vm1902, %v2045, 0.0
      %v2047 = vrot.slane %v2046, 4
      %v2048 = vadd.f32 %v2046, %v2047
      %v2049 = vrot.slane %v2048, 2
      %v2050 = vadd.f32 %v2048, %v2049
      %v2051 = vrot.slane %v2050, 1
      %v2052 = vadd.f32 %v2050, %v2051
      %v2053 = vlog2.pop %v2052
      %v2054 = vmul.f32 %v2053, 0.6931472
      %v2055 = vadd.f32 %v2054, %v2042
      %v2057 = vrot.slane %v2025, 7
      %v2059 = vsel %vm1987, %v2055, %v2057
      %v2060 = vperm.slane %v2059, 3
      %v2061 = vlaneseq
      %v2062 = vshrl.u32 %v2061, 7
      %2064 = vset.pattern.permute.xlu0 %v2062
      %2065 = vperm.xlu0 %2064, %v2060
      %v2066 = vpop.permute.xlu0 %2065
      %v2067 = vadd.f32 %v2066, %v1849
      %v2068 = vperm.slane %v1847, 4
      %v2069 = vadd.f32 %v2067, %v2068
      %v2070 = vsel %vm1902, %v2069, -inf
      %v2071 = vrot.slane %v2070, 4
      %v2072 = vmax.f32 %v2070, %v2071
      %v2073 = vrot.slane %v2072, 2
      %v2074 = vmax.f32 %v2072, %v2073
      %v2075 = vrot.slane %v2074, 1
      %v2076 = vmax.f32 %v2074, %v2075
      %v2077 = vsub.f32 %v2069, %v2076
      %v2078 = vmul.f32 %v2077, 1.442695
      %v2079 = vpow.pop %v2078
      %v2080 = vsel %vm1902, %v2079, 0.0
      %v2081 = vrot.slane %v2080, 4
      %v2082 = vadd.f32 %v2080, %v2081
      %v2083 = vrot.slane %v2082, 2
      %v2084 = vadd.f32 %v2082, %v2083
      %v2085 = vrot.slane %v2084, 1
      %v2086 = vadd.f32 %v2084, %v2085
      %v2087 = vlog2.pop %v2086
      %v2088 = vmul.f32 %v2087, 0.6931472
      %v2089 = vadd.f32 %v2088, %v2076
      %v2091 = vrot.slane %v2059, 7
      %v2093 = vsel %vm1987, %v2089, %v2091
      %v2094 = vperm.slane %v2093, 4
      %v2095 = vlaneseq
      %v2096 = vshrl.u32 %v2095, 7
      %2098 = vset.pattern.permute.xlu0 %v2096
      %2099 = vperm.xlu0 %2098, %v2094
      %v2100 = vpop.permute.xlu0 %2099
      %v2101 = vadd.f32 %v2100, %v1849
      %v2102 = vperm.slane %v1847, 5
      %v2103 = vadd.f32 %v2101, %v2102
      %v2104 = vsel %vm1902, %v2103, -inf
      %v2105 = vrot.slane %v2104, 4
      %v2106 = vmax.f32 %v2104, %v2105
      %v2107 = vrot.slane %v2106, 2
      %v2108 = vmax.f32 %v2106, %v2107
      %v2109 = vrot.slane %v2108, 1
      %v2110 = vmax.f32 %v2108, %v2109
      %v2111 = vsub.f32 %v2103, %v2110
      %v2112 = vmul.f32 %v2111, 1.442695
      %v2113 = vpow.pop %v2112
      %v2114 = vsel %vm1902, %v2113, 0.0
      %v2115 = vrot.slane %v2114, 4
      %v2116 = vadd.f32 %v2114, %v2115
      %v2117 = vrot.slane %v2116, 2
      %v2118 = vadd.f32 %v2116, %v2117
      %v2119 = vrot.slane %v2118, 1
      %v2120 = vadd.f32 %v2118, %v2119
      %v2121 = vlog2.pop %v2120
      %v2122 = vmul.f32 %v2121, 0.6931472
      %v2123 = vadd.f32 %v2122, %v2110
      %v2125 = vrot.slane %v2093, 7
      %v2127 = vsel %vm1987, %v2123, %v2125
      %v2128 = vperm.slane %v2127, 5
      %v2129 = vlaneseq
      %v2130 = vshrl.u32 %v2129, 7
      %2132 = vset.pattern.permute.xlu0 %v2130
      %2133 = vperm.xlu0 %2132, %v2128
      %v2134 = vpop.permute.xlu0 %2133
      %v2135 = vadd.f32 %v2134, %v1849
      %v2136 = vperm.slane %v1847, 6
      %v2137 = vadd.f32 %v2135, %v2136
      %v2138 = vsel %vm1902, %v2137, -inf
      %v2139 = vrot.slane %v2138, 4
      %v2140 = vmax.f32 %v2138, %v2139
      %v2141 = vrot.slane %v2140, 2
      %v2142 = vmax.f32 %v2140, %v2141
      %v2143 = vrot.slane %v2142, 1
      %v2144 = vmax.f32 %v2142, %v2143
      %v2145 = vsub.f32 %v2137, %v2144
      %v2146 = vmul.f32 %v2145, 1.442695
      %v2147 = vpow.pop %v2146
      %v2148 = vsel %vm1902, %v2147, 0.0
      %v2149 = vrot.slane %v2148, 4
      %v2150 = vadd.f32 %v2148, %v2149
      %v2151 = vrot.slane %v2150, 2
      %v2152 = vadd.f32 %v2150, %v2151
      %v2153 = vrot.slane %v2152, 1
      %v2154 = vadd.f32 %v2152, %v2153
      %v2155 = vlog2.pop %v2154
      %v2156 = vmul.f32 %v2155, 0.6931472
      %v2157 = vadd.f32 %v2156, %v2144
      %v2159 = vrot.slane %v2127, 7
      %v2161 = vsel %vm1987, %v2157, %v2159
      %v2162 = vperm.slane %v2161, 6
      %v2163 = vlaneseq
      %v2164 = vshrl.u32 %v2163, 7
      %2166 = vset.pattern.permute.xlu0 %v2164
      %2167 = vperm.xlu0 %2166, %v2162
      %v2168 = vpop.permute.xlu0 %2167
      %v2169 = vadd.f32 %v2168, %v1849
      %v2170 = vperm.slane %v1847, 7
      %v2171 = vadd.f32 %v2169, %v2170
      %v2172 = vsel %vm1902, %v2171, -inf
      %v2173 = vrot.slane %v2172, 4
      %v2174 = vmax.f32 %v2172, %v2173
      %v2175 = vrot.slane %v2174, 2
      %v2176 = vmax.f32 %v2174, %v2175
      %v2177 = vrot.slane %v2176, 1
      %v2178 = vmax.f32 %v2176, %v2177
      %v2179 = vsub.f32 %v2171, %v2178
      %v2180 = vmul.f32 %v2179, 1.442695
      %v2181 = vpow.pop %v2180
      %v2182 = vsel %vm1902, %v2181, 0.0
      %v2183 = vrot.slane %v2182, 4
      %v2184 = vadd.f32 %v2182, %v2183
      %v2185 = vrot.slane %v2184, 2
      %v2186 = vadd.f32 %v2184, %v2185
      %v2187 = vrot.slane %v2186, 1
      %v2188 = vadd.f32 %v2186, %v2187
      %v2189 = vlog2.pop %v2188
      %v2190 = vmul.f32 %v2189, 0.6931472
      %v2191 = vadd.f32 %v2190, %v2178
      %v2193 = vrot.slane %v2161, 7
      %v2195 = vsel %vm1987, %v2191, %v2193
      %v2196 = vadd.f32 %v2195, %v1926
      %vm2197 = vcmask 56327
      %v2198 = vsel %vm2197, %v2196, -inf
      %2199 = vmax.xlane.f32.xlu0 %v2198
      %v2200 = vpop.xlane.xlu0 %2199
      %v2201 = vsub.f32 %v2196, %v2200
      %v2202 = vmul.f32 %v2201, 1.442695
      %v2203 = vpow.pop %v2202
      %v2204 = vsel %vm2197, %v2203, 0.0
      %2205 = vadd.xlane.f32.xlu0 %v2204
      %v2206 = vpop.xlane.xlu0 %2205
      %v2207 = vlog2.pop %v2206
      %v2208 = vmul.f32 %v2207, 0.6931472
      %v2209 = vadd.f32 %v2208, %v2200
      %v2211 = vrot.slane %v1950, 1
      %v2213 = vsub.f32 %v2209, %v2211
      %vm2214 = vcmask 7175
      %2215 = vst.msk [vmem:[%s751 - $0x7] sm:$0x80] %vm2214, %v2213
      %p2216 = scmp.lt.s32.totalorder %s34, 1
      %s2217 = scalar_select %p2216, %s34, 1
      %s2218 = scalar_lea.vmem %s23, %s2217
      // Predicated region
      $region113: #{tpu_custom_call.1} parent=111 // pred_check
        %p2219 = pneg %p555
      $region114: #{tpu_custom_call.1} parent=111 // pred_check_branch
        %2221 = sbr.rel (%p2219) target = $region116
      $region115: #{tpu_custom_call.1} parent=111 // pred_region
        _
      $region116: #{tpu_custom_call.1} parent=111 // pred_fallthru
        _
    $region112: #{tpu_custom_call.1} parent=5 // pred_fallthru
      _
    %p2222 = scmp.le.s32.totalorder 2, %s29
    // Predicated region
    $region117: #{tpu_custom_call.1} parent=5 // pred_check
      %p2223 = pneg %p2222
    $region118: #{tpu_custom_call.1} parent=5 // pred_check_branch
      %2225 = sbr.rel (%p2223) target = $region120
    $region119: #{tpu_custom_call.1} parent=5 // pred_region
      %s2226 = ssub.s32 %s29, 2
      // Predicated region
      $region121: #{tpu_custom_call.1} parent=119 // pred_check
        %p2227 = pneg %p561
      $region122: #{tpu_custom_call.1} parent=119 // pred_check_branch
        %2229 = sbr.rel (%p2227) target = $region124
      $region123: #{tpu_custom_call.1} parent=119 // pred_region
        %p2230 = scmp.lt.s32.totalorder %s35, 1
        %s2231 = scalar_select %p2230, %s35, 1
        %s2232 = scalar_lea.vmem %s23, %s2231
      $region124: #{tpu_custom_call.1} parent=119 // pred_fallthru
        _
    $region120: #{tpu_custom_call.1} parent=5 // pred_fallthru
      _
  $region6: #{tpu_custom_call.1} parent=0 // loop_footer
    %s33 = sadd.s32 1, %s29
  $region7: #{tpu_custom_call.1} parent=0 // loop_footer_branch
    %28 = sbr.rel target = $region3
  $region8: #{tpu_custom_call.1} parent=0 // loop_exit
    _

</llo_original>
